<compile_context>
chip_gen: v7x
topology: tpu7x:2x2x1
jax: 0.10.0
libtpu: 0.0.40
codegen_flags: <defaults>
</compile_context>

<pallas_src>
import functools

import numpy as np
import jax
import jax.numpy as jnp
from jax.experimental import pallas as pl
from jax.experimental.pallas import tpu as pltpu


_GROUP_SEMANTICS = {
    "arbitrary": pltpu.ARBITRARY,
    "parallel": pltpu.PARALLEL,
    # v7x: request a real 2-TensorCore split of the camera groups.
    "core_parallel": pltpu.CORE_PARALLEL,
}


def _ceil_to(x, m):
    return -(-x // m) * m


# ----------------------------------------------------------------------------
# Pallas kernel
# ----------------------------------------------------------------------------
def _fused_depth_kernel(f2_ref, f3_ref, f4_ref,          # camera-group feature rows (bf16)
                        u34_ref,                          # merged block-diag interp (bf16)
                        w2_ref, w3_ref, w4_ref, b_ref,    # conv1x1 split by level (bf16) + bias (f32)
                        wp_ref, bp_ref,                   # proj head (bf16 / f32), lane-padded
                        agg_ref, proj_ref):               # outputs (bf16 by default)
    # 1x1-conv channel matmuls at NATIVE (low) resolution, f32 accumulation.
    y2 = jnp.dot(f2_ref[...], w2_ref[...], preferred_element_type=jnp.float32)  # (G*S2,  Cout)
    y3 = jnp.dot(f3_ref[...], w3_ref[...], preferred_element_type=jnp.float32)  # (G*S3p, Cout)
    y4 = jnp.dot(f4_ref[...], w4_ref[...], preferred_element_type=jnp.float32)  # (G*S4p, Cout)

    # F.interpolate(bilinear, align_corners=True) applied AFTER the 1x1 conv —
    # exact reassociation.  Levels 3 and 4 are MERGED into a single small-K
    # matmul: z = [U3 | U4] @ [y3; y4]  (one MXU LHS stream, one result drain).
    y34 = jnp.concatenate([y3, y4], axis=0).astype(u34_ref.dtype)               # (K34, Cout)
    z = jnp.dot(u34_ref[...], y34, preferred_element_type=jnp.float32)          # (G*S2, Cout)

    # concat-then-conv1x1 == sum of per-level matmuls; BN(eval) folded in W,b.
    acc = jnp.maximum(y2 + z + b_ref[...], 0.0)
    agg_ref[...] = acc.astype(agg_ref.dtype)

    # TODO(synk): the real VFNet performs voxel-space multi-camera fusion
    # (back-projection + grid_sample with camera geometry); only its
    # channel-reduction 1x1-conv head producing 'proj_feat' is reproduced here.
    proj = jnp.dot(acc.astype(wp_ref.dtype), wp_ref[...],
                   preferred_element_type=jnp.float32) + bp_ref[...]
    proj_ref[...] = jnp.maximum(proj, 0.0).astype(proj_ref.dtype)


# ----------------------------------------------------------------------------
# Forward implementation (jitted once; only per-call feature glue + the kernel)
# ----------------------------------------------------------------------------
def _forward_impl(params, f2, f3, f4, *, num_groups, proj_channels,
                  out_dtype, compute_dtype, group_semantics):
    BN, S2, C2 = f2.shape
    _, S3, C3 = f3.shape
    _, S4, C4 = f4.shape

    u34 = params["u34"]
    w2, w3, w4 = params["w2"], params["w3"], params["w4"]
    b = params["b"]
    wp, bp = params["wp"], params["bp"]
    Cout = w2.shape[1]
    Cpp = wp.shape[1]

    G = BN // num_groups
    S3p = _ceil_to(S3, 8)
    S4p = _ceil_to(S4, 8)
    K34 = G * (S3p + S4p)
    assert u34.shape == (G * S2, K34)
    assert (G * S2) % 8 == 0

    cd = compute_dtype
    # Per-call activation glue (reshape / sublane pad / bf16 cast) stays under
    # the same jit as the pallas_call; all CONSTANT prep was hoisted to init.
    f2f = f2.reshape(BN * S2, C2).astype(cd)
    f3f = jnp.pad(f3, ((0, 0), (0, S3p - S3), (0, 0))).reshape(BN * S3p, C3).astype(cd)
    f4f = jnp.pad(f4, ((0, 0), (0, S4p - S4), (0, 0))).reshape(BN * S4p, C4).astype(cd)

    kernel_args = (f2f, f3f, f4f, u34, w2, w3, w4, b, wp, bp)

    flops = (2 * BN * Cout * (S2 * C2 + S3p * C3 + S4p * C4 + S2 * G * (S3p + S4p))
             + 2 * BN * S2 * Cout * Cpp)
    out_bytes = BN * S2 * (Cout + Cpp) * jnp.dtype(out_dtype).itemsize
    bytes_accessed = sum(int(a.size) * a.dtype.itemsize for a in kernel_args) + out_bytes

    def shared2(shape):
        # Grid-invariant operand (constant index_map -> no re-DMA across steps).
        return pl.BlockSpec(shape, lambda i: (0, 0))

    agg_flat, proj_flat = pl.pallas_call(
        _fused_depth_kernel,
        out_shape=(jax.ShapeDtypeStruct((BN * S2, Cout), out_dtype),
                   jax.ShapeDtypeStruct((BN * S2, Cpp), out_dtype)),
        grid_spec=pltpu.PrefetchScalarGridSpec(
            num_scalar_prefetch=0,
            grid=(num_groups,),
            in_specs=[
                pl.BlockSpec((G * S2, C2), lambda i: (i, 0)),
                pl.BlockSpec((G * S3p, C3), lambda i: (i, 0)),
                pl.BlockSpec((G * S4p, C4), lambda i: (i, 0)),
                shared2((G * S2, K34)),
                shared2((C2, Cout)),
                shared2((C3, Cout)),
                shared2((C4, Cout)),
                shared2((1, Cout)),
                shared2((Cout, Cpp)),
                shared2((1, Cpp)),
            ],
            out_specs=[
                pl.BlockSpec((G * S2, Cout), lambda i: (i, 0)),
                pl.BlockSpec((G * S2, Cpp), lambda i: (i, 0)),
            ],
        ),
        compiler_params=pltpu.CompilerParams(
            dimension_semantics=(_GROUP_SEMANTICS[group_semantics],)),
        cost_estimate=pl.CostEstimate(flops=flops, transcendentals=0,
                                      bytes_accessed=bytes_accessed),
    )(*kernel_args)

    agg = agg_flat.reshape(BN, S2, Cout)
    proj = proj_flat[:, :proj_channels].reshape(BN, S2, proj_channels)
    return agg, proj


# ----------------------------------------------------------------------------
# Module-style wrapper: constant prep ONCE in __init__, single jit in __call__
# ----------------------------------------------------------------------------
class FusedDepthAggregation:
    def __init__(self, u3, u4, w2, w3, w4, b, wp, bp, *, num_cams,
                 num_groups=1, compute_dtype=jnp.bfloat16,
                 out_dtype=jnp.bfloat16, group_semantics=None):
        assert num_cams % num_groups == 0
        G = num_cams // num_groups
        S2, S3 = u3.shape
        _, S4 = u4.shape
        S3p, S4p = _ceil_to(S3, 8), _ceil_to(S4, 8)
        assert (G * S2) % 8 == 0, "per-group output rows must be a sublane multiple"
        for c in (w2.shape[0], w3.shape[0], w4.shape[0], w2.shape[1]):
            assert c % 128 == 0

        # ---- hoisted constant prep (numpy, done exactly once) ----
        # Block-diagonal per-group interp matrices; levels 3 & 4 merged so the
        # kernel runs ONE upsample matmul.
        u3np = np.pad(np.asarray(u3, np.float32), ((0, 0), (0, S3p - S3)))
        u4np = np.pad(np.asarray(u4, np.float32), ((0, 0), (0, S4p - S4)))
        eye_g = np.eye(G, dtype=np.float32)
        u34 = np.concatenate([np.kron(eye_g, u3np), np.kron(eye_g, u4np)], axis=1)

        # Lane-dense proj store: pad out-channels (88) up to a multiple of 128.
        Cp = wp.shape[1]
        Cpp = _ceil_to(Cp, 128)
        wp_p = np.pad(np.asarray(wp, np.float32), ((0, 0), (0, Cpp - Cp)))
        bp_p = np.pad(np.asarray(bp, np.float32).reshape(1, -1), ((0, 0), (0, Cpp - Cp)))

        cd = compute_dtype
        self.params = dict(
            u34=jnp.asarray(u34).astype(cd),
            w2=jnp.asarray(w2, jnp.float32).astype(cd),
            w3=jnp.asarray(w3, jnp.float32).astype(cd),
            w4=jnp.asarray(w4, jnp.float32).astype(cd),
            b=jnp.asarray(b, jnp.float32).reshape(1, -1),
            wp=jnp.asarray(wp_p).astype(cd),
            bp=jnp.asarray(bp_p, jnp.float32),
        )

        if group_semantics is None:
            group_semantics = "arbitrary" if num_groups == 1 else "parallel"
        self._fn = jax.jit(functools.partial(
            _forward_impl, num_groups=num_groups, proj_channels=Cp,
            out_dtype=out_dtype, compute_dtype=cd,
            group_semantics=group_semantics))

    def __call__(self, f2, f3, f4):
        return self._fn(self.params, f2, f3, f4)


# ----------------------------------------------------------------------------
# Plain-JAX glue (layout helpers, interpolation weights, reference)
# ----------------------------------------------------------------------------
def _interp_matrix_1d(n_out, n_in):
    """1-D weights of F.interpolate(mode='bilinear', align_corners=True)."""
    if n_out == 1:
        m = np.zeros((1, n_in), np.float32)
        m[0, 0] = 1.0
        return jnp.asarray(m)
    src = np.arange(n_out, dtype=np.float64) * (n_in - 1) / (n_out - 1)
    lo = np.clip(np.floor(src).astype(np.int64), 0, n_in - 1)
    hi = np.clip(lo + 1, 0, n_in - 1)
    w_hi = (src - lo).astype(np.float32)
    w_lo = 1.0 - w_hi
    m = np.zeros((n_out, n_in), np.float32)
    m[np.arange(n_out), lo] += w_lo
    m[np.arange(n_out), hi] += w_hi
    return jnp.asarray(m)


def pack_cam_feat(x):                      # (B, N, ...) -> (B*N, ...)
    return x.reshape((x.shape[0] * x.shape[1],) + x.shape[2:])


def unpack_cam_feat(x, b, n):              # (B*N, ...) -> (B, N, ...)
    return x.reshape((b, n) + x.shape[1:])


def flat_to_nchw(x, h, w):                 # (BN, H*W, C) -> (BN, C, H, W)
    bn, s, c = x.shape
    return x.reshape(bn, h, w, c).transpose(0, 3, 1, 2)


def _reference_f32(f2, f3, f4, u3, u4, w2, w3, w4, b, wp, bp):
    """Pure-JAX f32 reference in the ORIGINAL order (upsample, concat, conv1x1)."""
    f3u = jnp.einsum("os,bsc->boc", u3, f3)
    f4u = jnp.einsum("os,bsc->boc", u4, f4)
    acc = (jnp.einsum("bsc,cd->bsd", f2, w2)
           + jnp.einsum("bsc,cd->bsd", f3u, w3)
           + jnp.einsum("bsc,cd->bsd", f4u, w4) + b)
    acc = jnp.maximum(acc, 0.0)
    proj = jnp.maximum(jnp.einsum("bsc,cd->bsd", acc, wp) + bp, 0.0)
    return acc, proj


# ----------------------------------------------------------------------------
# Main
# ----------------------------------------------------------------------------
if __name__ == "__main__":
    key = jax.random.PRNGKey(0)
    keys = jax.random.split(key, 8)

    # Module defaults
    B, N_CAMS = 1, 6                       # batch_size=1, num_cams=6
    FUSION_LEVEL = 2
    FUSION_FEAT_IN_DIM = 256
    FUSION_FEAT_OUT_DIM = 88
    NUM_CH_ENC = [64, 64, 128, 256, 512]   # ResNet-18 encoder channel dims
    ENC_FEAT_DIM = sum(NUM_CH_ENC[FUSION_LEVEL:])   # 128 + 256 + 512 = 896

    # small per-camera image; encoder levels 2/3/4 are at strides 8/16/32
    H_IMG, W_IMG = 64, 64
    UP_H, UP_W = H_IMG // 8, W_IMG // 8    # level-2 resolution (8, 8)
    H3, W3 = H_IMG // 16, W_IMG // 16      # (4, 4)
    H4, W4 = H_IMG // 32, W_IMG // 32      # (2, 2)

    # inputs['img_inputs'] : (B, num_cams, 3, H, W)
    sf_images = jax.random.normal(keys[0], (B, N_CAMS, 3, H_IMG, W_IMG), jnp.float32)
    packed_input = pack_cam_feat(sf_images)                # (B*N, 3, H, W)

    # TODO(synk): the ResNet-18 encoder (self.encoder) is an external backbone
    # and is not translated; a plain-JAX pooling + channel-lift stand-in
    # produces multi-scale features with the correct channel counts / strides.
    # Note it emits the kernel's channels-last flat layout DIRECTLY (no
    # standalone NCHW transpose dispatch in the hot path).
    def stand_in_encoder_level(x, stride, c_out, k):
        pooled = jax.lax.reduce_window(
            x, 0.0, jax.lax.add,
            window_dimensions=(1, 1, stride, stride),
            window_strides=(1, 1, stride, stride),
            padding="VALID") / float(stride * stride)
        lift = jax.random.normal(k, (x.shape[1], c_out), jnp.float32) * 0.1
        feat = jnp.einsum("bchw,cd->bhwd", pooled, lift)   # channels-last
        return feat.reshape(feat.shape[0], -1, c_out)      # (BN, S, C)

    f2 = stand_in_encoder_level(packed_input, 8, NUM_CH_ENC[2], keys[1])   # (6, 64, 128)
    f3 = stand_in_encoder_level(packed_input, 16, NUM_CH_ENC[3], keys[2])  # (6, 16, 256)
    f4 = stand_in_encoder_level(packed_input, 32, NUM_CH_ENC[4], keys[3])  # (6,  4, 512)

    # bilinear(align_corners=True) interpolation matrices (separable -> Kronecker)
    u3 = jnp.kron(_interp_matrix_1d(UP_H, H3), _interp_matrix_1d(UP_W, W3))   # (64, 16)
    u4 = jnp.kron(_interp_matrix_1d(UP_H, H4), _interp_matrix_1d(UP_W, W4))   # (64, 4)

    # conv1x1: Conv2d(896, 256, k=1, bias) + BatchNorm2d(eval, folded) + ReLU.
    # Split the (896, 256) weight by encoder level so that
    # "concat then 1x1-conv" == sum of per-level channel matmuls (exact).
    # Concat order matches the PyTorch module: [feat2, up(feat3), up(feat4)].
    w_full = jax.random.normal(keys[4], (ENC_FEAT_DIM, FUSION_FEAT_IN_DIM),
                               jnp.float32) * (1.0 / np.sqrt(ENC_FEAT_DIM))
    b_full = jax.random.normal(keys[5], (1, FUSION_FEAT_IN_DIM), jnp.float32) * 0.01
    w2 = w_full[:NUM_CH_ENC[2]]
    w3 = w_full[NUM_CH_ENC[2]:NUM_CH_ENC[2] + NUM_CH_ENC[3]]
    w4 = w_full[NUM_CH_ENC[2] + NUM_CH_ENC[3]:]

    # VFNet 'proj_feat' head parameters (channel reduction 256 -> 88)
    wp = jax.random.normal(keys[6], (FUSION_FEAT_IN_DIM, FUSION_FEAT_OUT_DIM),
                           jnp.float32) * (1.0 / np.sqrt(FUSION_FEAT_IN_DIM))
    bp = jax.random.normal(keys[7], (1, FUSION_FEAT_OUT_DIM), jnp.float32) * 0.01

    # Constant prep (kron / pads / bf16 casts) happens once here, not per call.
    # num_groups=1 => single grid step on v5e/v6e/v7x.  On v7x one may try
    # num_groups=2, group_semantics="core_parallel" for a real 2-TC split.
    module = FusedDepthAggregation(u3, u4, w2, w3, w4, b_full, wp, bp,
                                   num_cams=N_CAMS, num_groups=1,
                                   out_dtype=jnp.bfloat16)

    agg_out, proj_out = module(f2, f3, f4)
    jax.block_until_ready(proj_out)

    # Correctness check against a pure-f32 JAX reference (loose tol for bf16).
    ref_agg, ref_proj = _reference_f32(f2, f3, f4, u3, u4, w2, w3, w4,
                                       b_full, wp, bp)
    for out, ref in ((agg_out, ref_agg), (proj_out, ref_proj)):
        scale = float(jnp.max(jnp.abs(ref))) + 1e-6
        err = float(jnp.max(jnp.abs(out.astype(jnp.float32) - ref)))
        assert err <= 5e-2 * scale + 1e-5, (err, scale)

    packed_feats_agg = flat_to_nchw(agg_out, UP_H, UP_W)         # (6, 256, 8, 8)
    packed_depth_outputs = flat_to_nchw(proj_out, UP_H, UP_W)    # (6,  88, 8, 8)

    feats_agg = unpack_cam_feat(packed_feats_agg, B, N_CAMS)           # (1, 6, 256, 8, 8)
    depth_outputs = unpack_cam_feat(packed_depth_outputs, B, N_CAMS)   # (1, 6,  88, 8, 8)

    jax.block_until_ready(depth_outputs)
    assert feats_agg.shape == (B, N_CAMS, FUSION_FEAT_IN_DIM, UP_H, UP_W)
    assert depth_outputs.shape == (B, N_CAMS, FUSION_FEAT_OUT_DIM, UP_H, UP_W)
    print("KERNEL_OK")
</pallas_src>

<mosaic_0001>
module attributes {stable_mosaic.version = 11 : i64} {
  func.func @_fused_depth_kernel(%arg0: i32, %arg1: memref<384x128xbf16, #tpu.memory_space<vmem>>, %arg2: memref<96x256xbf16, #tpu.memory_space<vmem>>, %arg3: memref<48x512xbf16, #tpu.memory_space<vmem>>, %arg4: memref<384x144xbf16, #tpu.memory_space<vmem>>, %arg5: memref<128x256xbf16, #tpu.memory_space<vmem>>, %arg6: memref<256x256xbf16, #tpu.memory_space<vmem>>, %arg7: memref<512x256xbf16, #tpu.memory_space<vmem>>, %arg8: memref<1x256xf32, #tpu.memory_space<vmem>>, %arg9: memref<256x128xbf16, #tpu.memory_space<vmem>>, %arg10: memref<1x128xf32, #tpu.memory_space<vmem>>, %arg11: memref<384x256xbf16, #tpu.memory_space<vmem>>, %arg12: memref<384x128xbf16, #tpu.memory_space<vmem>>) attributes {dimension_semantics = [#tpu.dimension_semantics<arbitrary>], iteration_bounds = array<i64: 1>, scalar_prefetch = 0 : i64, scratch_operands = 0 : i64, tpu.core_type = #tpu.core_type<tc>, window_params = [{transform_indices = @transform_0, window_bounds = array<i64: 384, 128>}, {transform_indices = @transform_1, window_bounds = array<i64: 96, 256>}, {transform_indices = @transform_2, window_bounds = array<i64: 48, 512>}, {pipeline_mode = #tpu.pipeline_mode<synchronous>, transform_indices = @transform_3, window_bounds = array<i64: 384, 144>}, {pipeline_mode = #tpu.pipeline_mode<synchronous>, transform_indices = @transform_4, window_bounds = array<i64: 128, 256>}, {pipeline_mode = #tpu.pipeline_mode<synchronous>, transform_indices = @transform_5, window_bounds = array<i64: 256, 256>}, {pipeline_mode = #tpu.pipeline_mode<synchronous>, transform_indices = @transform_6, window_bounds = array<i64: 512, 256>}, {pipeline_mode = #tpu.pipeline_mode<synchronous>, transform_indices = @transform_7, window_bounds = array<i64: 1, 256>}, {pipeline_mode = #tpu.pipeline_mode<synchronous>, transform_indices = @transform_8, window_bounds = array<i64: 256, 128>}, {pipeline_mode = #tpu.pipeline_mode<synchronous>, transform_indices = @transform_9, window_bounds = array<i64: 1, 128>}, {transform_indices = @transform_10, window_bounds = array<i64: 384, 256>}, {transform_indices = @transform_11, window_bounds = array<i64: 384, 128>}]} {
    %c0 = arith.constant 0 : index
    %c0_0 = arith.constant 0 : index
    %0 = vector.load %arg1[%c0, %c0_0] : memref<384x128xbf16, #tpu.memory_space<vmem>>, vector<384x128xbf16>
    %c0_1 = arith.constant 0 : index
    %c0_2 = arith.constant 0 : index
    %1 = vector.load %arg5[%c0_1, %c0_2] : memref<128x256xbf16, #tpu.memory_space<vmem>>, vector<128x256xbf16>
    %cst = arith.constant dense<0.000000e+00> : vector<384x256xf32>
    %2 = tpu.matmul %0, %1, %cst {dimension_numbers = #tpu.dot_dimension_numbers<[1], [0], [0], [1], [0, 0, 1, 1], [], []>} : vector<384x128xbf16>, vector<128x256xbf16>, vector<384x256xf32> -> vector<384x256xf32>
    %c0_3 = arith.constant 0 : index
    %c0_4 = arith.constant 0 : index
    %3 = vector.load %arg2[%c0_3, %c0_4] : memref<96x256xbf16, #tpu.memory_space<vmem>>, vector<96x256xbf16>
    %c0_5 = arith.constant 0 : index
    %c0_6 = arith.constant 0 : index
    %4 = vector.load %arg6[%c0_5, %c0_6] : memref<256x256xbf16, #tpu.memory_space<vmem>>, vector<256x256xbf16>
    %cst_7 = arith.constant dense<0.000000e+00> : vector<96x256xf32>
    %5 = tpu.matmul %3, %4, %cst_7 {dimension_numbers = #tpu.dot_dimension_numbers<[1], [0], [0], [1], [0, 0, 1, 1], [], []>} : vector<96x256xbf16>, vector<256x256xbf16>, vector<96x256xf32> -> vector<96x256xf32>
    %c0_8 = arith.constant 0 : index
    %c0_9 = arith.constant 0 : index
    %6 = vector.load %arg3[%c0_8, %c0_9] : memref<48x512xbf16, #tpu.memory_space<vmem>>, vector<48x512xbf16>
    %c0_10 = arith.constant 0 : index
    %c0_11 = arith.constant 0 : index
    %7 = vector.load %arg7[%c0_10, %c0_11] : memref<512x256xbf16, #tpu.memory_space<vmem>>, vector<512x256xbf16>
    %cst_12 = arith.constant dense<0.000000e+00> : vector<48x256xf32>
    %8 = tpu.matmul %6, %7, %cst_12 {dimension_numbers = #tpu.dot_dimension_numbers<[1], [0], [0], [1], [0, 0, 1, 1], [], []>} : vector<48x512xbf16>, vector<512x256xbf16>, vector<48x256xf32> -> vector<48x256xf32>
    %9 = tpu.concatenate %5, %8 in 0 : vector<96x256xf32>, vector<48x256xf32> -> vector<144x256xf32>
    %10 = arith.truncf %9 : vector<144x256xf32> to vector<144x256xbf16>
    %c0_13 = arith.constant 0 : index
    %c0_14 = arith.constant 0 : index
    %11 = vector.load %arg4[%c0_13, %c0_14] : memref<384x144xbf16, #tpu.memory_space<vmem>>, vector<384x144xbf16>
    %cst_15 = arith.constant dense<0.000000e+00> : vector<384x256xf32>
    %12 = tpu.matmul %11, %10, %cst_15 {dimension_numbers = #tpu.dot_dimension_numbers<[1], [0], [0], [1], [0, 0, 1, 1], [], []>} : vector<384x144xbf16>, vector<144x256xbf16>, vector<384x256xf32> -> vector<384x256xf32>
    %13 = arith.addf %2, %12 : vector<384x256xf32>
    %c0_16 = arith.constant 0 : index
    %c0_17 = arith.constant 0 : index
    %14 = vector.load %arg8[%c0_16, %c0_17] : memref<1x256xf32, #tpu.memory_space<vmem>>, vector<1x256xf32>
    %15 = vector.broadcast %14 : vector<1x256xf32> to vector<384x256xf32>
    %16 = arith.addf %13, %15 : vector<384x256xf32>
    %cst_18 = arith.constant 0.000000e+00 : f32
    %17 = vector.broadcast %cst_18 : f32 to vector<384x256xf32>
    %18 = arith.maximumf %16, %17 : vector<384x256xf32>
    %19 = arith.truncf %18 : vector<384x256xf32> to vector<384x256xbf16>
    %c0_19 = arith.constant 0 : index
    %c0_20 = arith.constant 0 : index
    %20 = vector.load %arg11[%c0_19, %c0_20] : memref<384x256xbf16, #tpu.memory_space<vmem>>, vector<384x256xbf16>
    tpu.vector_store %arg11[%c0_19, %c0_20], %19 {strides = array<i32>} : memref<384x256xbf16, #tpu.memory_space<vmem>>, vector<384x256xbf16>,
    %21 = arith.truncf %18 : vector<384x256xf32> to vector<384x256xbf16>
    %c0_21 = arith.constant 0 : index
    %c0_22 = arith.constant 0 : index
    %22 = vector.load %arg9[%c0_21, %c0_22] : memref<256x128xbf16, #tpu.memory_space<vmem>>, vector<256x128xbf16>
    %cst_23 = arith.constant dense<0.000000e+00> : vector<384x128xf32>
    %23 = tpu.matmul %21, %22, %cst_23 {dimension_numbers = #tpu.dot_dimension_numbers<[1], [0], [0], [1], [0, 0, 1, 1], [], []>} : vector<384x256xbf16>, vector<256x128xbf16>, vector<384x128xf32> -> vector<384x128xf32>
    %c0_24 = arith.constant 0 : index
    %c0_25 = arith.constant 0 : index
    %24 = vector.load %arg10[%c0_24, %c0_25] : memref<1x128xf32, #tpu.memory_space<vmem>>, vector<1x128xf32>
    %25 = vector.broadcast %24 : vector<1x128xf32> to vector<384x128xf32>
    %26 = arith.addf %23, %25 : vector<384x128xf32>
    %cst_26 = arith.constant 0.000000e+00 : f32
    %27 = vector.broadcast %cst_26 : f32 to vector<384x128xf32>
    %28 = arith.maximumf %26, %27 : vector<384x128xf32>
    %29 = arith.truncf %28 : vector<384x128xf32> to vector<384x128xbf16>
    %c0_27 = arith.constant 0 : index
    %c0_28 = arith.constant 0 : index
    %30 = vector.load %arg12[%c0_27, %c0_28] : memref<384x128xbf16, #tpu.memory_space<vmem>>, vector<384x128xbf16>
    tpu.vector_store %arg12[%c0_27, %c0_28], %29 {strides = array<i32>} : memref<384x128xbf16, #tpu.memory_space<vmem>>, vector<384x128xbf16>,
    return
  }
  func.func @transform_0(%arg0: i32) -> (i32, i32) {
    %c0_i32 = arith.constant 0 : i32
    %c0_i32_0 = arith.constant 0 : i32
    return %arg0, %c0_i32 : i32, i32
  }
  func.func @transform_1(%arg0: i32) -> (i32, i32) {
    %c0_i32 = arith.constant 0 : i32
    %c0_i32_0 = arith.constant 0 : i32
    return %arg0, %c0_i32 : i32, i32
  }
  func.func @transform_2(%arg0: i32) -> (i32, i32) {
    %c0_i32 = arith.constant 0 : i32
    %c0_i32_0 = arith.constant 0 : i32
    return %arg0, %c0_i32 : i32, i32
  }
  func.func @transform_3(%arg0: i32) -> (i32, i32) {
    %c0_i32 = arith.constant 0 : i32
    %c0_i32_0 = arith.constant 0 : i32
    %c0_i32_1 = arith.constant 0 : i32
    return %c0_i32, %c0_i32_0 : i32, i32
  }
  func.func @transform_4(%arg0: i32) -> (i32, i32) {
    %c0_i32 = arith.constant 0 : i32
    %c0_i32_0 = arith.constant 0 : i32
    %c0_i32_1 = arith.constant 0 : i32
    return %c0_i32, %c0_i32_0 : i32, i32
  }
  func.func @transform_5(%arg0: i32) -> (i32, i32) {
    %c0_i32 = arith.constant 0 : i32
    %c0_i32_0 = arith.constant 0 : i32
    %c0_i32_1 = arith.constant 0 : i32
    return %c0_i32, %c0_i32_0 : i32, i32
  }
  func.func @transform_6(%arg0: i32) -> (i32, i32) {
    %c0_i32 = arith.constant 0 : i32
    %c0_i32_0 = arith.constant 0 : i32
    %c0_i32_1 = arith.constant 0 : i32
    return %c0_i32, %c0_i32_0 : i32, i32
  }
  func.func @transform_7(%arg0: i32) -> (i32, i32) {
    %c0_i32 = arith.constant 0 : i32
    %c0_i32_0 = arith.constant 0 : i32
    %c0_i32_1 = arith.constant 0 : i32
    return %c0_i32, %c0_i32_0 : i32, i32
  }
  func.func @transform_8(%arg0: i32) -> (i32, i32) {
    %c0_i32 = arith.constant 0 : i32
    %c0_i32_0 = arith.constant 0 : i32
    %c0_i32_1 = arith.constant 0 : i32
    return %c0_i32, %c0_i32_0 : i32, i32
  }
  func.func @transform_9(%arg0: i32) -> (i32, i32) {
    %c0_i32 = arith.constant 0 : i32
    %c0_i32_0 = arith.constant 0 : i32
    %c0_i32_1 = arith.constant 0 : i32
    return %c0_i32, %c0_i32_0 : i32, i32
  }
  func.func @transform_10(%arg0: i32) -> (i32, i32) {
    %c0_i32 = arith.constant 0 : i32
    %c0_i32_0 = arith.constant 0 : i32
    return %arg0, %c0_i32 : i32, i32
  }
  func.func @transform_11(%arg0: i32) -> (i32, i32) {
    %c0_i32 = arith.constant 0 : i32
    %c0_i32_0 = arith.constant 0 : i32
    return %arg0, %c0_i32 : i32, i32
  }
}

</mosaic_0001>

<llo_original>
// kernel: _forward_impl.1
$region0: #{_forward_impl.1}
  #allocation0 [shape = 'u32[]', space=smem, size = 0x4, offset = 0x4, fixed_abs, tag = 'smem constant byte address 0x4 - core index']
  #allocation1 [shape = 'u32[144,128]{1,0:T(1,128)}', space=vmem, size = 0x12000, scoped, tag = 'internal scratch']
  %s0 = inlined_call_operand.vmem [shape: bf16[384,128], index: 0, kind: input, shape index: {}]
  %s1 = inlined_call_operand.vmem [shape: bf16[96,256], index: 1, kind: input, shape index: {}]
  %s2 = inlined_call_operand.vmem [shape: bf16[48,512], index: 2, kind: input, shape index: {}]
  %s3 = inlined_call_operand.vmem [shape: bf16[384,144], index: 3, kind: input, shape index: {}]
  %s4 = inlined_call_operand.vmem [shape: bf16[128,256], index: 4, kind: input, shape index: {}]
  %s5 = inlined_call_operand.vmem [shape: bf16[256,256], index: 5, kind: input, shape index: {}]
  %s6 = inlined_call_operand.vmem [shape: bf16[512,256], index: 6, kind: input, shape index: {}]
  %s7 = inlined_call_operand.vmem [shape: f32[1,256], index: 7, kind: input, shape index: {}]
  %s8 = inlined_call_operand.hbm [shape: bf16[256,128], index: 8, kind: input, shape index: {}]
  %s9 = inlined_call_operand.vmem [shape: f32[1,128], index: 9, kind: input, shape index: {}]
  %s10 = inlined_call_operand.hbm [shape: bf16[384,256], index: 10, kind: output, shape index: {0}]
  %s11 = inlined_call_operand.hbm [shape: bf16[384,128], index: 11, kind: output, shape index: {1}]
  %12 = xla_tuple %s10, %s11
  %s13 = sld [smem:[#allocation0]]
  $region62: #{_forward_impl.1} parent=0
    _
  %s15 = ssub.s32 1, %s13
  %s16 = scalar_select 0, %s15, %s13
  $region1: #{_forward_impl.1} parent=0
    #allocation2 [shape = 'u8[65536]{0}', space=vmem, size = 0x10000, scoped, tag = 'input window, operand 8, single buffered']
    #allocation3 [shape = 's32[1]{0}', space=sflag, size = 0x4, scoped, tag = 'scoped memory for _forward_impl.1']
    #allocation4 [shape = 's32[1]{0}', space=sflag, size = 0x4, scoped, tag = 'scoped memory for _forward_impl.1']
    #allocation5 [shape = 'u8[196608]{0}', space=vmem, size = 0x30000, scoped, tag = 'output window, operand 0, single buffered']
    #allocation6 [shape = 'u8[98304]{0}', space=vmem, size = 0x18000, scoped, tag = 'output window, operand 1, single buffered']
    #allocation7 [shape = 's32[1]{0}', space=sflag, size = 0x4, scoped, tag = 'scoped memory for _forward_impl.1']
    %17 = vsyncpa [#allocation3], 0
    %18 = vsyncpa [#allocation4], 0
    %19 = vsyncpa [#allocation7], 0
    // Predicated region
    $region2: #{_forward_impl.1} parent=1 // pred_check
      _
    $region3: #{_forward_impl.1} parent=1 // pred_check_branch
      %21 = sbr.rel (0) target = $region5
    $region4: #{_forward_impl.1} parent=1 // pred_region
      _
    $region5: #{_forward_impl.1} parent=1 // pred_fallthru
      _
    // Predicated region
    $region6: #{_forward_impl.1} parent=1 // pred_check
      _
    $region7: #{_forward_impl.1} parent=1 // pred_check_branch
      %23 = sbr.rel (0) target = $region9
    $region8: #{_forward_impl.1} parent=1 // pred_region
      _
    $region9: #{_forward_impl.1} parent=1 // pred_fallthru
      _
    // Predicated region
    $region10: #{_forward_impl.1} parent=1 // pred_check
      _
    $region11: #{_forward_impl.1} parent=1 // pred_check_branch
      %25 = sbr.rel (0) target = $region13
    $region12: #{_forward_impl.1} parent=1 // pred_region
      _
    $region13: #{_forward_impl.1} parent=1 // pred_fallthru
      _
    // Predicated region
    $region14: #{_forward_impl.1} parent=1 // pred_check
      _
    $region15: #{_forward_impl.1} parent=1 // pred_check_branch
      %27 = sbr.rel (0) target = $region17
    $region16: #{_forward_impl.1} parent=1 // pred_region
      _
    $region17: #{_forward_impl.1} parent=1 // pred_fallthru
      _
    // Predicated region
    $region18: #{_forward_impl.1} parent=1 // pred_check
      _
    $region19: #{_forward_impl.1} parent=1 // pred_check_branch
      %29 = sbr.rel (0) target = $region21
    $region20: #{_forward_impl.1} parent=1 // pred_region
      _
    $region21: #{_forward_impl.1} parent=1 // pred_fallthru
      _
    // Predicated region
    $region22: #{_forward_impl.1} parent=1 // pred_check
      _
    $region23: #{_forward_impl.1} parent=1 // pred_check_branch
      %31 = sbr.rel (0) target = $region25
    $region24: #{_forward_impl.1} parent=1 // pred_region
      _
    $region25: #{_forward_impl.1} parent=1 // pred_fallthru
      _
    // Predicated region
    $region26: #{_forward_impl.1} parent=1 // pred_check
      _
    $region27: #{_forward_impl.1} parent=1 // pred_check_branch
      %33 = sbr.rel (0) target = $region29
    $region28: #{_forward_impl.1} parent=1 // pred_region
      _
    $region29: #{_forward_impl.1} parent=1 // pred_fallthru
      _
    // Predicated region
    $region30: #{_forward_impl.1} parent=1 // pred_check
      _
    $region31: #{_forward_impl.1} parent=1 // pred_check_branch
      %35 = sbr.rel (0) target = $region33
    $region32: #{_forward_impl.1} parent=1 // pred_region
      _
    $region33: #{_forward_impl.1} parent=1 // pred_fallthru
      _
    // Predicated region
    $region34: #{_forward_impl.1} parent=1 // pred_check
      _
    $region35: #{_forward_impl.1} parent=1 // pred_check_branch
      %37 = sbr.rel (0) target = $region37
    $region36: #{_forward_impl.1} parent=1 // pred_region
      %s39 = ssub.s32 2048, 2048
      %40 = vsyncadd [#allocation3], %s39
      %s41 = sshll.u32 [#allocation2], 4
      %s42 = int_to_ptr.vmem [resolvable:$true] %s41
      %47 = dma.hbm_to_vmem [thread:$0]  %s8, 2048, %s42, [#allocation3], 64, 64, 4
    $region37: #{_forward_impl.1} parent=1 // pred_fallthru
      _
    // Predicated region
    $region38: #{_forward_impl.1} parent=1 // pred_check
      _
    $region39: #{_forward_impl.1} parent=1 // pred_check_branch
      %49 = sbr.rel (0) target = $region41
    $region40: #{_forward_impl.1} parent=1 // pred_region
      _
    $region41: #{_forward_impl.1} parent=1 // pred_fallthru
      _
    // Predicated region
    $region42: #{_forward_impl.1} parent=1 // pred_check
      _
    $region43: #{_forward_impl.1} parent=1 // pred_check_branch
      %51 = sbr.rel (0) target = $region45
    $region44: #{_forward_impl.1} parent=1 // pred_region
      %52 = dma.done [#allocation3], 2048
    $region45: #{_forward_impl.1} parent=1 // pred_fallthru
      _
    %v54 = vld [vmem:[%s0] sm:$0xf]
    %v55 = vld [vmem:[%s0 + $0x4] sm:$0xf]
    %v56 = vld [vmem:[%s0 + $0x8] sm:$0xf]
    %v57 = vld [vmem:[%s0 + $0xc] sm:$0xf]
    %v58 = vld [vmem:[%s0 + $0x10] sm:$0xf]
    %v59 = vld [vmem:[%s0 + $0x14] sm:$0xf]
    %v60 = vld [vmem:[%s0 + $0x18] sm:$0xf]
    %v61 = vld [vmem:[%s0 + $0x1c] sm:$0xf]
    %v62 = vld [vmem:[%s0 + $0x20] sm:$0xf]
    %v63 = vld [vmem:[%s0 + $0x24] sm:$0xf]
    %v64 = vld [vmem:[%s0 + $0x28] sm:$0xf]
    %v65 = vld [vmem:[%s0 + $0x2c] sm:$0xf]
    %v66 = vld [vmem:[%s0 + $0x30] sm:$0xf]
    %v67 = vld [vmem:[%s0 + $0x34] sm:$0xf]
    %v68 = vld [vmem:[%s0 + $0x38] sm:$0xf]
    %v69 = vld [vmem:[%s0 + $0x3c] sm:$0xf]
    %v70 = vld [vmem:[%s0 + $0x40] sm:$0xf]
    %v71 = vld [vmem:[%s0 + $0x44] sm:$0xf]
    %v72 = vld [vmem:[%s0 + $0x48] sm:$0xf]
    %v73 = vld [vmem:[%s0 + $0x4c] sm:$0xf]
    %v74 = vld [vmem:[%s0 + $0x50] sm:$0xf]
    %v75 = vld [vmem:[%s0 + $0x54] sm:$0xf]
    %v76 = vld [vmem:[%s0 + $0x58] sm:$0xf]
    %v77 = vld [vmem:[%s0 + $0x5c] sm:$0xf]
    %v78 = vld [vmem:[%s0 + $0x60] sm:$0xf]
    %v79 = vld [vmem:[%s0 + $0x64] sm:$0xf]
    %v80 = vld [vmem:[%s0 + $0x68] sm:$0xf]
    %v81 = vld [vmem:[%s0 + $0x6c] sm:$0xf]
    %v82 = vld [vmem:[%s0 + $0x70] sm:$0xf]
    %v83 = vld [vmem:[%s0 + $0x74] sm:$0xf]
    %v84 = vld [vmem:[%s0 + $0x78] sm:$0xf]
    %v85 = vld [vmem:[%s0 + $0x7c] sm:$0xf]
    %v86 = vld [vmem:[%s0 + $0x80] sm:$0xf]
    %v87 = vld [vmem:[%s0 + $0x84] sm:$0xf]
    %v88 = vld [vmem:[%s0 + $0x88] sm:$0xf]
    %v89 = vld [vmem:[%s0 + $0x8c] sm:$0xf]
    %v90 = vld [vmem:[%s0 + $0x90] sm:$0xf]
    %v91 = vld [vmem:[%s0 + $0x94] sm:$0xf]
    %v92 = vld [vmem:[%s0 + $0x98] sm:$0xf]
    %v93 = vld [vmem:[%s0 + $0x9c] sm:$0xf]
    %v94 = vld [vmem:[%s0 + $0xa0] sm:$0xf]
    %v95 = vld [vmem:[%s0 + $0xa4] sm:$0xf]
    %v96 = vld [vmem:[%s0 + $0xa8] sm:$0xf]
    %v97 = vld [vmem:[%s0 + $0xac] sm:$0xf]
    %v98 = vld [vmem:[%s0 + $0xb0] sm:$0xf]
    %v99 = vld [vmem:[%s0 + $0xb4] sm:$0xf]
    %v100 = vld [vmem:[%s0 + $0xb8] sm:$0xf]
    %v101 = vld [vmem:[%s0 + $0xbc] sm:$0xf]
    %v102 = vld [vmem:[%s4] sm:$0xff]
    %v103 = vld [vmem:[%s4 + $0x8] sm:$0xff]
    %v104 = vld [vmem:[%s4 + $0x10] sm:$0xff]
    %v105 = vld [vmem:[%s4 + $0x18] sm:$0xff]
    %v106 = vld [vmem:[%s4 + $0x20] sm:$0xff]
    %v107 = vld [vmem:[%s4 + $0x28] sm:$0xff]
    %v108 = vld [vmem:[%s4 + $0x30] sm:$0xff]
    %v109 = vld [vmem:[%s4 + $0x38] sm:$0xff]
    %v110 = vld [vmem:[%s4 + $0x40] sm:$0xff]
    %v111 = vld [vmem:[%s4 + $0x48] sm:$0xff]
    %v112 = vld [vmem:[%s4 + $0x50] sm:$0xff]
    %v113 = vld [vmem:[%s4 + $0x58] sm:$0xff]
    %v114 = vld [vmem:[%s4 + $0x60] sm:$0xff]
    %v115 = vld [vmem:[%s4 + $0x68] sm:$0xff]
    %v116 = vld [vmem:[%s4 + $0x70] sm:$0xff]
    %v117 = vld [vmem:[%s4 + $0x78] sm:$0xff]
    %v118 = vld [vmem:[%s1] sm:$0xff]
    %v119 = vld [vmem:[%s1 + $0x8] sm:$0xff]
    %v120 = vld [vmem:[%s1 + $0x10] sm:$0xff]
    %v121 = vld [vmem:[%s1 + $0x18] sm:$0xff]
    %v122 = vld [vmem:[%s1 + $0x20] sm:$0xff]
    %v123 = vld [vmem:[%s1 + $0x28] sm:$0xff]
    %v124 = vld [vmem:[%s1 + $0x30] sm:$0xff]
    %v125 = vld [vmem:[%s1 + $0x38] sm:$0xff]
    %v126 = vld [vmem:[%s1 + $0x40] sm:$0xff]
    %v127 = vld [vmem:[%s1 + $0x48] sm:$0xff]
    %v128 = vld [vmem:[%s1 + $0x50] sm:$0xff]
    %v129 = vld [vmem:[%s1 + $0x58] sm:$0xff]
    %v130 = vld [vmem:[%s5] sm:$0xff]
    %v131 = vld [vmem:[%s5 + $0x8] sm:$0xff]
    %v132 = vld [vmem:[%s5 + $0x10] sm:$0xff]
    %v133 = vld [vmem:[%s5 + $0x18] sm:$0xff]
    %v134 = vld [vmem:[%s5 + $0x20] sm:$0xff]
    %v135 = vld [vmem:[%s5 + $0x28] sm:$0xff]
    %v136 = vld [vmem:[%s5 + $0x30] sm:$0xff]
    %v137 = vld [vmem:[%s5 + $0x38] sm:$0xff]
    %v138 = vld [vmem:[%s5 + $0x40] sm:$0xff]
    %v139 = vld [vmem:[%s5 + $0x48] sm:$0xff]
    %v140 = vld [vmem:[%s5 + $0x50] sm:$0xff]
    %v141 = vld [vmem:[%s5 + $0x58] sm:$0xff]
    %v142 = vld [vmem:[%s5 + $0x60] sm:$0xff]
    %v143 = vld [vmem:[%s5 + $0x68] sm:$0xff]
    %v144 = vld [vmem:[%s5 + $0x70] sm:$0xff]
    %v145 = vld [vmem:[%s5 + $0x78] sm:$0xff]
    %v146 = vld [vmem:[%s5 + $0x80] sm:$0xff]
    %v147 = vld [vmem:[%s5 + $0x88] sm:$0xff]
    %v148 = vld [vmem:[%s5 + $0x90] sm:$0xff]
    %v149 = vld [vmem:[%s5 + $0x98] sm:$0xff]
    %v150 = vld [vmem:[%s5 + $0xa0] sm:$0xff]
    %v151 = vld [vmem:[%s5 + $0xa8] sm:$0xff]
    %v152 = vld [vmem:[%s5 + $0xb0] sm:$0xff]
    %v153 = vld [vmem:[%s5 + $0xb8] sm:$0xff]
    %v154 = vld [vmem:[%s5 + $0xc0] sm:$0xff]
    %v155 = vld [vmem:[%s5 + $0xc8] sm:$0xff]
    %v156 = vld [vmem:[%s5 + $0xd0] sm:$0xff]
    %v157 = vld [vmem:[%s5 + $0xd8] sm:$0xff]
    %v158 = vld [vmem:[%s5 + $0xe0] sm:$0xff]
    %v159 = vld [vmem:[%s5 + $0xe8] sm:$0xff]
    %v160 = vld [vmem:[%s5 + $0xf0] sm:$0xff]
    %v161 = vld [vmem:[%s5 + $0xf8] sm:$0xff]
    %v174 = vunpack.c.l.b16 %v118
    %v175 = vunpack.c.h.b16 %v118
    %v176 = vunpack.c.l.b16 %v119
    %v177 = vunpack.c.h.b16 %v119
    %v178 = vunpack.c.l.b16 %v120
    %v179 = vunpack.c.h.b16 %v120
    %v180 = vunpack.c.l.b16 %v121
    %v181 = vunpack.c.h.b16 %v121
    %v182 = vunpack.c.l.b16 %v122
    %v183 = vunpack.c.h.b16 %v122
    %v184 = vunpack.c.l.b16 %v123
    %v185 = vunpack.c.h.b16 %v123
    %v186 = vunpack.c.l.b16 %v124
    %v187 = vunpack.c.h.b16 %v124
    %v188 = vunpack.c.l.b16 %v125
    %v189 = vunpack.c.h.b16 %v125
    %v190 = vunpack.c.l.b16 %v126
    %v191 = vunpack.c.h.b16 %v126
    %v192 = vunpack.c.l.b16 %v127
    %v193 = vunpack.c.h.b16 %v127
    %v194 = vunpack.c.l.b16 %v128
    %v195 = vunpack.c.h.b16 %v128
    %v196 = vunpack.c.l.b16 %v129
    %v197 = vunpack.c.h.b16 %v129
    %v198 = vpack.c.b16 %v176, %v174
    %v199 = vpack.c.b16 %v177, %v175
    %v200 = vpack.c.b16 %v180, %v178
    %v201 = vpack.c.b16 %v181, %v179
    %v202 = vpack.c.b16 %v184, %v182
    %v203 = vpack.c.b16 %v185, %v183
    %v204 = vpack.c.b16 %v188, %v186
    %v205 = vpack.c.b16 %v189, %v187
    %v206 = vpack.c.b16 %v192, %v190
    %v207 = vpack.c.b16 %v193, %v191
    %v208 = vpack.c.b16 %v196, %v194
    %v209 = vpack.c.b16 %v197, %v195
    %v254 = vunpack.c.l.b16 %v130
    %v255 = vunpack.c.h.b16 %v130
    %v256 = vunpack.c.l.b16 %v131
    %v257 = vunpack.c.h.b16 %v131
    %v258 = vunpack.c.l.b16 %v132
    %v259 = vunpack.c.h.b16 %v132
    %v260 = vunpack.c.l.b16 %v133
    %v261 = vunpack.c.h.b16 %v133
    %v262 = vunpack.c.l.b16 %v134
    %v263 = vunpack.c.h.b16 %v134
    %v264 = vunpack.c.l.b16 %v135
    %v265 = vunpack.c.h.b16 %v135
    %v266 = vunpack.c.l.b16 %v136
    %v267 = vunpack.c.h.b16 %v136
    %v268 = vunpack.c.l.b16 %v137
    %v269 = vunpack.c.h.b16 %v137
    %v270 = vunpack.c.l.b16 %v138
    %v271 = vunpack.c.h.b16 %v138
    %v272 = vunpack.c.l.b16 %v139
    %v273 = vunpack.c.h.b16 %v139
    %v274 = vunpack.c.l.b16 %v140
    %v275 = vunpack.c.h.b16 %v140
    %v276 = vunpack.c.l.b16 %v141
    %v277 = vunpack.c.h.b16 %v141
    %v278 = vunpack.c.l.b16 %v142
    %v279 = vunpack.c.h.b16 %v142
    %v280 = vunpack.c.l.b16 %v143
    %v281 = vunpack.c.h.b16 %v143
    %v282 = vunpack.c.l.b16 %v144
    %v283 = vunpack.c.h.b16 %v144
    %v284 = vunpack.c.l.b16 %v145
    %v285 = vunpack.c.h.b16 %v145
    %v286 = vunpack.c.l.b16 %v146
    %v287 = vunpack.c.h.b16 %v146
    %v288 = vunpack.c.l.b16 %v147
    %v289 = vunpack.c.h.b16 %v147
    %v290 = vunpack.c.l.b16 %v148
    %v291 = vunpack.c.h.b16 %v148
    %v292 = vunpack.c.l.b16 %v149
    %v293 = vunpack.c.h.b16 %v149
    %v294 = vunpack.c.l.b16 %v150
    %v295 = vunpack.c.h.b16 %v150
    %v296 = vunpack.c.l.b16 %v151
    %v297 = vunpack.c.h.b16 %v151
    %v298 = vunpack.c.l.b16 %v152
    %v299 = vunpack.c.h.b16 %v152
    %v300 = vunpack.c.l.b16 %v153
    %v301 = vunpack.c.h.b16 %v153
    %v302 = vunpack.c.l.b16 %v154
    %v303 = vunpack.c.h.b16 %v154
    %v304 = vunpack.c.l.b16 %v155
    %v305 = vunpack.c.h.b16 %v155
    %v306 = vunpack.c.l.b16 %v156
    %v307 = vunpack.c.h.b16 %v156
    %v308 = vunpack.c.l.b16 %v157
    %v309 = vunpack.c.h.b16 %v157
    %v310 = vunpack.c.l.b16 %v158
    %v311 = vunpack.c.h.b16 %v158
    %v312 = vunpack.c.l.b16 %v159
    %v313 = vunpack.c.h.b16 %v159
    %v314 = vunpack.c.l.b16 %v160
    %v315 = vunpack.c.h.b16 %v160
    %v316 = vunpack.c.l.b16 %v161
    %v317 = vunpack.c.h.b16 %v161
    %v318 = vpack.c.b16 %v256, %v254
    %v319 = vpack.c.b16 %v257, %v255
    %v320 = vpack.c.b16 %v260, %v258
    %v321 = vpack.c.b16 %v261, %v259
    %v322 = vpack.c.b16 %v264, %v262
    %v323 = vpack.c.b16 %v265, %v263
    %v324 = vpack.c.b16 %v268, %v266
    %v325 = vpack.c.b16 %v269, %v267
    %v326 = vpack.c.b16 %v272, %v270
    %v327 = vpack.c.b16 %v273, %v271
    %v328 = vpack.c.b16 %v276, %v274
    %v329 = vpack.c.b16 %v277, %v275
    %v330 = vpack.c.b16 %v280, %v278
    %v331 = vpack.c.b16 %v281, %v279
    %v332 = vpack.c.b16 %v284, %v282
    %v333 = vpack.c.b16 %v285, %v283
    %v334 = vpack.c.b16 %v288, %v286
    %v335 = vpack.c.b16 %v289, %v287
    %v336 = vpack.c.b16 %v292, %v290
    %v337 = vpack.c.b16 %v293, %v291
    %v338 = vpack.c.b16 %v296, %v294
    %v339 = vpack.c.b16 %v297, %v295
    %v340 = vpack.c.b16 %v300, %v298
    %v341 = vpack.c.b16 %v301, %v299
    %v342 = vpack.c.b16 %v304, %v302
    %v343 = vpack.c.b16 %v305, %v303
    %v344 = vpack.c.b16 %v308, %v306
    %v345 = vpack.c.b16 %v309, %v307
    %v346 = vpack.c.b16 %v312, %v310
    %v347 = vpack.c.b16 %v313, %v311
    %v348 = vpack.c.b16 %v316, %v314
    %v349 = vpack.c.b16 %v317, %v315
    %382 = vmatprep.subr.bf16.mxu0 %v319
    %383 = vmatpush1.bf16.msra.mxu0 %v318
    %384 = vmatprep.subr.bf16.mxu0 %v321
    %385 = vmatpush1.bf16.msra.mxu0 %v320
    %386 = vmatprep.subr.bf16.mxu0 %v323
    %387 = vmatpush1.bf16.msra.mxu0 %v322
    %388 = vmatprep.subr.bf16.mxu0 %v325
    %389 = vmatpush1.bf16.msra.mxu0 %v324
    %390 = vmatprep.subr.bf16.mxu0 %v327
    %391 = vmatpush1.bf16.msra.mxu0 %v326
    %392 = vmatprep.subr.bf16.mxu0 %v329
    %393 = vmatpush1.bf16.msra.mxu0 %v328
    %394 = vmatprep.subr.bf16.mxu0 %v331
    %395 = vmatpush1.bf16.msra.mxu0 %v330
    %396 = vmatprep.subr.bf16.mxu0 %v333
    %397 = vmatpush1.bf16.msra.mxu0 %v332
    %398 = vmatprep.subr.bf16.mxu0 %v335
    %399 = vmatpush1.bf16.msra.mxu0 %v334
    %400 = vmatprep.subr.bf16.mxu0 %v337
    %401 = vmatpush1.bf16.msra.mxu0 %v336
    %402 = vmatprep.subr.bf16.mxu0 %v339
    %403 = vmatpush1.bf16.msra.mxu0 %v338
    %404 = vmatprep.subr.bf16.mxu0 %v341
    %405 = vmatpush1.bf16.msra.mxu0 %v340
    %406 = vmatprep.subr.bf16.mxu0 %v343
    %407 = vmatpush1.bf16.msra.mxu0 %v342
    %408 = vmatprep.subr.bf16.mxu0 %v345
    %409 = vmatpush1.bf16.msra.mxu0 %v344
    %410 = vmatprep.subr.bf16.mxu0 %v347
    %411 = vmatpush1.bf16.msra.mxu0 %v346
    %412 = vmatprep.subr.bf16.mxu0 %v349
    %413 = vmatpush1.bf16.msra.mxu0 %v348
    %414 = vmatprep.mubr.bf16.mxu0 %v199
    %415 = vmatmul.mubr.bf16.gmra.mrb[0].mxu0 %v198
    %v416 = vpop.f32.mrb[0].mxu0
    %v417 = vadd.f32 0.0, %v416
    %v418 = vpop.f32.mrb[0].mxu0
    %v419 = vadd.f32 0.0, %v418
    %v420 = vpop.f32.mrb[0].mxu0
    %v421 = vadd.f32 0.0, %v420
    %v422 = vpop.f32.mrb[0].mxu0
    %v423 = vadd.f32 0.0, %v422
    %424 = vmatprep.mubr.bf16.mxu0 %v201
    %425 = vmatmul.mubr.bf16.gmra.mrb[0].mxu0 %v200
    %v426 = vpop.f32.mrb[0].mxu0
    %v427 = vadd.f32 0.0, %v426
    %v428 = vpop.f32.mrb[0].mxu0
    %v429 = vadd.f32 0.0, %v428
    %v430 = vpop.f32.mrb[0].mxu0
    %v431 = vadd.f32 0.0, %v430
    %v432 = vpop.f32.mrb[0].mxu0
    %v433 = vadd.f32 0.0, %v432
    %434 = vmatprep.mubr.bf16.mxu0 %v203
    %435 = vmatmul.mubr.bf16.gmra.mrb[0].mxu0 %v202
    %v436 = vpop.f32.mrb[0].mxu0
    %v437 = vadd.f32 0.0, %v436
    %v438 = vpop.f32.mrb[0].mxu0
    %v439 = vadd.f32 0.0, %v438
    %v440 = vpop.f32.mrb[0].mxu0
    %v441 = vadd.f32 0.0, %v440
    %v442 = vpop.f32.mrb[0].mxu0
    %v443 = vadd.f32 0.0, %v442
    %444 = vmatprep.mubr.bf16.mxu0 %v205
    %445 = vmatmul.mubr.bf16.gmra.mrb[0].mxu0 %v204
    %v446 = vpop.f32.mrb[0].mxu0
    %v447 = vadd.f32 0.0, %v446
    %v448 = vpop.f32.mrb[0].mxu0
    %v449 = vadd.f32 0.0, %v448
    %v450 = vpop.f32.mrb[0].mxu0
    %v451 = vadd.f32 0.0, %v450
    %v452 = vpop.f32.mrb[0].mxu0
    %v453 = vadd.f32 0.0, %v452
    %454 = vmatprep.mubr.bf16.mxu0 %v207
    %455 = vmatmul.mubr.bf16.gmra.mrb[0].mxu0 %v206
    %v456 = vpop.f32.mrb[0].mxu0
    %v457 = vadd.f32 0.0, %v456
    %v458 = vpop.f32.mrb[0].mxu0
    %v459 = vadd.f32 0.0, %v458
    %v460 = vpop.f32.mrb[0].mxu0
    %v461 = vadd.f32 0.0, %v460
    %v462 = vpop.f32.mrb[0].mxu0
    %v463 = vadd.f32 0.0, %v462
    %464 = vmatprep.mubr.bf16.mxu0 %v209
    %465 = vmatmul.mubr.bf16.gmra.mrb[0].mxu0 %v208
    %v466 = vpop.f32.mrb[0].mxu0
    %v467 = vadd.f32 0.0, %v466
    %v468 = vpop.f32.mrb[0].mxu0
    %v469 = vadd.f32 0.0, %v468
    %v470 = vpop.f32.mrb[0].mxu0
    %v471 = vadd.f32 0.0, %v470
    %v472 = vpop.f32.mrb[0].mxu0
    %v473 = vadd.f32 0.0, %v472
    %474 = vdwg.mxu0
    %v475 = vld [vmem:[%s2] sm:$0xff]
    %v476 = vld [vmem:[%s2 + $0x8] sm:$0xff]
    %v477 = vld [vmem:[%s2 + $0x10] sm:$0xff]
    %v478 = vld [vmem:[%s2 + $0x18] sm:$0xff]
    %v479 = vld [vmem:[%s2 + $0x20] sm:$0xff]
    %v480 = vld [vmem:[%s2 + $0x28] sm:$0xff]
    %v481 = vld [vmem:[%s2 + $0x30] sm:$0xff]
    %v482 = vld [vmem:[%s2 + $0x38] sm:$0xff]
    %v483 = vld [vmem:[%s2 + $0x40] sm:$0xff]
    %v484 = vld [vmem:[%s2 + $0x48] sm:$0xff]
    %v485 = vld [vmem:[%s2 + $0x50] sm:$0xff]
    %v486 = vld [vmem:[%s2 + $0x58] sm:$0xff]
    %v487 = vld [vmem:[%s6] sm:$0xff]
    %v488 = vld [vmem:[%s6 + $0x8] sm:$0xff]
    %v489 = vld [vmem:[%s6 + $0x10] sm:$0xff]
    %v490 = vld [vmem:[%s6 + $0x18] sm:$0xff]
    %v491 = vld [vmem:[%s6 + $0x20] sm:$0xff]
    %v492 = vld [vmem:[%s6 + $0x28] sm:$0xff]
    %v493 = vld [vmem:[%s6 + $0x30] sm:$0xff]
    %v494 = vld [vmem:[%s6 + $0x38] sm:$0xff]
    %v495 = vld [vmem:[%s6 + $0x40] sm:$0xff]
    %v496 = vld [vmem:[%s6 + $0x48] sm:$0xff]
    %v497 = vld [vmem:[%s6 + $0x50] sm:$0xff]
    %v498 = vld [vmem:[%s6 + $0x58] sm:$0xff]
    %v499 = vld [vmem:[%s6 + $0x60] sm:$0xff]
    %v500 = vld [vmem:[%s6 + $0x68] sm:$0xff]
    %v501 = vld [vmem:[%s6 + $0x70] sm:$0xff]
    %v502 = vld [vmem:[%s6 + $0x78] sm:$0xff]
    %v503 = vld [vmem:[%s6 + $0x80] sm:$0xff]
    %v504 = vld [vmem:[%s6 + $0x88] sm:$0xff]
    %v505 = vld [vmem:[%s6 + $0x90] sm:$0xff]
    %v506 = vld [vmem:[%s6 + $0x98] sm:$0xff]
    %v507 = vld [vmem:[%s6 + $0xa0] sm:$0xff]
    %v508 = vld [vmem:[%s6 + $0xa8] sm:$0xff]
    %v509 = vld [vmem:[%s6 + $0xb0] sm:$0xff]
    %v510 = vld [vmem:[%s6 + $0xb8] sm:$0xff]
    %v511 = vld [vmem:[%s6 + $0xc0] sm:$0xff]
    %v512 = vld [vmem:[%s6 + $0xc8] sm:$0xff]
    %v513 = vld [vmem:[%s6 + $0xd0] sm:$0xff]
    %v514 = vld [vmem:[%s6 + $0xd8] sm:$0xff]
    %v515 = vld [vmem:[%s6 + $0xe0] sm:$0xff]
    %v516 = vld [vmem:[%s6 + $0xe8] sm:$0xff]
    %v517 = vld [vmem:[%s6 + $0xf0] sm:$0xff]
    %v518 = vld [vmem:[%s6 + $0xf8] sm:$0xff]
    %v519 = vld [vmem:[%s6 + $0x100] sm:$0xff]
    %v520 = vld [vmem:[%s6 + $0x108] sm:$0xff]
    %v521 = vld [vmem:[%s6 + $0x110] sm:$0xff]
    %v522 = vld [vmem:[%s6 + $0x118] sm:$0xff]
    %v523 = vld [vmem:[%s6 + $0x120] sm:$0xff]
    %v524 = vld [vmem:[%s6 + $0x128] sm:$0xff]
    %v525 = vld [vmem:[%s6 + $0x130] sm:$0xff]
    %v526 = vld [vmem:[%s6 + $0x138] sm:$0xff]
    %v527 = vld [vmem:[%s6 + $0x140] sm:$0xff]
    %v528 = vld [vmem:[%s6 + $0x148] sm:$0xff]
    %v529 = vld [vmem:[%s6 + $0x150] sm:$0xff]
    %v530 = vld [vmem:[%s6 + $0x158] sm:$0xff]
    %v531 = vld [vmem:[%s6 + $0x160] sm:$0xff]
    %v532 = vld [vmem:[%s6 + $0x168] sm:$0xff]
    %v533 = vld [vmem:[%s6 + $0x170] sm:$0xff]
    %v534 = vld [vmem:[%s6 + $0x178] sm:$0xff]
    %v535 = vld [vmem:[%s6 + $0x180] sm:$0xff]
    %v536 = vld [vmem:[%s6 + $0x188] sm:$0xff]
    %v537 = vld [vmem:[%s6 + $0x190] sm:$0xff]
    %v538 = vld [vmem:[%s6 + $0x198] sm:$0xff]
    %v539 = vld [vmem:[%s6 + $0x1a0] sm:$0xff]
    %v540 = vld [vmem:[%s6 + $0x1a8] sm:$0xff]
    %v541 = vld [vmem:[%s6 + $0x1b0] sm:$0xff]
    %v542 = vld [vmem:[%s6 + $0x1b8] sm:$0xff]
    %v543 = vld [vmem:[%s6 + $0x1c0] sm:$0xff]
    %v544 = vld [vmem:[%s6 + $0x1c8] sm:$0xff]
    %v545 = vld [vmem:[%s6 + $0x1d0] sm:$0xff]
    %v546 = vld [vmem:[%s6 + $0x1d8] sm:$0xff]
    %v547 = vld [vmem:[%s6 + $0x1e0] sm:$0xff]
    %v548 = vld [vmem:[%s6 + $0x1e8] sm:$0xff]
    %v549 = vld [vmem:[%s6 + $0x1f0] sm:$0xff]
    %v550 = vld [vmem:[%s6 + $0x1f8] sm:$0xff]
    %v563 = vunpack.c.l.b16 %v475
    %v564 = vunpack.c.h.b16 %v475
    %v565 = vunpack.c.l.b16 %v476
    %v566 = vunpack.c.h.b16 %v476
    %v567 = vunpack.c.l.b16 %v477
    %v568 = vunpack.c.h.b16 %v477
    %v569 = vunpack.c.l.b16 %v478
    %v570 = vunpack.c.h.b16 %v478
    %v571 = vunpack.c.l.b16 %v479
    %v572 = vunpack.c.h.b16 %v479
    %v573 = vunpack.c.l.b16 %v480
    %v574 = vunpack.c.h.b16 %v480
    %v575 = vunpack.c.l.b16 %v481
    %v576 = vunpack.c.h.b16 %v481
    %v577 = vunpack.c.l.b16 %v482
    %v578 = vunpack.c.h.b16 %v482
    %v579 = vunpack.c.l.b16 %v483
    %v580 = vunpack.c.h.b16 %v483
    %v581 = vunpack.c.l.b16 %v484
    %v582 = vunpack.c.h.b16 %v484
    %v583 = vunpack.c.l.b16 %v485
    %v584 = vunpack.c.h.b16 %v485
    %v585 = vunpack.c.l.b16 %v486
    %v586 = vunpack.c.h.b16 %v486
    %v587 = vpack.c.b16 %v567, %v563
    %v588 = vpack.c.b16 %v568, %v564
    %v589 = vpack.c.b16 %v569, %v565
    %v590 = vpack.c.b16 %v570, %v566
    %v591 = vpack.c.b16 %v575, %v571
    %v592 = vpack.c.b16 %v576, %v572
    %v593 = vpack.c.b16 %v577, %v573
    %v594 = vpack.c.b16 %v578, %v574
    %v595 = vpack.c.b16 %v583, %v579
    %v596 = vpack.c.b16 %v584, %v580
    %v597 = vpack.c.b16 %v585, %v581
    %v598 = vpack.c.b16 %v586, %v582
    %v675 = vunpack.c.l.b16 %v487
    %v676 = vunpack.c.h.b16 %v487
    %v677 = vunpack.c.l.b16 %v488
    %v678 = vunpack.c.h.b16 %v488
    %v679 = vunpack.c.l.b16 %v489
    %v680 = vunpack.c.h.b16 %v489
    %v681 = vunpack.c.l.b16 %v490
    %v682 = vunpack.c.h.b16 %v490
    %v683 = vunpack.c.l.b16 %v491
    %v684 = vunpack.c.h.b16 %v491
    %v685 = vunpack.c.l.b16 %v492
    %v686 = vunpack.c.h.b16 %v492
    %v687 = vunpack.c.l.b16 %v493
    %v688 = vunpack.c.h.b16 %v493
    %v689 = vunpack.c.l.b16 %v494
    %v690 = vunpack.c.h.b16 %v494
    %v691 = vunpack.c.l.b16 %v495
    %v692 = vunpack.c.h.b16 %v495
    %v693 = vunpack.c.l.b16 %v496
    %v694 = vunpack.c.h.b16 %v496
    %v695 = vunpack.c.l.b16 %v497
    %v696 = vunpack.c.h.b16 %v497
    %v697 = vunpack.c.l.b16 %v498
    %v698 = vunpack.c.h.b16 %v498
    %v699 = vunpack.c.l.b16 %v499
    %v700 = vunpack.c.h.b16 %v499
    %v701 = vunpack.c.l.b16 %v500
    %v702 = vunpack.c.h.b16 %v500
    %v703 = vunpack.c.l.b16 %v501
    %v704 = vunpack.c.h.b16 %v501
    %v705 = vunpack.c.l.b16 %v502
    %v706 = vunpack.c.h.b16 %v502
    %v707 = vunpack.c.l.b16 %v503
    %v708 = vunpack.c.h.b16 %v503
    %v709 = vunpack.c.l.b16 %v504
    %v710 = vunpack.c.h.b16 %v504
    %v711 = vunpack.c.l.b16 %v505
    %v712 = vunpack.c.h.b16 %v505
    %v713 = vunpack.c.l.b16 %v506
    %v714 = vunpack.c.h.b16 %v506
    %v715 = vunpack.c.l.b16 %v507
    %v716 = vunpack.c.h.b16 %v507
    %v717 = vunpack.c.l.b16 %v508
    %v718 = vunpack.c.h.b16 %v508
    %v719 = vunpack.c.l.b16 %v509
    %v720 = vunpack.c.h.b16 %v509
    %v721 = vunpack.c.l.b16 %v510
    %v722 = vunpack.c.h.b16 %v510
    %v723 = vunpack.c.l.b16 %v511
    %v724 = vunpack.c.h.b16 %v511
    %v725 = vunpack.c.l.b16 %v512
    %v726 = vunpack.c.h.b16 %v512
    %v727 = vunpack.c.l.b16 %v513
    %v728 = vunpack.c.h.b16 %v513
    %v729 = vunpack.c.l.b16 %v514
    %v730 = vunpack.c.h.b16 %v514
    %v731 = vunpack.c.l.b16 %v515
    %v732 = vunpack.c.h.b16 %v515
    %v733 = vunpack.c.l.b16 %v516
    %v734 = vunpack.c.h.b16 %v516
    %v735 = vunpack.c.l.b16 %v517
    %v736 = vunpack.c.h.b16 %v517
    %v737 = vunpack.c.l.b16 %v518
    %v738 = vunpack.c.h.b16 %v518
    %v739 = vunpack.c.l.b16 %v519
    %v740 = vunpack.c.h.b16 %v519
    %v741 = vunpack.c.l.b16 %v520
    %v742 = vunpack.c.h.b16 %v520
    %v743 = vunpack.c.l.b16 %v521
    %v744 = vunpack.c.h.b16 %v521
    %v745 = vunpack.c.l.b16 %v522
    %v746 = vunpack.c.h.b16 %v522
    %v747 = vunpack.c.l.b16 %v523
    %v748 = vunpack.c.h.b16 %v523
    %v749 = vunpack.c.l.b16 %v524
    %v750 = vunpack.c.h.b16 %v524
    %v751 = vunpack.c.l.b16 %v525
    %v752 = vunpack.c.h.b16 %v525
    %v753 = vunpack.c.l.b16 %v526
    %v754 = vunpack.c.h.b16 %v526
    %v755 = vunpack.c.l.b16 %v527
    %v756 = vunpack.c.h.b16 %v527
    %v757 = vunpack.c.l.b16 %v528
    %v758 = vunpack.c.h.b16 %v528
    %v759 = vunpack.c.l.b16 %v529
    %v760 = vunpack.c.h.b16 %v529
    %v761 = vunpack.c.l.b16 %v530
    %v762 = vunpack.c.h.b16 %v530
    %v763 = vunpack.c.l.b16 %v531
    %v764 = vunpack.c.h.b16 %v531
    %v765 = vunpack.c.l.b16 %v532
    %v766 = vunpack.c.h.b16 %v532
    %v767 = vunpack.c.l.b16 %v533
    %v768 = vunpack.c.h.b16 %v533
    %v769 = vunpack.c.l.b16 %v534
    %v770 = vunpack.c.h.b16 %v534
    %v771 = vunpack.c.l.b16 %v535
    %v772 = vunpack.c.h.b16 %v535
    %v773 = vunpack.c.l.b16 %v536
    %v774 = vunpack.c.h.b16 %v536
    %v775 = vunpack.c.l.b16 %v537
    %v776 = vunpack.c.h.b16 %v537
    %v777 = vunpack.c.l.b16 %v538
    %v778 = vunpack.c.h.b16 %v538
    %v779 = vunpack.c.l.b16 %v539
    %v780 = vunpack.c.h.b16 %v539
    %v781 = vunpack.c.l.b16 %v540
    %v782 = vunpack.c.h.b16 %v540
    %v783 = vunpack.c.l.b16 %v541
    %v784 = vunpack.c.h.b16 %v541
    %v785 = vunpack.c.l.b16 %v542
    %v786 = vunpack.c.h.b16 %v542
    %v787 = vunpack.c.l.b16 %v543
    %v788 = vunpack.c.h.b16 %v543
    %v789 = vunpack.c.l.b16 %v544
    %v790 = vunpack.c.h.b16 %v544
    %v791 = vunpack.c.l.b16 %v545
    %v792 = vunpack.c.h.b16 %v545
    %v793 = vunpack.c.l.b16 %v546
    %v794 = vunpack.c.h.b16 %v546
    %v795 = vunpack.c.l.b16 %v547
    %v796 = vunpack.c.h.b16 %v547
    %v797 = vunpack.c.l.b16 %v548
    %v798 = vunpack.c.h.b16 %v548
    %v799 = vunpack.c.l.b16 %v549
    %v800 = vunpack.c.h.b16 %v549
    %v801 = vunpack.c.l.b16 %v550
    %v802 = vunpack.c.h.b16 %v550
    %v803 = vpack.c.b16 %v677, %v675
    %v804 = vpack.c.b16 %v678, %v676
    %v805 = vpack.c.b16 %v681, %v679
    %v806 = vpack.c.b16 %v682, %v680
    %v807 = vpack.c.b16 %v685, %v683
    %v808 = vpack.c.b16 %v686, %v684
    %v809 = vpack.c.b16 %v689, %v687
    %v810 = vpack.c.b16 %v690, %v688
    %v811 = vpack.c.b16 %v693, %v691
    %v812 = vpack.c.b16 %v694, %v692
    %v813 = vpack.c.b16 %v697, %v695
    %v814 = vpack.c.b16 %v698, %v696
    %v815 = vpack.c.b16 %v701, %v699
    %v816 = vpack.c.b16 %v702, %v700
    %v817 = vpack.c.b16 %v705, %v703
    %v818 = vpack.c.b16 %v706, %v704
    %v819 = vpack.c.b16 %v709, %v707
    %v820 = vpack.c.b16 %v710, %v708
    %v821 = vpack.c.b16 %v713, %v711
    %v822 = vpack.c.b16 %v714, %v712
    %v823 = vpack.c.b16 %v717, %v715
    %v824 = vpack.c.b16 %v718, %v716
    %v825 = vpack.c.b16 %v721, %v719
    %v826 = vpack.c.b16 %v722, %v720
    %v827 = vpack.c.b16 %v725, %v723
    %v828 = vpack.c.b16 %v726, %v724
    %v829 = vpack.c.b16 %v729, %v727
    %v830 = vpack.c.b16 %v730, %v728
    %v831 = vpack.c.b16 %v733, %v731
    %v832 = vpack.c.b16 %v734, %v732
    %v833 = vpack.c.b16 %v737, %v735
    %v834 = vpack.c.b16 %v738, %v736
    %v835 = vpack.c.b16 %v741, %v739
    %v836 = vpack.c.b16 %v742, %v740
    %v837 = vpack.c.b16 %v745, %v743
    %v838 = vpack.c.b16 %v746, %v744
    %v839 = vpack.c.b16 %v749, %v747
    %v840 = vpack.c.b16 %v750, %v748
    %v841 = vpack.c.b16 %v753, %v751
    %v842 = vpack.c.b16 %v754, %v752
    %v843 = vpack.c.b16 %v757, %v755
    %v844 = vpack.c.b16 %v758, %v756
    %v845 = vpack.c.b16 %v761, %v759
    %v846 = vpack.c.b16 %v762, %v760
    %v847 = vpack.c.b16 %v765, %v763
    %v848 = vpack.c.b16 %v766, %v764
    %v849 = vpack.c.b16 %v769, %v767
    %v850 = vpack.c.b16 %v770, %v768
    %v851 = vpack.c.b16 %v773, %v771
    %v852 = vpack.c.b16 %v774, %v772
    %v853 = vpack.c.b16 %v777, %v775
    %v854 = vpack.c.b16 %v778, %v776
    %v855 = vpack.c.b16 %v781, %v779
    %v856 = vpack.c.b16 %v782, %v780
    %v857 = vpack.c.b16 %v785, %v783
    %v858 = vpack.c.b16 %v786, %v784
    %v859 = vpack.c.b16 %v789, %v787
    %v860 = vpack.c.b16 %v790, %v788
    %v861 = vpack.c.b16 %v793, %v791
    %v862 = vpack.c.b16 %v794, %v792
    %v863 = vpack.c.b16 %v797, %v795
    %v864 = vpack.c.b16 %v798, %v796
    %v865 = vpack.c.b16 %v801, %v799
    %v866 = vpack.c.b16 %v802, %v800
    %931 = vmatprep.subr.bf16.mxu0 %v804
    %932 = vmatpush1.bf16.msra.mxu0 %v803
    %933 = vmatprep.subr.bf16.mxu0 %v806
    %934 = vmatpush1.bf16.msra.mxu0 %v805
    %935 = vmatprep.subr.bf16.mxu0 %v808
    %936 = vmatpush1.bf16.msra.mxu0 %v807
    %937 = vmatprep.subr.bf16.mxu0 %v810
    %938 = vmatpush1.bf16.msra.mxu0 %v809
    %939 = vmatprep.subr.bf16.mxu0 %v812
    %940 = vmatpush1.bf16.msra.mxu0 %v811
    %941 = vmatprep.subr.bf16.mxu0 %v814
    %942 = vmatpush1.bf16.msra.mxu0 %v813
    %943 = vmatprep.subr.bf16.mxu0 %v816
    %944 = vmatpush1.bf16.msra.mxu0 %v815
    %945 = vmatprep.subr.bf16.mxu0 %v818
    %946 = vmatpush1.bf16.msra.mxu0 %v817
    %947 = vmatprep.subr.bf16.mxu0 %v820
    %948 = vmatpush1.bf16.msra.mxu0 %v819
    %949 = vmatprep.subr.bf16.mxu0 %v822
    %950 = vmatpush1.bf16.msra.mxu0 %v821
    %951 = vmatprep.subr.bf16.mxu0 %v824
    %952 = vmatpush1.bf16.msra.mxu0 %v823
    %953 = vmatprep.subr.bf16.mxu0 %v826
    %954 = vmatpush1.bf16.msra.mxu0 %v825
    %955 = vmatprep.subr.bf16.mxu0 %v828
    %956 = vmatpush1.bf16.msra.mxu0 %v827
    %957 = vmatprep.subr.bf16.mxu0 %v830
    %958 = vmatpush1.bf16.msra.mxu0 %v829
    %959 = vmatprep.subr.bf16.mxu0 %v832
    %960 = vmatpush1.bf16.msra.mxu0 %v831
    %961 = vmatprep.subr.bf16.mxu0 %v834
    %962 = vmatpush1.bf16.msra.mxu0 %v833
    %963 = vmatprep.mubr.bf16.mxu0 %v588
    %964 = vmatmul.mubr.bf16.gmra.mrb[0].mxu0 %v587
    %v965 = vpop.f32.mrb[0].mxu0
    %v966 = vadd.f32 0.0, %v965
    %v967 = vpop.f32.mrb[0].mxu0
    %v968 = vadd.f32 0.0, %v967
    %v969 = vpop.f32.mrb[0].mxu0
    %v970 = vadd.f32 0.0, %v969
    %v971 = vpop.f32.mrb[0].mxu0
    %v972 = vadd.f32 0.0, %v971
    %973 = vmatprep.mubr.bf16.mxu0 %v592
    %974 = vmatmul.mubr.bf16.gmra.mrb[0].mxu0 %v591
    %v975 = vpop.f32.mrb[0].mxu0
    %v976 = vadd.f32 0.0, %v975
    %v977 = vpop.f32.mrb[0].mxu0
    %v978 = vadd.f32 0.0, %v977
    %v979 = vpop.f32.mrb[0].mxu0
    %v980 = vadd.f32 0.0, %v979
    %v981 = vpop.f32.mrb[0].mxu0
    %v982 = vadd.f32 0.0, %v981
    %983 = vmatprep.mubr.bf16.mxu0 %v596
    %984 = vmatmul.mubr.bf16.gmra.mrb[0].mxu0 %v595
    %v985 = vpop.f32.mrb[0].mxu0
    %v986 = vadd.f32 0.0, %v985
    %v987 = vpop.f32.mrb[0].mxu0
    %v988 = vadd.f32 0.0, %v987
    %v989 = vpop.f32.mrb[0].mxu0
    %v990 = vadd.f32 0.0, %v989
    %v991 = vpop.f32.mrb[0].mxu0
    %v992 = vadd.f32 0.0, %v991
    %993 = vdwg.mxu0
    %994 = vmatprep.subr.bf16.mxu0 %v836
    %995 = vmatpush1.bf16.msra.mxu0 %v835
    %996 = vmatprep.subr.bf16.mxu0 %v838
    %997 = vmatpush1.bf16.msra.mxu0 %v837
    %998 = vmatprep.subr.bf16.mxu0 %v840
    %999 = vmatpush1.bf16.msra.mxu0 %v839
    %1000 = vmatprep.subr.bf16.mxu0 %v842
    %1001 = vmatpush1.bf16.msra.mxu0 %v841
    %1002 = vmatprep.subr.bf16.mxu0 %v844
    %1003 = vmatpush1.bf16.msra.mxu0 %v843
    %1004 = vmatprep.subr.bf16.mxu0 %v846
    %1005 = vmatpush1.bf16.msra.mxu0 %v845
    %1006 = vmatprep.subr.bf16.mxu0 %v848
    %1007 = vmatpush1.bf16.msra.mxu0 %v847
    %1008 = vmatprep.subr.bf16.mxu0 %v850
    %1009 = vmatpush1.bf16.msra.mxu0 %v849
    %1010 = vmatprep.subr.bf16.mxu0 %v852
    %1011 = vmatpush1.bf16.msra.mxu0 %v851
    %1012 = vmatprep.subr.bf16.mxu0 %v854
    %1013 = vmatpush1.bf16.msra.mxu0 %v853
    %1014 = vmatprep.subr.bf16.mxu0 %v856
    %1015 = vmatpush1.bf16.msra.mxu0 %v855
    %1016 = vmatprep.subr.bf16.mxu0 %v858
    %1017 = vmatpush1.bf16.msra.mxu0 %v857
    %1018 = vmatprep.subr.bf16.mxu0 %v860
    %1019 = vmatpush1.bf16.msra.mxu0 %v859
    %1020 = vmatprep.subr.bf16.mxu0 %v862
    %1021 = vmatpush1.bf16.msra.mxu0 %v861
    %1022 = vmatprep.subr.bf16.mxu0 %v864
    %1023 = vmatpush1.bf16.msra.mxu0 %v863
    %1024 = vmatprep.subr.bf16.mxu0 %v866
    %1025 = vmatpush1.bf16.msra.mxu0 %v865
    %1026 = vmatprep.mubr.bf16.mxu0 %v590
    %1027 = vmatmul.mubr.bf16.gmra.mrb[0].mxu0 %v589
    %v1028 = vpop.f32.mrb[0].mxu0
    %v1029 = vadd.f32 %v966, %v1028
    %v1030 = vpop.f32.mrb[0].mxu0
    %v1031 = vadd.f32 %v968, %v1030
    %v1032 = vpop.f32.mrb[0].mxu0
    %v1033 = vadd.f32 %v970, %v1032
    %v1034 = vpop.f32.mrb[0].mxu0
    %v1035 = vadd.f32 %v972, %v1034
    %1036 = vmatprep.mubr.bf16.mxu0 %v594
    %1037 = vmatmul.mubr.bf16.gmra.mrb[0].mxu0 %v593
    %v1038 = vpop.f32.mrb[0].mxu0
    %v1039 = vadd.f32 %v976, %v1038
    %v1040 = vpop.f32.mrb[0].mxu0
    %v1041 = vadd.f32 %v978, %v1040
    %v1042 = vpop.f32.mrb[0].mxu0
    %v1043 = vadd.f32 %v980, %v1042
    %v1044 = vpop.f32.mrb[0].mxu0
    %v1045 = vadd.f32 %v982, %v1044
    %1046 = vmatprep.mubr.bf16.mxu0 %v598
    %1047 = vmatmul.mubr.bf16.gmra.mrb[0].mxu0 %v597
    %v1048 = vpop.f32.mrb[0].mxu0
    %v1049 = vadd.f32 %v986, %v1048
    %v1050 = vpop.f32.mrb[0].mxu0
    %v1051 = vadd.f32 %v988, %v1050
    %v1052 = vpop.f32.mrb[0].mxu0
    %v1053 = vadd.f32 %v990, %v1052
    %v1054 = vpop.f32.mrb[0].mxu0
    %v1055 = vadd.f32 %v992, %v1054
    %1056 = vdwg.mxu0
    %v1057 = vpack.c.bf16 %v421, %v417
    %v1058 = vpack.c.bf16 %v423, %v419
    %v1059 = vpack.c.bf16 %v431, %v427
    %v1060 = vpack.c.bf16 %v433, %v429
    %v1061 = vpack.c.bf16 %v441, %v437
    %v1062 = vpack.c.bf16 %v443, %v439
    %v1063 = vpack.c.bf16 %v451, %v447
    %v1064 = vpack.c.bf16 %v453, %v449
    %v1065 = vpack.c.bf16 %v461, %v457
    %v1066 = vpack.c.bf16 %v463, %v459
    %v1067 = vpack.c.bf16 %v471, %v467
    %v1068 = vpack.c.bf16 %v473, %v469
    %v1069 = vpack.c.bf16 %v1033, %v1029
    %v1070 = vpack.c.bf16 %v1035, %v1031
    %v1071 = vpack.c.bf16 %v1043, %v1039
    %v1072 = vpack.c.bf16 %v1045, %v1041
    %v1073 = vpack.c.bf16 %v1053, %v1049
    %v1074 = vpack.c.bf16 %v1055, %v1051
    %v1075 = vld [vmem:[%s3] sm:$0xff]
    %v1076 = vld [vmem:[%s3 + $0x8] sm:$0xff]
    %v1077 = vld [vmem:[%s3 + $0x10] sm:$0xff]
    %v1078 = vld [vmem:[%s3 + $0x18] sm:$0xff]
    %v1079 = vld [vmem:[%s3 + $0x20] sm:$0xff]
    %v1080 = vld [vmem:[%s3 + $0x28] sm:$0xff]
    %v1081 = vld [vmem:[%s3 + $0x30] sm:$0xff]
    %v1082 = vld [vmem:[%s3 + $0x38] sm:$0xff]
    %v1083 = vld [vmem:[%s3 + $0x40] sm:$0xff]
    %v1084 = vld [vmem:[%s3 + $0x48] sm:$0xff]
    %v1085 = vld [vmem:[%s3 + $0x50] sm:$0xff]
    %v1086 = vld [vmem:[%s3 + $0x58] sm:$0xff]
    %v1087 = vld [vmem:[%s3 + $0x60] sm:$0xff]
    %v1088 = vld [vmem:[%s3 + $0x68] sm:$0xff]
    %v1089 = vld [vmem:[%s3 + $0x70] sm:$0xff]
    %v1090 = vld [vmem:[%s3 + $0x78] sm:$0xff]
    %v1091 = vld [vmem:[%s3 + $0x80] sm:$0xff]
    %v1092 = vld [vmem:[%s3 + $0x88] sm:$0xff]
    %v1093 = vld [vmem:[%s3 + $0x90] sm:$0xff]
    %v1094 = vld [vmem:[%s3 + $0x98] sm:$0xff]
    %v1095 = vld [vmem:[%s3 + $0xa0] sm:$0xff]
    %v1096 = vld [vmem:[%s3 + $0xa8] sm:$0xff]
    %v1097 = vld [vmem:[%s3 + $0xb0] sm:$0xff]
    %v1098 = vld [vmem:[%s3 + $0xb8] sm:$0xff]
    %v1099 = vld [vmem:[%s3 + $0xc0] sm:$0xff]
    %v1100 = vld [vmem:[%s3 + $0xc8] sm:$0xff]
    %v1101 = vld [vmem:[%s3 + $0xd0] sm:$0xff]
    %v1102 = vld [vmem:[%s3 + $0xd8] sm:$0xff]
    %v1103 = vld [vmem:[%s3 + $0xe0] sm:$0xff]
    %v1104 = vld [vmem:[%s3 + $0xe8] sm:$0xff]
    %v1105 = vld [vmem:[%s3 + $0xf0] sm:$0xff]
    %v1106 = vld [vmem:[%s3 + $0xf8] sm:$0xff]
    %v1107 = vld [vmem:[%s3 + $0x100] sm:$0xff]
    %v1108 = vld [vmem:[%s3 + $0x108] sm:$0xff]
    %v1109 = vld [vmem:[%s3 + $0x110] sm:$0xff]
    %v1110 = vld [vmem:[%s3 + $0x118] sm:$0xff]
    %v1111 = vld [vmem:[%s3 + $0x120] sm:$0xff]
    %v1112 = vld [vmem:[%s3 + $0x128] sm:$0xff]
    %v1113 = vld [vmem:[%s3 + $0x130] sm:$0xff]
    %v1114 = vld [vmem:[%s3 + $0x138] sm:$0xff]
    %v1115 = vld [vmem:[%s3 + $0x140] sm:$0xff]
    %v1116 = vld [vmem:[%s3 + $0x148] sm:$0xff]
    %v1117 = vld [vmem:[%s3 + $0x150] sm:$0xff]
    %v1118 = vld [vmem:[%s3 + $0x158] sm:$0xff]
    %v1119 = vld [vmem:[%s3 + $0x160] sm:$0xff]
    %v1120 = vld [vmem:[%s3 + $0x168] sm:$0xff]
    %v1121 = vld [vmem:[%s3 + $0x170] sm:$0xff]
    %v1122 = vld [vmem:[%s3 + $0x178] sm:$0xff]
    %v1171 = vunpack.c.l.b16 %v1075
    %v1172 = vunpack.c.h.b16 %v1075
    %v1173 = vunpack.c.l.b16 %v1076
    %v1174 = vunpack.c.h.b16 %v1076
    %v1175 = vunpack.c.l.b16 %v1077
    %v1176 = vunpack.c.h.b16 %v1077
    %v1177 = vunpack.c.l.b16 %v1078
    %v1178 = vunpack.c.h.b16 %v1078
    %v1179 = vunpack.c.l.b16 %v1079
    %v1180 = vunpack.c.h.b16 %v1079
    %v1181 = vunpack.c.l.b16 %v1080
    %v1182 = vunpack.c.h.b16 %v1080
    %v1183 = vunpack.c.l.b16 %v1081
    %v1184 = vunpack.c.h.b16 %v1081
    %v1185 = vunpack.c.l.b16 %v1082
    %v1186 = vunpack.c.h.b16 %v1082
    %v1187 = vunpack.c.l.b16 %v1083
    %v1188 = vunpack.c.h.b16 %v1083
    %v1189 = vunpack.c.l.b16 %v1084
    %v1190 = vunpack.c.h.b16 %v1084
    %v1191 = vunpack.c.l.b16 %v1085
    %v1192 = vunpack.c.h.b16 %v1085
    %v1193 = vunpack.c.l.b16 %v1086
    %v1194 = vunpack.c.h.b16 %v1086
    %v1195 = vunpack.c.l.b16 %v1087
    %v1196 = vunpack.c.h.b16 %v1087
    %v1197 = vunpack.c.l.b16 %v1088
    %v1198 = vunpack.c.h.b16 %v1088
    %v1199 = vunpack.c.l.b16 %v1089
    %v1200 = vunpack.c.h.b16 %v1089
    %v1201 = vunpack.c.l.b16 %v1090
    %v1202 = vunpack.c.h.b16 %v1090
    %v1203 = vunpack.c.l.b16 %v1091
    %v1204 = vunpack.c.h.b16 %v1091
    %v1205 = vunpack.c.l.b16 %v1092
    %v1206 = vunpack.c.h.b16 %v1092
    %v1207 = vunpack.c.l.b16 %v1093
    %v1208 = vunpack.c.h.b16 %v1093
    %v1209 = vunpack.c.l.b16 %v1094
    %v1210 = vunpack.c.h.b16 %v1094
    %v1211 = vunpack.c.l.b16 %v1095
    %v1212 = vunpack.c.h.b16 %v1095
    %v1213 = vunpack.c.l.b16 %v1096
    %v1214 = vunpack.c.h.b16 %v1096
    %v1215 = vunpack.c.l.b16 %v1097
    %v1216 = vunpack.c.h.b16 %v1097
    %v1217 = vunpack.c.l.b16 %v1098
    %v1218 = vunpack.c.h.b16 %v1098
    %v1219 = vunpack.c.l.b16 %v1099
    %v1220 = vunpack.c.h.b16 %v1099
    %v1221 = vunpack.c.l.b16 %v1100
    %v1222 = vunpack.c.h.b16 %v1100
    %v1223 = vunpack.c.l.b16 %v1101
    %v1224 = vunpack.c.h.b16 %v1101
    %v1225 = vunpack.c.l.b16 %v1102
    %v1226 = vunpack.c.h.b16 %v1102
    %v1227 = vunpack.c.l.b16 %v1103
    %v1228 = vunpack.c.h.b16 %v1103
    %v1229 = vunpack.c.l.b16 %v1104
    %v1230 = vunpack.c.h.b16 %v1104
    %v1231 = vunpack.c.l.b16 %v1105
    %v1232 = vunpack.c.h.b16 %v1105
    %v1233 = vunpack.c.l.b16 %v1106
    %v1234 = vunpack.c.h.b16 %v1106
    %v1235 = vunpack.c.l.b16 %v1107
    %v1236 = vunpack.c.h.b16 %v1107
    %v1237 = vunpack.c.l.b16 %v1108
    %v1238 = vunpack.c.h.b16 %v1108
    %v1239 = vunpack.c.l.b16 %v1109
    %v1240 = vunpack.c.h.b16 %v1109
    %v1241 = vunpack.c.l.b16 %v1110
    %v1242 = vunpack.c.h.b16 %v1110
    %v1243 = vunpack.c.l.b16 %v1111
    %v1244 = vunpack.c.h.b16 %v1111
    %v1245 = vunpack.c.l.b16 %v1112
    %v1246 = vunpack.c.h.b16 %v1112
    %v1247 = vunpack.c.l.b16 %v1113
    %v1248 = vunpack.c.h.b16 %v1113
    %v1249 = vunpack.c.l.b16 %v1114
    %v1250 = vunpack.c.h.b16 %v1114
    %v1251 = vunpack.c.l.b16 %v1115
    %v1252 = vunpack.c.h.b16 %v1115
    %v1253 = vunpack.c.l.b16 %v1116
    %v1254 = vunpack.c.h.b16 %v1116
    %v1255 = vunpack.c.l.b16 %v1117
    %v1256 = vunpack.c.h.b16 %v1117
    %v1257 = vunpack.c.l.b16 %v1118
    %v1258 = vunpack.c.h.b16 %v1118
    %v1259 = vunpack.c.l.b16 %v1119
    %v1260 = vunpack.c.h.b16 %v1119
    %v1261 = vunpack.c.l.b16 %v1120
    %v1262 = vunpack.c.h.b16 %v1120
    %v1263 = vunpack.c.l.b16 %v1121
    %v1264 = vunpack.c.h.b16 %v1121
    %v1265 = vunpack.c.l.b16 %v1122
    %v1266 = vunpack.c.h.b16 %v1122
    %v1267 = vpack.c.b16 %v1173, %v1171
    %v1268 = vpack.c.b16 %v1174, %v1172
    %v1269 = vpack.c.b16 %v1177, %v1175
    %v1270 = vpack.c.b16 %v1178, %v1176
    %v1271 = vpack.c.b16 %v1181, %v1179
    %v1272 = vpack.c.b16 %v1182, %v1180
    %v1273 = vpack.c.b16 %v1185, %v1183
    %v1274 = vpack.c.b16 %v1186, %v1184
    %v1275 = vpack.c.b16 %v1189, %v1187
    %v1276 = vpack.c.b16 %v1190, %v1188
    %v1277 = vpack.c.b16 %v1193, %v1191
    %v1278 = vpack.c.b16 %v1194, %v1192
    %v1279 = vpack.c.b16 %v1197, %v1195
    %v1280 = vpack.c.b16 %v1198, %v1196
    %v1281 = vpack.c.b16 %v1201, %v1199
    %v1282 = vpack.c.b16 %v1202, %v1200
    %v1283 = vpack.c.b16 %v1205, %v1203
    %v1284 = vpack.c.b16 %v1206, %v1204
    %v1285 = vpack.c.b16 %v1209, %v1207
    %v1286 = vpack.c.b16 %v1210, %v1208
    %v1287 = vpack.c.b16 %v1213, %v1211
    %v1288 = vpack.c.b16 %v1214, %v1212
    %v1289 = vpack.c.b16 %v1217, %v1215
    %v1290 = vpack.c.b16 %v1218, %v1216
    %v1291 = vpack.c.b16 %v1221, %v1219
    %v1292 = vpack.c.b16 %v1222, %v1220
    %v1293 = vpack.c.b16 %v1225, %v1223
    %v1294 = vpack.c.b16 %v1226, %v1224
    %v1295 = vpack.c.b16 %v1229, %v1227
    %v1296 = vpack.c.b16 %v1230, %v1228
    %v1297 = vpack.c.b16 %v1233, %v1231
    %v1298 = vpack.c.b16 %v1234, %v1232
    %v1299 = vpack.c.b16 %v1237, %v1235
    %v1300 = vpack.c.b16 %v1238, %v1236
    %v1301 = vpack.c.b16 %v1241, %v1239
    %v1302 = vpack.c.b16 %v1242, %v1240
    %v1303 = vpack.c.b16 %v1245, %v1243
    %v1304 = vpack.c.b16 %v1246, %v1244
    %v1305 = vpack.c.b16 %v1249, %v1247
    %v1306 = vpack.c.b16 %v1250, %v1248
    %v1307 = vpack.c.b16 %v1253, %v1251
    %v1308 = vpack.c.b16 %v1254, %v1252
    %v1309 = vpack.c.b16 %v1257, %v1255
    %v1310 = vpack.c.b16 %v1258, %v1256
    %v1311 = vpack.c.b16 %v1261, %v1259
    %v1312 = vpack.c.b16 %v1262, %v1260
    %v1313 = vpack.c.b16 %v1265, %v1263
    %v1314 = vpack.c.b16 %v1266, %v1264
    %vm1339 = vcmask 130048
    %v1341 = vsel %vm1339, %v1268, 0
    %v1344 = vsel %vm1339, %v1270, 0
    %v1347 = vsel %vm1339, %v1272, 0
    %v1350 = vsel %vm1339, %v1274, 0
    %v1353 = vsel %vm1339, %v1276, 0
    %v1356 = vsel %vm1339, %v1278, 0
    %v1359 = vsel %vm1339, %v1280, 0
    %v1362 = vsel %vm1339, %v1282, 0
    %v1365 = vsel %vm1339, %v1284, 0
    %v1368 = vsel %vm1339, %v1286, 0
    %v1371 = vsel %vm1339, %v1288, 0
    %v1374 = vsel %vm1339, %v1290, 0
    %v1377 = vsel %vm1339, %v1292, 0
    %v1380 = vsel %vm1339, %v1294, 0
    %v1383 = vsel %vm1339, %v1296, 0
    %v1386 = vsel %vm1339, %v1298, 0
    %v1389 = vsel %vm1339, %v1300, 0
    %v1392 = vsel %vm1339, %v1302, 0
    %v1395 = vsel %vm1339, %v1304, 0
    %v1398 = vsel %vm1339, %v1306, 0
    %v1401 = vsel %vm1339, %v1308, 0
    %v1404 = vsel %vm1339, %v1310, 0
    %v1407 = vsel %vm1339, %v1312, 0
    %v1410 = vsel %vm1339, %v1314, 0
    %1412 = vmatprep.subr.bf16.mxu0 %v1058
    %1413 = vmatpush1.bf16.msra.mxu0 %v1057
    %1414 = vmatprep.subr.bf16.mxu0 %v1060
    %1415 = vmatpush1.bf16.msra.mxu0 %v1059
    %1416 = vmatprep.subr.bf16.mxu0 %v1062
    %1417 = vmatpush1.bf16.msra.mxu0 %v1061
    %1418 = vmatprep.subr.bf16.mxu0 %v1064
    %1419 = vmatpush1.bf16.msra.mxu0 %v1063
    %1420 = vmatprep.subr.bf16.mxu0 %v1066
    %1421 = vmatpush1.bf16.msra.mxu0 %v1065
    %1422 = vmatprep.subr.bf16.mxu0 %v1068
    %1423 = vmatpush1.bf16.msra.mxu0 %v1067
    %1424 = vmatprep.subr.bf16.mxu0 %v1070
    %1425 = vmatpush1.bf16.msra.mxu0 %v1069
    %1426 = vmatprep.subr.bf16.mxu0 %v1072
    %1427 = vmatpush1.bf16.msra.mxu0 %v1071
    %1428 = vmatprep.subr.bf16.mxu0 %v1074
    %1429 = vmatpush1.bf16.msra.mxu0 %v1073
    %1430 = vmatprep.subr.bf16.mxu0 0
    %1431 = vmatpush1.bf16.msra.mxu0 0
    %1432 = vmatprep.subr.bf16.mxu0 0
    %1433 = vmatpush1.bf16.msra.mxu0 0
    %1434 = vmatprep.subr.bf16.mxu0 0
    %1435 = vmatpush1.bf16.msra.mxu0 0
    %1436 = vmatprep.subr.bf16.mxu0 0
    %1437 = vmatpush1.bf16.msra.mxu0 0
    %1438 = vmatprep.subr.bf16.mxu0 0
    %1439 = vmatpush1.bf16.msra.mxu0 0
    %1440 = vmatprep.subr.bf16.mxu0 0
    %1441 = vmatpush1.bf16.msra.mxu0 0
    %1442 = vmatprep.subr.bf16.mxu0 0
    %1443 = vmatpush1.bf16.msra.mxu0 0
    %1444 = vmatprep.mubr.bf16.mxu0 %v1341
    %1445 = vmatmul.mubr.bf16.gmra.mrb[0].mxu0 %v1267
    %v1446 = vpop.f32.mrb[0].mxu0
    %v1447 = vadd.f32 0.0, %v1446
    %v1448 = vpop.f32.mrb[0].mxu0
    %v1449 = vadd.f32 0.0, %v1448
    %v1450 = vpop.f32.mrb[0].mxu0
    %v1451 = vadd.f32 0.0, %v1450
    %v1452 = vpop.f32.mrb[0].mxu0
    %v1453 = vadd.f32 0.0, %v1452
    %1454 = vmatprep.mubr.bf16.mxu0 %v1344
    %1455 = vmatmul.mubr.bf16.gmra.mrb[0].mxu0 %v1269
    %v1456 = vpop.f32.mrb[0].mxu0
    %v1457 = vadd.f32 0.0, %v1456
    %v1458 = vpop.f32.mrb[0].mxu0
    %v1459 = vadd.f32 0.0, %v1458
    %v1460 = vpop.f32.mrb[0].mxu0
    %v1461 = vadd.f32 0.0, %v1460
    %v1462 = vpop.f32.mrb[0].mxu0
    %v1463 = vadd.f32 0.0, %v1462
    %1464 = vmatprep.mubr.bf16.mxu0 %v1347
    %1465 = vmatmul.mubr.bf16.gmra.mrb[0].mxu0 %v1271
    %v1466 = vpop.f32.mrb[0].mxu0
    %v1467 = vadd.f32 0.0, %v1466
    %v1468 = vpop.f32.mrb[0].mxu0
    %v1469 = vadd.f32 0.0, %v1468
    %v1470 = vpop.f32.mrb[0].mxu0
    %v1471 = vadd.f32 0.0, %v1470
    %v1472 = vpop.f32.mrb[0].mxu0
    %v1473 = vadd.f32 0.0, %v1472
    %1474 = vmatprep.mubr.bf16.mxu0 %v1350
    %1475 = vmatmul.mubr.bf16.gmra.mrb[0].mxu0 %v1273
    %v1476 = vpop.f32.mrb[0].mxu0
    %v1477 = vadd.f32 0.0, %v1476
    %v1478 = vpop.f32.mrb[0].mxu0
    %v1479 = vadd.f32 0.0, %v1478
    %v1480 = vpop.f32.mrb[0].mxu0
    %v1481 = vadd.f32 0.0, %v1480
    %v1482 = vpop.f32.mrb[0].mxu0
    %v1483 = vadd.f32 0.0, %v1482
    %1484 = vmatprep.mubr.bf16.mxu0 %v1353
    %1485 = vmatmul.mubr.bf16.gmra.mrb[0].mxu0 %v1275
    %v1486 = vpop.f32.mrb[0].mxu0
    %v1487 = vadd.f32 0.0, %v1486
    %v1488 = vpop.f32.mrb[0].mxu0
    %v1489 = vadd.f32 0.0, %v1488
    %v1490 = vpop.f32.mrb[0].mxu0
    %v1491 = vadd.f32 0.0, %v1490
    %v1492 = vpop.f32.mrb[0].mxu0
    %v1493 = vadd.f32 0.0, %v1492
    %1494 = vmatprep.mubr.bf16.mxu0 %v1356
    %1495 = vmatmul.mubr.bf16.gmra.mrb[0].mxu0 %v1277
    %v1496 = vpop.f32.mrb[0].mxu0
    %v1497 = vadd.f32 0.0, %v1496
    %v1498 = vpop.f32.mrb[0].mxu0
    %v1499 = vadd.f32 0.0, %v1498
    %v1500 = vpop.f32.mrb[0].mxu0
    %v1501 = vadd.f32 0.0, %v1500
    %v1502 = vpop.f32.mrb[0].mxu0
    %v1503 = vadd.f32 0.0, %v1502
    %1504 = vmatprep.mubr.bf16.mxu0 %v1359
    %1505 = vmatmul.mubr.bf16.gmra.mrb[0].mxu0 %v1279
    %v1506 = vpop.f32.mrb[0].mxu0
    %v1507 = vadd.f32 0.0, %v1506
    %v1508 = vpop.f32.mrb[0].mxu0
    %v1509 = vadd.f32 0.0, %v1508
    %v1510 = vpop.f32.mrb[0].mxu0
    %v1511 = vadd.f32 0.0, %v1510
    %v1512 = vpop.f32.mrb[0].mxu0
    %v1513 = vadd.f32 0.0, %v1512
    %1514 = vmatprep.mubr.bf16.mxu0 %v1362
    %1515 = vmatmul.mubr.bf16.gmra.mrb[0].mxu0 %v1281
    %v1516 = vpop.f32.mrb[0].mxu0
    %v1517 = vadd.f32 0.0, %v1516
    %v1518 = vpop.f32.mrb[0].mxu0
    %v1519 = vadd.f32 0.0, %v1518
    %v1520 = vpop.f32.mrb[0].mxu0
    %v1521 = vadd.f32 0.0, %v1520
    %v1522 = vpop.f32.mrb[0].mxu0
    %v1523 = vadd.f32 0.0, %v1522
    %1524 = vmatprep.mubr.bf16.mxu0 %v1365
    %1525 = vmatmul.mubr.bf16.gmra.mrb[0].mxu0 %v1283
    %v1526 = vpop.f32.mrb[0].mxu0
    %v1527 = vadd.f32 0.0, %v1526
    %v1528 = vpop.f32.mrb[0].mxu0
    %v1529 = vadd.f32 0.0, %v1528
    %v1530 = vpop.f32.mrb[0].mxu0
    %v1531 = vadd.f32 0.0, %v1530
    %v1532 = vpop.f32.mrb[0].mxu0
    %v1533 = vadd.f32 0.0, %v1532
    %1534 = vmatprep.mubr.bf16.mxu0 %v1368
    %1535 = vmatmul.mubr.bf16.gmra.mrb[0].mxu0 %v1285
    %v1536 = vpop.f32.mrb[0].mxu0
    %v1537 = vadd.f32 0.0, %v1536
    %v1538 = vpop.f32.mrb[0].mxu0
    %v1539 = vadd.f32 0.0, %v1538
    %v1540 = vpop.f32.mrb[0].mxu0
    %v1541 = vadd.f32 0.0, %v1540
    %v1542 = vpop.f32.mrb[0].mxu0
    %v1543 = vadd.f32 0.0, %v1542
    %1544 = vmatprep.mubr.bf16.mxu0 %v1371
    %1545 = vmatmul.mubr.bf16.gmra.mrb[0].mxu0 %v1287
    %v1546 = vpop.f32.mrb[0].mxu0
    %v1547 = vadd.f32 0.0, %v1546
    %v1548 = vpop.f32.mrb[0].mxu0
    %v1549 = vadd.f32 0.0, %v1548
    %v1550 = vpop.f32.mrb[0].mxu0
    %v1551 = vadd.f32 0.0, %v1550
    %v1552 = vpop.f32.mrb[0].mxu0
    %v1553 = vadd.f32 0.0, %v1552
    %1554 = vmatprep.mubr.bf16.mxu0 %v1374
    %1555 = vmatmul.mubr.bf16.gmra.mrb[0].mxu0 %v1289
    %v1556 = vpop.f32.mrb[0].mxu0
    %v1557 = vadd.f32 0.0, %v1556
    %v1558 = vpop.f32.mrb[0].mxu0
    %v1559 = vadd.f32 0.0, %v1558
    %v1560 = vpop.f32.mrb[0].mxu0
    %v1561 = vadd.f32 0.0, %v1560
    %v1562 = vpop.f32.mrb[0].mxu0
    %v1563 = vadd.f32 0.0, %v1562
    %1564 = vmatprep.mubr.bf16.mxu0 %v1377
    %1565 = vmatmul.mubr.bf16.gmra.mrb[0].mxu0 %v1291
    %v1566 = vpop.f32.mrb[0].mxu0
    %v1567 = vadd.f32 0.0, %v1566
    %v1568 = vpop.f32.mrb[0].mxu0
    %v1569 = vadd.f32 0.0, %v1568
    %v1570 = vpop.f32.mrb[0].mxu0
    %v1571 = vadd.f32 0.0, %v1570
    %v1572 = vpop.f32.mrb[0].mxu0
    %v1573 = vadd.f32 0.0, %v1572
    %1574 = vmatprep.mubr.bf16.mxu0 %v1380
    %1575 = vmatmul.mubr.bf16.gmra.mrb[0].mxu0 %v1293
    %v1576 = vpop.f32.mrb[0].mxu0
    %v1577 = vadd.f32 0.0, %v1576
    %v1578 = vpop.f32.mrb[0].mxu0
    %v1579 = vadd.f32 0.0, %v1578
    %v1580 = vpop.f32.mrb[0].mxu0
    %v1581 = vadd.f32 0.0, %v1580
    %v1582 = vpop.f32.mrb[0].mxu0
    %v1583 = vadd.f32 0.0, %v1582
    %1584 = vmatprep.mubr.bf16.mxu0 %v1383
    %1585 = vmatmul.mubr.bf16.gmra.mrb[0].mxu0 %v1295
    %v1586 = vpop.f32.mrb[0].mxu0
    %v1587 = vadd.f32 0.0, %v1586
    %v1588 = vpop.f32.mrb[0].mxu0
    %v1589 = vadd.f32 0.0, %v1588
    %v1590 = vpop.f32.mrb[0].mxu0
    %v1591 = vadd.f32 0.0, %v1590
    %v1592 = vpop.f32.mrb[0].mxu0
    %v1593 = vadd.f32 0.0, %v1592
    %1594 = vmatprep.mubr.bf16.mxu0 %v1386
    %1595 = vmatmul.mubr.bf16.gmra.mrb[0].mxu0 %v1297
    %v1596 = vpop.f32.mrb[0].mxu0
    %v1597 = vadd.f32 0.0, %v1596
    %v1598 = vpop.f32.mrb[0].mxu0
    %v1599 = vadd.f32 0.0, %v1598
    %v1600 = vpop.f32.mrb[0].mxu0
    %v1601 = vadd.f32 0.0, %v1600
    %v1602 = vpop.f32.mrb[0].mxu0
    %v1603 = vadd.f32 0.0, %v1602
    %1604 = vmatprep.mubr.bf16.mxu0 %v1389
    %1605 = vmatmul.mubr.bf16.gmra.mrb[0].mxu0 %v1299
    %v1606 = vpop.f32.mrb[0].mxu0
    %v1607 = vadd.f32 0.0, %v1606
    %v1608 = vpop.f32.mrb[0].mxu0
    %v1609 = vadd.f32 0.0, %v1608
    %v1610 = vpop.f32.mrb[0].mxu0
    %v1611 = vadd.f32 0.0, %v1610
    %v1612 = vpop.f32.mrb[0].mxu0
    %v1613 = vadd.f32 0.0, %v1612
    %1614 = vmatprep.mubr.bf16.mxu0 %v1392
    %1615 = vmatmul.mubr.bf16.gmra.mrb[0].mxu0 %v1301
    %v1616 = vpop.f32.mrb[0].mxu0
    %v1617 = vadd.f32 0.0, %v1616
    %v1618 = vpop.f32.mrb[0].mxu0
    %v1619 = vadd.f32 0.0, %v1618
    %v1620 = vpop.f32.mrb[0].mxu0
    %v1621 = vadd.f32 0.0, %v1620
    %v1622 = vpop.f32.mrb[0].mxu0
    %v1623 = vadd.f32 0.0, %v1622
    %1624 = vmatprep.mubr.bf16.mxu0 %v1395
    %1625 = vmatmul.mubr.bf16.gmra.mrb[0].mxu0 %v1303
    %v1626 = vpop.f32.mrb[0].mxu0
    %v1627 = vadd.f32 0.0, %v1626
    %v1628 = vpop.f32.mrb[0].mxu0
    %v1629 = vadd.f32 0.0, %v1628
    %v1630 = vpop.f32.mrb[0].mxu0
    %v1631 = vadd.f32 0.0, %v1630
    %v1632 = vpop.f32.mrb[0].mxu0
    %v1633 = vadd.f32 0.0, %v1632
    %1634 = vmatprep.mubr.bf16.mxu0 %v1398
    %1635 = vmatmul.mubr.bf16.gmra.mrb[0].mxu0 %v1305
    %v1636 = vpop.f32.mrb[0].mxu0
    %v1637 = vadd.f32 0.0, %v1636
    %v1638 = vpop.f32.mrb[0].mxu0
    %v1639 = vadd.f32 0.0, %v1638
    %v1640 = vpop.f32.mrb[0].mxu0
    %v1641 = vadd.f32 0.0, %v1640
    %v1642 = vpop.f32.mrb[0].mxu0
    %v1643 = vadd.f32 0.0, %v1642
    %1644 = vmatprep.mubr.bf16.mxu0 %v1401
    %1645 = vmatmul.mubr.bf16.gmra.mrb[0].mxu0 %v1307
    %v1646 = vpop.f32.mrb[0].mxu0
    %v1647 = vadd.f32 0.0, %v1646
    %v1648 = vpop.f32.mrb[0].mxu0
    %v1649 = vadd.f32 0.0, %v1648
    %v1650 = vpop.f32.mrb[0].mxu0
    %v1651 = vadd.f32 0.0, %v1650
    %v1652 = vpop.f32.mrb[0].mxu0
    %v1653 = vadd.f32 0.0, %v1652
    %1654 = vmatprep.mubr.bf16.mxu0 %v1404
    %1655 = vmatmul.mubr.bf16.gmra.mrb[0].mxu0 %v1309
    %v1656 = vpop.f32.mrb[0].mxu0
    %v1657 = vadd.f32 0.0, %v1656
    %v1658 = vpop.f32.mrb[0].mxu0
    %v1659 = vadd.f32 0.0, %v1658
    %v1660 = vpop.f32.mrb[0].mxu0
    %v1661 = vadd.f32 0.0, %v1660
    %v1662 = vpop.f32.mrb[0].mxu0
    %v1663 = vadd.f32 0.0, %v1662
    %1664 = vmatprep.mubr.bf16.mxu0 %v1407
    %1665 = vmatmul.mubr.bf16.gmra.mrb[0].mxu0 %v1311
    %v1666 = vpop.f32.mrb[0].mxu0
    %v1667 = vadd.f32 0.0, %v1666
    %v1668 = vpop.f32.mrb[0].mxu0
    %v1669 = vadd.f32 0.0, %v1668
    %v1670 = vpop.f32.mrb[0].mxu0
    %v1671 = vadd.f32 0.0, %v1670
    %v1672 = vpop.f32.mrb[0].mxu0
    %v1673 = vadd.f32 0.0, %v1672
    %1674 = vmatprep.mubr.bf16.mxu0 %v1410
    %1675 = vmatmul.mubr.bf16.gmra.mrb[0].mxu0 %v1313
    %v1676 = vpop.f32.mrb[0].mxu0
    %v1677 = vadd.f32 0.0, %v1676
    %v1678 = vpop.f32.mrb[0].mxu0
    %v1679 = vadd.f32 0.0, %v1678
    %v1680 = vpop.f32.mrb[0].mxu0
    %v1681 = vadd.f32 0.0, %v1680
    %v1682 = vpop.f32.mrb[0].mxu0
    %v1683 = vadd.f32 0.0, %v1682
    %1684 = vdwg.mxu0
    %v1733 = vunpack.c.l.b16 %v54
    %v1734 = vunpack.c.l.b16 %v55
    %v1735 = vunpack.c.l.b16 %v56
    %v1736 = vunpack.c.l.b16 %v57
    %v1737 = vunpack.c.l.b16 %v58
    %v1738 = vunpack.c.l.b16 %v59
    %v1739 = vunpack.c.l.b16 %v60
    %v1740 = vunpack.c.l.b16 %v61
    %v1741 = vunpack.c.l.b16 %v62
    %v1742 = vunpack.c.l.b16 %v63
    %v1743 = vunpack.c.l.b16 %v64
    %v1744 = vunpack.c.l.b16 %v65
    %v1745 = vunpack.c.l.b16 %v66
    %v1746 = vunpack.c.l.b16 %v67
    %v1747 = vunpack.c.l.b16 %v68
    %v1748 = vunpack.c.l.b16 %v69
    %v1749 = vunpack.c.l.b16 %v70
    %v1750 = vunpack.c.l.b16 %v71
    %v1751 = vunpack.c.l.b16 %v72
    %v1752 = vunpack.c.l.b16 %v73
    %v1753 = vunpack.c.l.b16 %v74
    %v1754 = vunpack.c.l.b16 %v75
    %v1755 = vunpack.c.l.b16 %v76
    %v1756 = vunpack.c.l.b16 %v77
    %v1757 = vunpack.c.l.b16 %v78
    %v1758 = vunpack.c.l.b16 %v79
    %v1759 = vunpack.c.l.b16 %v80
    %v1760 = vunpack.c.l.b16 %v81
    %v1761 = vunpack.c.l.b16 %v82
    %v1762 = vunpack.c.l.b16 %v83
    %v1763 = vunpack.c.l.b16 %v84
    %v1764 = vunpack.c.l.b16 %v85
    %v1765 = vunpack.c.l.b16 %v86
    %v1766 = vunpack.c.l.b16 %v87
    %v1767 = vunpack.c.l.b16 %v88
    %v1768 = vunpack.c.l.b16 %v89
    %v1769 = vunpack.c.l.b16 %v90
    %v1770 = vunpack.c.l.b16 %v91
    %v1771 = vunpack.c.l.b16 %v92
    %v1772 = vunpack.c.l.b16 %v93
    %v1773 = vunpack.c.l.b16 %v94
    %v1774 = vunpack.c.l.b16 %v95
    %v1775 = vunpack.c.l.b16 %v96
    %v1776 = vunpack.c.l.b16 %v97
    %v1777 = vunpack.c.l.b16 %v98
    %v1778 = vunpack.c.l.b16 %v99
    %v1779 = vunpack.c.l.b16 %v100
    %v1780 = vunpack.c.l.b16 %v101
    %v1781 = vpack.c.b16 %v1734, %v1733
    %v1782 = vpack.c.b16 %v1736, %v1735
    %v1783 = vpack.c.b16 %v1738, %v1737
    %v1784 = vpack.c.b16 %v1740, %v1739
    %v1785 = vpack.c.b16 %v1742, %v1741
    %v1786 = vpack.c.b16 %v1744, %v1743
    %v1787 = vpack.c.b16 %v1746, %v1745
    %v1788 = vpack.c.b16 %v1748, %v1747
    %v1789 = vpack.c.b16 %v1750, %v1749
    %v1790 = vpack.c.b16 %v1752, %v1751
    %v1791 = vpack.c.b16 %v1754, %v1753
    %v1792 = vpack.c.b16 %v1756, %v1755
    %v1793 = vpack.c.b16 %v1758, %v1757
    %v1794 = vpack.c.b16 %v1760, %v1759
    %v1795 = vpack.c.b16 %v1762, %v1761
    %v1796 = vpack.c.b16 %v1764, %v1763
    %v1797 = vpack.c.b16 %v1766, %v1765
    %v1798 = vpack.c.b16 %v1768, %v1767
    %v1799 = vpack.c.b16 %v1770, %v1769
    %v1800 = vpack.c.b16 %v1772, %v1771
    %v1801 = vpack.c.b16 %v1774, %v1773
    %v1802 = vpack.c.b16 %v1776, %v1775
    %v1803 = vpack.c.b16 %v1778, %v1777
    %v1804 = vpack.c.b16 %v1780, %v1779
    %v1845 = vunpack.c.l.b16 %v102
    %v1846 = vunpack.c.h.b16 %v102
    %v1847 = vunpack.c.l.b16 %v103
    %v1848 = vunpack.c.h.b16 %v103
    %v1849 = vunpack.c.l.b16 %v104
    %v1850 = vunpack.c.h.b16 %v104
    %v1851 = vunpack.c.l.b16 %v105
    %v1852 = vunpack.c.h.b16 %v105
    %v1853 = vunpack.c.l.b16 %v106
    %v1854 = vunpack.c.h.b16 %v106
    %v1855 = vunpack.c.l.b16 %v107
    %v1856 = vunpack.c.h.b16 %v107
    %v1857 = vunpack.c.l.b16 %v108
    %v1858 = vunpack.c.h.b16 %v108
    %v1859 = vunpack.c.l.b16 %v109
    %v1860 = vunpack.c.h.b16 %v109
    %v1861 = vunpack.c.l.b16 %v110
    %v1862 = vunpack.c.h.b16 %v110
    %v1863 = vunpack.c.l.b16 %v111
    %v1864 = vunpack.c.h.b16 %v111
    %v1865 = vunpack.c.l.b16 %v112
    %v1866 = vunpack.c.h.b16 %v112
    %v1867 = vunpack.c.l.b16 %v113
    %v1868 = vunpack.c.h.b16 %v113
    %v1869 = vunpack.c.l.b16 %v114
    %v1870 = vunpack.c.h.b16 %v114
    %v1871 = vunpack.c.l.b16 %v115
    %v1872 = vunpack.c.h.b16 %v115
    %v1873 = vunpack.c.l.b16 %v116
    %v1874 = vunpack.c.h.b16 %v116
    %v1875 = vunpack.c.l.b16 %v117
    %v1876 = vunpack.c.h.b16 %v117
    %v1877 = vpack.c.b16 %v1847, %v1845
    %v1878 = vpack.c.b16 %v1848, %v1846
    %v1879 = vpack.c.b16 %v1851, %v1849
    %v1880 = vpack.c.b16 %v1852, %v1850
    %v1881 = vpack.c.b16 %v1855, %v1853
    %v1882 = vpack.c.b16 %v1856, %v1854
    %v1883 = vpack.c.b16 %v1859, %v1857
    %v1884 = vpack.c.b16 %v1860, %v1858
    %v1885 = vpack.c.b16 %v1863, %v1861
    %v1886 = vpack.c.b16 %v1864, %v1862
    %v1887 = vpack.c.b16 %v1867, %v1865
    %v1888 = vpack.c.b16 %v1868, %v1866
    %v1889 = vpack.c.b16 %v1871, %v1869
    %v1890 = vpack.c.b16 %v1872, %v1870
    %v1891 = vpack.c.b16 %v1875, %v1873
    %v1892 = vpack.c.b16 %v1876, %v1874
    %1909 = vmatprep.subr.bf16.mxu0 %v1878
    %1910 = vmatpush1.bf16.msra.mxu0 %v1877
    %1911 = vmatprep.subr.bf16.mxu0 %v1880
    %1912 = vmatpush1.bf16.msra.mxu0 %v1879
    %1913 = vmatprep.subr.bf16.mxu0 %v1882
    %1914 = vmatpush1.bf16.msra.mxu0 %v1881
    %1915 = vmatprep.subr.bf16.mxu0 %v1884
    %1916 = vmatpush1.bf16.msra.mxu0 %v1883
    %1917 = vmatprep.subr.bf16.mxu0 %v1886
    %1918 = vmatpush1.bf16.msra.mxu0 %v1885
    %1919 = vmatprep.subr.bf16.mxu0 %v1888
    %1920 = vmatpush1.bf16.msra.mxu0 %v1887
    %1921 = vmatprep.subr.bf16.mxu0 %v1890
    %1922 = vmatpush1.bf16.msra.mxu0 %v1889
    %1923 = vmatprep.subr.bf16.mxu0 %v1892
    %1924 = vmatpush1.bf16.msra.mxu0 %v1891
    %1925 = vmatprep.subr.bf16.mxu0 0
    %1926 = vmatpush1.bf16.msra.mxu0 0
    %1927 = vmatprep.subr.bf16.mxu0 0
    %1928 = vmatpush1.bf16.msra.mxu0 0
    %1929 = vmatprep.subr.bf16.mxu0 0
    %1930 = vmatpush1.bf16.msra.mxu0 0
    %1931 = vmatprep.subr.bf16.mxu0 0
    %1932 = vmatpush1.bf16.msra.mxu0 0
    %1933 = vmatprep.subr.bf16.mxu0 0
    %1934 = vmatpush1.bf16.msra.mxu0 0
    %1935 = vmatprep.subr.bf16.mxu0 0
    %1936 = vmatpush1.bf16.msra.mxu0 0
    %1937 = vmatprep.subr.bf16.mxu0 0
    %1938 = vmatpush1.bf16.msra.mxu0 0
    %1939 = vmatprep.subr.bf16.mxu0 0
    %1940 = vmatpush1.bf16.msra.mxu0 0
    %1941 = vmatprep.mubr.bf16.mxu0 0
    %1942 = vmatmul.mubr.bf16.gmra.mrb[0].mxu0 %v1781
    %v1943 = vpop.f32.mrb[0].mxu0
    %v1944 = vadd.f32 %v1447, %v1943
    %v1945 = vpop.f32.mrb[0].mxu0
    %v1946 = vadd.f32 %v1449, %v1945
    %v1947 = vpop.f32.mrb[0].mxu0
    %v1948 = vadd.f32 %v1451, %v1947
    %v1949 = vpop.f32.mrb[0].mxu0
    %v1950 = vadd.f32 %v1453, %v1949
    %1951 = vmatprep.mubr.bf16.mxu0 0
    %1952 = vmatmul.mubr.bf16.gmra.mrb[0].mxu0 %v1782
    %v1953 = vpop.f32.mrb[0].mxu0
    %v1954 = vadd.f32 %v1457, %v1953
    %v1955 = vpop.f32.mrb[0].mxu0
    %v1956 = vadd.f32 %v1459, %v1955
    %v1957 = vpop.f32.mrb[0].mxu0
    %v1958 = vadd.f32 %v1461, %v1957
    %v1959 = vpop.f32.mrb[0].mxu0
    %v1960 = vadd.f32 %v1463, %v1959
    %1961 = vmatprep.mubr.bf16.mxu0 0
    %1962 = vmatmul.mubr.bf16.gmra.mrb[0].mxu0 %v1783
    %v1963 = vpop.f32.mrb[0].mxu0
    %v1964 = vadd.f32 %v1467, %v1963
    %v1965 = vpop.f32.mrb[0].mxu0
    %v1966 = vadd.f32 %v1469, %v1965
    %v1967 = vpop.f32.mrb[0].mxu0
    %v1968 = vadd.f32 %v1471, %v1967
    %v1969 = vpop.f32.mrb[0].mxu0
    %v1970 = vadd.f32 %v1473, %v1969
    %1971 = vmatprep.mubr.bf16.mxu0 0
    %1972 = vmatmul.mubr.bf16.gmra.mrb[0].mxu0 %v1784
    %v1973 = vpop.f32.mrb[0].mxu0
    %v1974 = vadd.f32 %v1477, %v1973
    %v1975 = vpop.f32.mrb[0].mxu0
    %v1976 = vadd.f32 %v1479, %v1975
    %v1977 = vpop.f32.mrb[0].mxu0
    %v1978 = vadd.f32 %v1481, %v1977
    %v1979 = vpop.f32.mrb[0].mxu0
    %v1980 = vadd.f32 %v1483, %v1979
    %1981 = vmatprep.mubr.bf16.mxu0 0
    %1982 = vmatmul.mubr.bf16.gmra.mrb[0].mxu0 %v1785
    %v1983 = vpop.f32.mrb[0].mxu0
    %v1984 = vadd.f32 %v1487, %v1983
    %v1985 = vpop.f32.mrb[0].mxu0
    %v1986 = vadd.f32 %v1489, %v1985
    %v1987 = vpop.f32.mrb[0].mxu0
    %v1988 = vadd.f32 %v1491, %v1987
    %v1989 = vpop.f32.mrb[0].mxu0
    %v1990 = vadd.f32 %v1493, %v1989
    %1991 = vmatprep.mubr.bf16.mxu0 0
    %1992 = vmatmul.mubr.bf16.gmra.mrb[0].mxu0 %v1786
    %v1993 = vpop.f32.mrb[0].mxu0
    %v1994 = vadd.f32 %v1497, %v1993
    %v1995 = vpop.f32.mrb[0].mxu0
    %v1996 = vadd.f32 %v1499, %v1995
    %v1997 = vpop.f32.mrb[0].mxu0
    %v1998 = vadd.f32 %v1501, %v1997
    %v1999 = vpop.f32.mrb[0].mxu0
    %v2000 = vadd.f32 %v1503, %v1999
    %2001 = vmatprep.mubr.bf16.mxu0 0
    %2002 = vmatmul.mubr.bf16.gmra.mrb[0].mxu0 %v1787
    %v2003 = vpop.f32.mrb[0].mxu0
    %v2004 = vadd.f32 %v1507, %v2003
    %v2005 = vpop.f32.mrb[0].mxu0
    %v2006 = vadd.f32 %v1509, %v2005
    %v2007 = vpop.f32.mrb[0].mxu0
    %v2008 = vadd.f32 %v1511, %v2007
    %v2009 = vpop.f32.mrb[0].mxu0
    %v2010 = vadd.f32 %v1513, %v2009
    %2011 = vmatprep.mubr.bf16.mxu0 0
    %2012 = vmatmul.mubr.bf16.gmra.mrb[0].mxu0 %v1788
    %v2013 = vpop.f32.mrb[0].mxu0
    %v2014 = vadd.f32 %v1517, %v2013
    %v2015 = vpop.f32.mrb[0].mxu0
    %v2016 = vadd.f32 %v1519, %v2015
    %v2017 = vpop.f32.mrb[0].mxu0
    %v2018 = vadd.f32 %v1521, %v2017
    %v2019 = vpop.f32.mrb[0].mxu0
    %v2020 = vadd.f32 %v1523, %v2019
    %2021 = vmatprep.mubr.bf16.mxu0 0
    %2022 = vmatmul.mubr.bf16.gmra.mrb[0].mxu0 %v1789
    %v2023 = vpop.f32.mrb[0].mxu0
    %v2024 = vadd.f32 %v1527, %v2023
    %v2025 = vpop.f32.mrb[0].mxu0
    %v2026 = vadd.f32 %v1529, %v2025
    %v2027 = vpop.f32.mrb[0].mxu0
    %v2028 = vadd.f32 %v1531, %v2027
    %v2029 = vpop.f32.mrb[0].mxu0
    %v2030 = vadd.f32 %v1533, %v2029
    %2031 = vmatprep.mubr.bf16.mxu0 0
    %2032 = vmatmul.mubr.bf16.gmra.mrb[0].mxu0 %v1790
    %v2033 = vpop.f32.mrb[0].mxu0
    %v2034 = vadd.f32 %v1537, %v2033
    %v2035 = vpop.f32.mrb[0].mxu0
    %v2036 = vadd.f32 %v1539, %v2035
    %v2037 = vpop.f32.mrb[0].mxu0
    %v2038 = vadd.f32 %v1541, %v2037
    %v2039 = vpop.f32.mrb[0].mxu0
    %v2040 = vadd.f32 %v1543, %v2039
    %2041 = vmatprep.mubr.bf16.mxu0 0
    %2042 = vmatmul.mubr.bf16.gmra.mrb[0].mxu0 %v1791
    %v2043 = vpop.f32.mrb[0].mxu0
    %v2044 = vadd.f32 %v1547, %v2043
    %v2045 = vpop.f32.mrb[0].mxu0
    %v2046 = vadd.f32 %v1549, %v2045
    %v2047 = vpop.f32.mrb[0].mxu0
    %v2048 = vadd.f32 %v1551, %v2047
    %v2049 = vpop.f32.mrb[0].mxu0
    %v2050 = vadd.f32 %v1553, %v2049
    %2051 = vmatprep.mubr.bf16.mxu0 0
    %2052 = vmatmul.mubr.bf16.gmra.mrb[0].mxu0 %v1792
    %v2053 = vpop.f32.mrb[0].mxu0
    %v2054 = vadd.f32 %v1557, %v2053
    %v2055 = vpop.f32.mrb[0].mxu0
    %v2056 = vadd.f32 %v1559, %v2055
    %v2057 = vpop.f32.mrb[0].mxu0
    %v2058 = vadd.f32 %v1561, %v2057
    %v2059 = vpop.f32.mrb[0].mxu0
    %v2060 = vadd.f32 %v1563, %v2059
    %2061 = vmatprep.mubr.bf16.mxu0 0
    %2062 = vmatmul.mubr.bf16.gmra.mrb[0].mxu0 %v1793
    %v2063 = vpop.f32.mrb[0].mxu0
    %v2064 = vadd.f32 %v1567, %v2063
    %v2065 = vpop.f32.mrb[0].mxu0
    %v2066 = vadd.f32 %v1569, %v2065
    %v2067 = vpop.f32.mrb[0].mxu0
    %v2068 = vadd.f32 %v1571, %v2067
    %v2069 = vpop.f32.mrb[0].mxu0
    %v2070 = vadd.f32 %v1573, %v2069
    %2071 = vmatprep.mubr.bf16.mxu0 0
    %2072 = vmatmul.mubr.bf16.gmra.mrb[0].mxu0 %v1794
    %v2073 = vpop.f32.mrb[0].mxu0
    %v2074 = vadd.f32 %v1577, %v2073
    %v2075 = vpop.f32.mrb[0].mxu0
    %v2076 = vadd.f32 %v1579, %v2075
    %v2077 = vpop.f32.mrb[0].mxu0
    %v2078 = vadd.f32 %v1581, %v2077
    %v2079 = vpop.f32.mrb[0].mxu0
    %v2080 = vadd.f32 %v1583, %v2079
    %2081 = vmatprep.mubr.bf16.mxu0 0
    %2082 = vmatmul.mubr.bf16.gmra.mrb[0].mxu0 %v1795
    %v2083 = vpop.f32.mrb[0].mxu0
    %v2084 = vadd.f32 %v1587, %v2083
    %v2085 = vpop.f32.mrb[0].mxu0
    %v2086 = vadd.f32 %v1589, %v2085
    %v2087 = vpop.f32.mrb[0].mxu0
    %v2088 = vadd.f32 %v1591, %v2087
    %v2089 = vpop.f32.mrb[0].mxu0
    %v2090 = vadd.f32 %v1593, %v2089
    %2091 = vmatprep.mubr.bf16.mxu0 0
    %2092 = vmatmul.mubr.bf16.gmra.mrb[0].mxu0 %v1796
    %v2093 = vpop.f32.mrb[0].mxu0
    %v2094 = vadd.f32 %v1597, %v2093
    %v2095 = vpop.f32.mrb[0].mxu0
    %v2096 = vadd.f32 %v1599, %v2095
    %v2097 = vpop.f32.mrb[0].mxu0
    %v2098 = vadd.f32 %v1601, %v2097
    %v2099 = vpop.f32.mrb[0].mxu0
    %v2100 = vadd.f32 %v1603, %v2099
    %2101 = vmatprep.mubr.bf16.mxu0 0
    %2102 = vmatmul.mubr.bf16.gmra.mrb[0].mxu0 %v1797
    %v2103 = vpop.f32.mrb[0].mxu0
    %v2104 = vadd.f32 %v1607, %v2103
    %v2105 = vpop.f32.mrb[0].mxu0
    %v2106 = vadd.f32 %v1609, %v2105
    %v2107 = vpop.f32.mrb[0].mxu0
    %v2108 = vadd.f32 %v1611, %v2107
    %v2109 = vpop.f32.mrb[0].mxu0
    %v2110 = vadd.f32 %v1613, %v2109
    %2111 = vmatprep.mubr.bf16.mxu0 0
    %2112 = vmatmul.mubr.bf16.gmra.mrb[0].mxu0 %v1798
    %v2113 = vpop.f32.mrb[0].mxu0
    %v2114 = vadd.f32 %v1617, %v2113
    %v2115 = vpop.f32.mrb[0].mxu0
    %v2116 = vadd.f32 %v1619, %v2115
    %v2117 = vpop.f32.mrb[0].mxu0
    %v2118 = vadd.f32 %v1621, %v2117
    %v2119 = vpop.f32.mrb[0].mxu0
    %v2120 = vadd.f32 %v1623, %v2119
    %2121 = vmatprep.mubr.bf16.mxu0 0
    %2122 = vmatmul.mubr.bf16.gmra.mrb[0].mxu0 %v1799
    %v2123 = vpop.f32.mrb[0].mxu0
    %v2124 = vadd.f32 %v1627, %v2123
    %v2125 = vpop.f32.mrb[0].mxu0
    %v2126 = vadd.f32 %v1629, %v2125
    %v2127 = vpop.f32.mrb[0].mxu0
    %v2128 = vadd.f32 %v1631, %v2127
    %v2129 = vpop.f32.mrb[0].mxu0
    %v2130 = vadd.f32 %v1633, %v2129
    %2131 = vmatprep.mubr.bf16.mxu0 0
    %2132 = vmatmul.mubr.bf16.gmra.mrb[0].mxu0 %v1800
    %v2133 = vpop.f32.mrb[0].mxu0
    %v2134 = vadd.f32 %v1637, %v2133
    %v2135 = vpop.f32.mrb[0].mxu0
    %v2136 = vadd.f32 %v1639, %v2135
    %v2137 = vpop.f32.mrb[0].mxu0
    %v2138 = vadd.f32 %v1641, %v2137
    %v2139 = vpop.f32.mrb[0].mxu0
    %v2140 = vadd.f32 %v1643, %v2139
    %2141 = vmatprep.mubr.bf16.mxu0 0
    %2142 = vmatmul.mubr.bf16.gmra.mrb[0].mxu0 %v1801
    %v2143 = vpop.f32.mrb[0].mxu0
    %v2144 = vadd.f32 %v1647, %v2143
    %v2145 = vpop.f32.mrb[0].mxu0
    %v2146 = vadd.f32 %v1649, %v2145
    %v2147 = vpop.f32.mrb[0].mxu0
    %v2148 = vadd.f32 %v1651, %v2147
    %v2149 = vpop.f32.mrb[0].mxu0
    %v2150 = vadd.f32 %v1653, %v2149
    %2151 = vmatprep.mubr.bf16.mxu0 0
    %2152 = vmatmul.mubr.bf16.gmra.mrb[0].mxu0 %v1802
    %v2153 = vpop.f32.mrb[0].mxu0
    %v2154 = vadd.f32 %v1657, %v2153
    %v2155 = vpop.f32.mrb[0].mxu0
    %v2156 = vadd.f32 %v1659, %v2155
    %v2157 = vpop.f32.mrb[0].mxu0
    %v2158 = vadd.f32 %v1661, %v2157
    %v2159 = vpop.f32.mrb[0].mxu0
    %v2160 = vadd.f32 %v1663, %v2159
    %2161 = vmatprep.mubr.bf16.mxu0 0
    %2162 = vmatmul.mubr.bf16.gmra.mrb[0].mxu0 %v1803
    %v2163 = vpop.f32.mrb[0].mxu0
    %v2164 = vadd.f32 %v1667, %v2163
    %v2165 = vpop.f32.mrb[0].mxu0
    %v2166 = vadd.f32 %v1669, %v2165
    %v2167 = vpop.f32.mrb[0].mxu0
    %v2168 = vadd.f32 %v1671, %v2167
    %v2169 = vpop.f32.mrb[0].mxu0
    %v2170 = vadd.f32 %v1673, %v2169
    %2171 = vmatprep.mubr.bf16.mxu0 0
    %2172 = vmatmul.mubr.bf16.gmra.mrb[0].mxu0 %v1804
    %v2173 = vpop.f32.mrb[0].mxu0
    %v2174 = vadd.f32 %v1677, %v2173
    %v2175 = vpop.f32.mrb[0].mxu0
    %v2176 = vadd.f32 %v1679, %v2175
    %v2177 = vpop.f32.mrb[0].mxu0
    %v2178 = vadd.f32 %v1681, %v2177
    %v2179 = vpop.f32.mrb[0].mxu0
    %v2180 = vadd.f32 %v1683, %v2179
    %2181 = vdwg.mxu0
    %v2182 = vld [vmem:[%s7] sm:$0x3]
    %v2184 = vlaneseq
    %v2185 = vshrl.u32 %v2184, 7
    %v2186 = vsub.s32 0, %v2185
    %v2187 = vrot.slane %v2182, %v2186
    %v2188 = vlaneseq
    %v2189 = vshrl.u32 %v2188, 7
    %v2190 = vsub.s32 1, %v2189
    %v2191 = vrot.slane %v2182, %v2190
    %v2194 = vadd.f32 %v1944, %v2187
    %v2195 = vadd.f32 %v1946, %v2191
    %v2196 = vadd.f32 %v1948, %v2187
    %v2197 = vadd.f32 %v1950, %v2191
    %v2198 = vadd.f32 %v1954, %v2187
    %v2199 = vadd.f32 %v1956, %v2191
    %v2200 = vadd.f32 %v1958, %v2187
    %v2201 = vadd.f32 %v1960, %v2191
    %v2202 = vadd.f32 %v1964, %v2187
    %v2203 = vadd.f32 %v1966, %v2191
    %v2204 = vadd.f32 %v1968, %v2187
    %v2205 = vadd.f32 %v1970, %v2191
    %v2206 = vadd.f32 %v1974, %v2187
    %v2207 = vadd.f32 %v1976, %v2191
    %v2208 = vadd.f32 %v1978, %v2187
    %v2209 = vadd.f32 %v1980, %v2191
    %v2210 = vadd.f32 %v1984, %v2187
    %v2211 = vadd.f32 %v1986, %v2191
    %v2212 = vadd.f32 %v1988, %v2187
    %v2213 = vadd.f32 %v1990, %v2191
    %v2214 = vadd.f32 %v1994, %v2187
    %v2215 = vadd.f32 %v1996, %v2191
    %v2216 = vadd.f32 %v1998, %v2187
    %v2217 = vadd.f32 %v2000, %v2191
    %v2218 = vadd.f32 %v2004, %v2187
    %v2219 = vadd.f32 %v2006, %v2191
    %v2220 = vadd.f32 %v2008, %v2187
    %v2221 = vadd.f32 %v2010, %v2191
    %v2222 = vadd.f32 %v2014, %v2187
    %v2223 = vadd.f32 %v2016, %v2191
    %v2224 = vadd.f32 %v2018, %v2187
    %v2225 = vadd.f32 %v2020, %v2191
    %v2226 = vadd.f32 %v2024, %v2187
    %v2227 = vadd.f32 %v2026, %v2191
    %v2228 = vadd.f32 %v2028, %v2187
    %v2229 = vadd.f32 %v2030, %v2191
    %v2230 = vadd.f32 %v2034, %v2187
    %v2231 = vadd.f32 %v2036, %v2191
    %v2232 = vadd.f32 %v2038, %v2187
    %v2233 = vadd.f32 %v2040, %v2191
    %v2234 = vadd.f32 %v2044, %v2187
    %v2235 = vadd.f32 %v2046, %v2191
    %v2236 = vadd.f32 %v2048, %v2187
    %v2237 = vadd.f32 %v2050, %v2191
    %v2238 = vadd.f32 %v2054, %v2187
    %v2239 = vadd.f32 %v2056, %v2191
    %v2240 = vadd.f32 %v2058, %v2187
    %v2241 = vadd.f32 %v2060, %v2191
    %v2242 = vadd.f32 %v2064, %v2187
    %v2243 = vadd.f32 %v2066, %v2191
    %v2244 = vadd.f32 %v2068, %v2187
    %v2245 = vadd.f32 %v2070, %v2191
    %v2246 = vadd.f32 %v2074, %v2187
    %v2247 = vadd.f32 %v2076, %v2191
    %v2248 = vadd.f32 %v2078, %v2187
    %v2249 = vadd.f32 %v2080, %v2191
    %v2250 = vadd.f32 %v2084, %v2187
    %v2251 = vadd.f32 %v2086, %v2191
    %v2252 = vadd.f32 %v2088, %v2187
    %v2253 = vadd.f32 %v2090, %v2191
    %v2254 = vadd.f32 %v2094, %v2187
    %v2255 = vadd.f32 %v2096, %v2191
    %v2256 = vadd.f32 %v2098, %v2187
    %v2257 = vadd.f32 %v2100, %v2191
    %v2258 = vadd.f32 %v2104, %v2187
    %v2259 = vadd.f32 %v2106, %v2191
    %v2260 = vadd.f32 %v2108, %v2187
    %v2261 = vadd.f32 %v2110, %v2191
    %v2262 = vadd.f32 %v2114, %v2187
    %v2263 = vadd.f32 %v2116, %v2191
    %v2264 = vadd.f32 %v2118, %v2187
    %v2265 = vadd.f32 %v2120, %v2191
    %v2266 = vadd.f32 %v2124, %v2187
    %v2267 = vadd.f32 %v2126, %v2191
    %v2268 = vadd.f32 %v2128, %v2187
    %v2269 = vadd.f32 %v2130, %v2191
    %v2270 = vadd.f32 %v2134, %v2187
    %v2271 = vadd.f32 %v2136, %v2191
    %v2272 = vadd.f32 %v2138, %v2187
    %v2273 = vadd.f32 %v2140, %v2191
    %v2274 = vadd.f32 %v2144, %v2187
    %v2275 = vadd.f32 %v2146, %v2191
    %v2276 = vadd.f32 %v2148, %v2187
    %v2277 = vadd.f32 %v2150, %v2191
    %v2278 = vadd.f32 %v2154, %v2187
    %v2279 = vadd.f32 %v2156, %v2191
    %v2280 = vadd.f32 %v2158, %v2187
    %v2281 = vadd.f32 %v2160, %v2191
    %v2282 = vadd.f32 %v2164, %v2187
    %v2283 = vadd.f32 %v2166, %v2191
    %v2284 = vadd.f32 %v2168, %v2187
    %v2285 = vadd.f32 %v2170, %v2191
    %v2286 = vadd.f32 %v2174, %v2187
    %v2287 = vadd.f32 %v2176, %v2191
    %v2288 = vadd.f32 %v2178, %v2187
    %v2289 = vadd.f32 %v2180, %v2191
    %v2290 = vmax.f32 %v2194, 0.0
    %v2291 = vmax.f32 %v2195, 0.0
    %v2292 = vmax.f32 %v2196, 0.0
    %v2293 = vmax.f32 %v2197, 0.0
    %v2294 = vmax.f32 %v2198, 0.0
    %v2295 = vmax.f32 %v2199, 0.0
    %v2296 = vmax.f32 %v2200, 0.0
    %v2297 = vmax.f32 %v2201, 0.0
    %v2298 = vmax.f32 %v2202, 0.0
    %v2299 = vmax.f32 %v2203, 0.0
    %v2300 = vmax.f32 %v2204, 0.0
    %v2301 = vmax.f32 %v2205, 0.0
    %v2302 = vmax.f32 %v2206, 0.0
    %v2303 = vmax.f32 %v2207, 0.0
    %v2304 = vmax.f32 %v2208, 0.0
    %v2305 = vmax.f32 %v2209, 0.0
    %v2306 = vmax.f32 %v2210, 0.0
    %v2307 = vmax.f32 %v2211, 0.0
    %v2308 = vmax.f32 %v2212, 0.0
    %v2309 = vmax.f32 %v2213, 0.0
    %v2310 = vmax.f32 %v2214, 0.0
    %v2311 = vmax.f32 %v2215, 0.0
    %v2312 = vmax.f32 %v2216, 0.0
    %v2313 = vmax.f32 %v2217, 0.0
    %v2314 = vmax.f32 %v2218, 0.0
    %v2315 = vmax.f32 %v2219, 0.0
    %v2316 = vmax.f32 %v2220, 0.0
    %v2317 = vmax.f32 %v2221, 0.0
    %v2318 = vmax.f32 %v2222, 0.0
    %v2319 = vmax.f32 %v2223, 0.0
    %v2320 = vmax.f32 %v2224, 0.0
    %v2321 = vmax.f32 %v2225, 0.0
    %v2322 = vmax.f32 %v2226, 0.0
    %v2323 = vmax.f32 %v2227, 0.0
    %v2324 = vmax.f32 %v2228, 0.0
    %v2325 = vmax.f32 %v2229, 0.0
    %v2326 = vmax.f32 %v2230, 0.0
    %v2327 = vmax.f32 %v2231, 0.0
    %v2328 = vmax.f32 %v2232, 0.0
    %v2329 = vmax.f32 %v2233, 0.0
    %v2330 = vmax.f32 %v2234, 0.0
    %v2331 = vmax.f32 %v2235, 0.0
    %v2332 = vmax.f32 %v2236, 0.0
    %v2333 = vmax.f32 %v2237, 0.0
    %v2334 = vmax.f32 %v2238, 0.0
    %v2335 = vmax.f32 %v2239, 0.0
    %v2336 = vmax.f32 %v2240, 0.0
    %v2337 = vmax.f32 %v2241, 0.0
    %v2338 = vmax.f32 %v2242, 0.0
    %v2339 = vmax.f32 %v2243, 0.0
    %v2340 = vmax.f32 %v2244, 0.0
    %v2341 = vmax.f32 %v2245, 0.0
    %v2342 = vmax.f32 %v2246, 0.0
    %v2343 = vmax.f32 %v2247, 0.0
    %v2344 = vmax.f32 %v2248, 0.0
    %v2345 = vmax.f32 %v2249, 0.0
    %v2346 = vmax.f32 %v2250, 0.0
    %v2347 = vmax.f32 %v2251, 0.0
    %v2348 = vmax.f32 %v2252, 0.0
    %v2349 = vmax.f32 %v2253, 0.0
    %v2350 = vmax.f32 %v2254, 0.0
    %v2351 = vmax.f32 %v2255, 0.0
    %v2352 = vmax.f32 %v2256, 0.0
    %v2353 = vmax.f32 %v2257, 0.0
    %v2354 = vmax.f32 %v2258, 0.0
    %v2355 = vmax.f32 %v2259, 0.0
    %v2356 = vmax.f32 %v2260, 0.0
    %v2357 = vmax.f32 %v2261, 0.0
    %v2358 = vmax.f32 %v2262, 0.0
    %v2359 = vmax.f32 %v2263, 0.0
    %v2360 = vmax.f32 %v2264, 0.0
    %v2361 = vmax.f32 %v2265, 0.0
    %v2362 = vmax.f32 %v2266, 0.0
    %v2363 = vmax.f32 %v2267, 0.0
    %v2364 = vmax.f32 %v2268, 0.0
    %v2365 = vmax.f32 %v2269, 0.0
    %v2366 = vmax.f32 %v2270, 0.0
    %v2367 = vmax.f32 %v2271, 0.0
    %v2368 = vmax.f32 %v2272, 0.0
    %v2369 = vmax.f32 %v2273, 0.0
    %v2370 = vmax.f32 %v2274, 0.0
    %v2371 = vmax.f32 %v2275, 0.0
    %v2372 = vmax.f32 %v2276, 0.0
    %v2373 = vmax.f32 %v2277, 0.0
    %v2374 = vmax.f32 %v2278, 0.0
    %v2375 = vmax.f32 %v2279, 0.0
    %v2376 = vmax.f32 %v2280, 0.0
    %v2377 = vmax.f32 %v2281, 0.0
    %v2378 = vmax.f32 %v2282, 0.0
    %v2379 = vmax.f32 %v2283, 0.0
    %v2380 = vmax.f32 %v2284, 0.0
    %v2381 = vmax.f32 %v2285, 0.0
    %v2382 = vmax.f32 %v2286, 0.0
    %v2383 = vmax.f32 %v2287, 0.0
    %v2384 = vmax.f32 %v2288, 0.0
    %v2385 = vmax.f32 %v2289, 0.0
    %v2386 = vpack.c.bf16 %v2292, %v2290
    %v2387 = vpack.c.bf16 %v2293, %v2291
    %v2388 = vpack.c.bf16 %v2296, %v2294
    %v2389 = vpack.c.bf16 %v2297, %v2295
    %v2390 = vpack.c.bf16 %v2300, %v2298
    %v2391 = vpack.c.bf16 %v2301, %v2299
    %v2392 = vpack.c.bf16 %v2304, %v2302
    %v2393 = vpack.c.bf16 %v2305, %v2303
    %v2394 = vpack.c.bf16 %v2308, %v2306
    %v2395 = vpack.c.bf16 %v2309, %v2307
    %v2396 = vpack.c.bf16 %v2312, %v2310
    %v2397 = vpack.c.bf16 %v2313, %v2311
    %v2398 = vpack.c.bf16 %v2316, %v2314
    %v2399 = vpack.c.bf16 %v2317, %v2315
    %v2400 = vpack.c.bf16 %v2320, %v2318
    %v2401 = vpack.c.bf16 %v2321, %v2319
    %v2402 = vpack.c.bf16 %v2324, %v2322
    %v2403 = vpack.c.bf16 %v2325, %v2323
    %v2404 = vpack.c.bf16 %v2328, %v2326
    %v2405 = vpack.c.bf16 %v2329, %v2327
    %v2406 = vpack.c.bf16 %v2332, %v2330
    %v2407 = vpack.c.bf16 %v2333, %v2331
    %v2408 = vpack.c.bf16 %v2336, %v2334
    %v2409 = vpack.c.bf16 %v2337, %v2335
    %v2410 = vpack.c.bf16 %v2340, %v2338
    %v2411 = vpack.c.bf16 %v2341, %v2339
    %v2412 = vpack.c.bf16 %v2344, %v2342
    %v2413 = vpack.c.bf16 %v2345, %v2343
    %v2414 = vpack.c.bf16 %v2348, %v2346
    %v2415 = vpack.c.bf16 %v2349, %v2347
    %v2416 = vpack.c.bf16 %v2352, %v2350
    %v2417 = vpack.c.bf16 %v2353, %v2351
    %v2418 = vpack.c.bf16 %v2356, %v2354
    %v2419 = vpack.c.bf16 %v2357, %v2355
    %v2420 = vpack.c.bf16 %v2360, %v2358
    %v2421 = vpack.c.bf16 %v2361, %v2359
    %v2422 = vpack.c.bf16 %v2364, %v2362
    %v2423 = vpack.c.bf16 %v2365, %v2363
    %v2424 = vpack.c.bf16 %v2368, %v2366
    %v2425 = vpack.c.bf16 %v2369, %v2367
    %v2426 = vpack.c.bf16 %v2372, %v2370
    %v2427 = vpack.c.bf16 %v2373, %v2371
    %v2428 = vpack.c.bf16 %v2376, %v2374
    %v2429 = vpack.c.bf16 %v2377, %v2375
    %v2430 = vpack.c.bf16 %v2380, %v2378
    %v2431 = vpack.c.bf16 %v2381, %v2379
    %v2432 = vpack.c.bf16 %v2384, %v2382
    %v2433 = vpack.c.bf16 %v2385, %v2383
    %v2482 = vunpack.c.l.b16 %v2386
    %v2483 = vunpack.c.l.b16 %v2387
    %v2484 = vunpack.c.h.b16 %v2386
    %v2485 = vunpack.c.h.b16 %v2387
    %v2486 = vunpack.c.l.b16 %v2388
    %v2487 = vunpack.c.l.b16 %v2389
    %v2488 = vunpack.c.h.b16 %v2388
    %v2489 = vunpack.c.h.b16 %v2389
    %v2490 = vunpack.c.l.b16 %v2390
    %v2491 = vunpack.c.l.b16 %v2391
    %v2492 = vunpack.c.h.b16 %v2390
    %v2493 = vunpack.c.h.b16 %v2391
    %v2494 = vunpack.c.l.b16 %v2392
    %v2495 = vunpack.c.l.b16 %v2393
    %v2496 = vunpack.c.h.b16 %v2392
    %v2497 = vunpack.c.h.b16 %v2393
    %v2498 = vunpack.c.l.b16 %v2394
    %v2499 = vunpack.c.l.b16 %v2395
    %v2500 = vunpack.c.h.b16 %v2394
    %v2501 = vunpack.c.h.b16 %v2395
    %v2502 = vunpack.c.l.b16 %v2396
    %v2503 = vunpack.c.l.b16 %v2397
    %v2504 = vunpack.c.h.b16 %v2396
    %v2505 = vunpack.c.h.b16 %v2397
    %v2506 = vunpack.c.l.b16 %v2398
    %v2507 = vunpack.c.l.b16 %v2399
    %v2508 = vunpack.c.h.b16 %v2398
    %v2509 = vunpack.c.h.b16 %v2399
    %v2510 = vunpack.c.l.b16 %v2400
    %v2511 = vunpack.c.l.b16 %v2401
    %v2512 = vunpack.c.h.b16 %v2400
    %v2513 = vunpack.c.h.b16 %v2401
    %v2514 = vunpack.c.l.b16 %v2402
    %v2515 = vunpack.c.l.b16 %v2403
    %v2516 = vunpack.c.h.b16 %v2402
    %v2517 = vunpack.c.h.b16 %v2403
    %v2518 = vunpack.c.l.b16 %v2404
    %v2519 = vunpack.c.l.b16 %v2405
    %v2520 = vunpack.c.h.b16 %v2404
    %v2521 = vunpack.c.h.b16 %v2405
    %v2522 = vunpack.c.l.b16 %v2406
    %v2523 = vunpack.c.l.b16 %v2407
    %v2524 = vunpack.c.h.b16 %v2406
    %v2525 = vunpack.c.h.b16 %v2407
    %v2526 = vunpack.c.l.b16 %v2408
    %v2527 = vunpack.c.l.b16 %v2409
    %v2528 = vunpack.c.h.b16 %v2408
    %v2529 = vunpack.c.h.b16 %v2409
    %v2530 = vunpack.c.l.b16 %v2410
    %v2531 = vunpack.c.l.b16 %v2411
    %v2532 = vunpack.c.h.b16 %v2410
    %v2533 = vunpack.c.h.b16 %v2411
    %v2534 = vunpack.c.l.b16 %v2412
    %v2535 = vunpack.c.l.b16 %v2413
    %v2536 = vunpack.c.h.b16 %v2412
    %v2537 = vunpack.c.h.b16 %v2413
    %v2538 = vunpack.c.l.b16 %v2414
    %v2539 = vunpack.c.l.b16 %v2415
    %v2540 = vunpack.c.h.b16 %v2414
    %v2541 = vunpack.c.h.b16 %v2415
    %v2542 = vunpack.c.l.b16 %v2416
    %v2543 = vunpack.c.l.b16 %v2417
    %v2544 = vunpack.c.h.b16 %v2416
    %v2545 = vunpack.c.h.b16 %v2417
    %v2546 = vunpack.c.l.b16 %v2418
    %v2547 = vunpack.c.l.b16 %v2419
    %v2548 = vunpack.c.h.b16 %v2418
    %v2549 = vunpack.c.h.b16 %v2419
    %v2550 = vunpack.c.l.b16 %v2420
    %v2551 = vunpack.c.l.b16 %v2421
    %v2552 = vunpack.c.h.b16 %v2420
    %v2553 = vunpack.c.h.b16 %v2421
    %v2554 = vunpack.c.l.b16 %v2422
    %v2555 = vunpack.c.l.b16 %v2423
    %v2556 = vunpack.c.h.b16 %v2422
    %v2557 = vunpack.c.h.b16 %v2423
    %v2558 = vunpack.c.l.b16 %v2424
    %v2559 = vunpack.c.l.b16 %v2425
    %v2560 = vunpack.c.h.b16 %v2424
    %v2561 = vunpack.c.h.b16 %v2425
    %v2562 = vunpack.c.l.b16 %v2426
    %v2563 = vunpack.c.l.b16 %v2427
    %v2564 = vunpack.c.h.b16 %v2426
    %v2565 = vunpack.c.h.b16 %v2427
    %v2566 = vunpack.c.l.b16 %v2428
    %v2567 = vunpack.c.l.b16 %v2429
    %v2568 = vunpack.c.h.b16 %v2428
    %v2569 = vunpack.c.h.b16 %v2429
    %v2570 = vunpack.c.l.b16 %v2430
    %v2571 = vunpack.c.l.b16 %v2431
    %v2572 = vunpack.c.h.b16 %v2430
    %v2573 = vunpack.c.h.b16 %v2431
    %v2574 = vunpack.c.l.b16 %v2432
    %v2575 = vunpack.c.l.b16 %v2433
    %v2576 = vunpack.c.h.b16 %v2432
    %v2577 = vunpack.c.h.b16 %v2433
    %v2578 = vpack.c.b16 %v2483, %v2482
    %v2579 = vpack.c.b16 %v2485, %v2484
    %v2580 = vpack.c.b16 %v2487, %v2486
    %v2581 = vpack.c.b16 %v2489, %v2488
    %v2582 = vpack.c.b16 %v2491, %v2490
    %v2583 = vpack.c.b16 %v2493, %v2492
    %v2584 = vpack.c.b16 %v2495, %v2494
    %v2585 = vpack.c.b16 %v2497, %v2496
    %v2586 = vpack.c.b16 %v2499, %v2498
    %v2587 = vpack.c.b16 %v2501, %v2500
    %v2588 = vpack.c.b16 %v2503, %v2502
    %v2589 = vpack.c.b16 %v2505, %v2504
    %v2590 = vpack.c.b16 %v2507, %v2506
    %v2591 = vpack.c.b16 %v2509, %v2508
    %v2592 = vpack.c.b16 %v2511, %v2510
    %v2593 = vpack.c.b16 %v2513, %v2512
    %v2594 = vpack.c.b16 %v2515, %v2514
    %v2595 = vpack.c.b16 %v2517, %v2516
    %v2596 = vpack.c.b16 %v2519, %v2518
    %v2597 = vpack.c.b16 %v2521, %v2520
    %v2598 = vpack.c.b16 %v2523, %v2522
    %v2599 = vpack.c.b16 %v2525, %v2524
    %v2600 = vpack.c.b16 %v2527, %v2526
    %v2601 = vpack.c.b16 %v2529, %v2528
    %v2602 = vpack.c.b16 %v2531, %v2530
    %v2603 = vpack.c.b16 %v2533, %v2532
    %v2604 = vpack.c.b16 %v2535, %v2534
    %v2605 = vpack.c.b16 %v2537, %v2536
    %v2606 = vpack.c.b16 %v2539, %v2538
    %v2607 = vpack.c.b16 %v2541, %v2540
    %v2608 = vpack.c.b16 %v2543, %v2542
    %v2609 = vpack.c.b16 %v2545, %v2544
    %v2610 = vpack.c.b16 %v2547, %v2546
    %v2611 = vpack.c.b16 %v2549, %v2548
    %v2612 = vpack.c.b16 %v2551, %v2550
    %v2613 = vpack.c.b16 %v2553, %v2552
    %v2614 = vpack.c.b16 %v2555, %v2554
    %v2615 = vpack.c.b16 %v2557, %v2556
    %v2616 = vpack.c.b16 %v2559, %v2558
    %v2617 = vpack.c.b16 %v2561, %v2560
    %v2618 = vpack.c.b16 %v2563, %v2562
    %v2619 = vpack.c.b16 %v2565, %v2564
    %v2620 = vpack.c.b16 %v2567, %v2566
    %v2621 = vpack.c.b16 %v2569, %v2568
    %v2622 = vpack.c.b16 %v2571, %v2570
    %v2623 = vpack.c.b16 %v2573, %v2572
    %v2624 = vpack.c.b16 %v2575, %v2574
    %v2625 = vpack.c.b16 %v2577, %v2576
    %2674 = vst [vmem:[#allocation5] sm:$0xff] %v2578
    %2675 = vst [vmem:[#allocation5 + $0x8] sm:$0xff] %v2579
    %2676 = vst [vmem:[#allocation5 + $0x10] sm:$0xff] %v2580
    %2677 = vst [vmem:[#allocation5 + $0x18] sm:$0xff] %v2581
    %2678 = vst [vmem:[#allocation5 + $0x20] sm:$0xff] %v2582
    %2679 = vst [vmem:[#allocation5 + $0x28] sm:$0xff] %v2583
    %2680 = vst [vmem:[#allocation5 + $0x30] sm:$0xff] %v2584
    %2681 = vst [vmem:[#allocation5 + $0x38] sm:$0xff] %v2585
    %2682 = vst [vmem:[#allocation5 + $0x40] sm:$0xff] %v2586
    %2683 = vst [vmem:[#allocation5 + $0x48] sm:$0xff] %v2587
    %2684 = vst [vmem:[#allocation5 + $0x50] sm:$0xff] %v2588
    %2685 = vst [vmem:[#allocation5 + $0x58] sm:$0xff] %v2589
    %2686 = vst [vmem:[#allocation5 + $0x60] sm:$0xff] %v2590
    %2687 = vst [vmem:[#allocation5 + $0x68] sm:$0xff] %v2591
    %2688 = vst [vmem:[#allocation5 + $0x70] sm:$0xff] %v2592
    %2689 = vst [vmem:[#allocation5 + $0x78] sm:$0xff] %v2593
    %2690 = vst [vmem:[#allocation5 + $0x80] sm:$0xff] %v2594
    %2691 = vst [vmem:[#allocation5 + $0x88] sm:$0xff] %v2595
    %2692 = vst [vmem:[#allocation5 + $0x90] sm:$0xff] %v2596
    %2693 = vst [vmem:[#allocation5 + $0x98] sm:$0xff] %v2597
    %2694 = vst [vmem:[#allocation5 + $0xa0] sm:$0xff] %v2598
    %2695 = vst [vmem:[#allocation5 + $0xa8] sm:$0xff] %v2599
    %2696 = vst [vmem:[#allocation5 + $0xb0] sm:$0xff] %v2600
    %2697 = vst [vmem:[#allocation5 + $0xb8] sm:$0xff] %v2601
    %2698 = vst [vmem:[#allocation5 + $0xc0] sm:$0xff] %v2602
    %2699 = vst [vmem:[#allocation5 + $0xc8] sm:$0xff] %v2603
    %2700 = vst [vmem:[#allocation5 + $0xd0] sm:$0xff] %v2604
    %2701 = vst [vmem:[#allocation5 + $0xd8] sm:$0xff] %v2605
    %2702 = vst [vmem:[#allocation5 + $0xe0] sm:$0xff] %v2606
    %2703 = vst [vmem:[#allocation5 + $0xe8] sm:$0xff] %v2607
    %2704 = vst [vmem:[#allocation5 + $0xf0] sm:$0xff] %v2608
    %2705 = vst [vmem:[#allocation5 + $0xf8] sm:$0xff] %v2609
    %2706 = vst [vmem:[#allocation5 + $0x100] sm:$0xff] %v2610
    %2707 = vst [vmem:[#allocation5 + $0x108] sm:$0xff] %v2611
    %2708 = vst [vmem:[#allocation5 + $0x110] sm:$0xff] %v2612
    %2709 = vst [vmem:[#allocation5 + $0x118] sm:$0xff] %v2613
    %2710 = vst [vmem:[#allocation5 + $0x120] sm:$0xff] %v2614
    %2711 = vst [vmem:[#allocation5 + $0x128] sm:$0xff] %v2615
    %2712 = vst [vmem:[#allocation5 + $0x130] sm:$0xff] %v2616
    %2713 = vst [vmem:[#allocation5 + $0x138] sm:$0xff] %v2617
    %2714 = vst [vmem:[#allocation5 + $0x140] sm:$0xff] %v2618
    %2715 = vst [vmem:[#allocation5 + $0x148] sm:$0xff] %v2619
    %2716 = vst [vmem:[#allocation5 + $0x150] sm:$0xff] %v2620
    %2717 = vst [vmem:[#allocation5 + $0x158] sm:$0xff] %v2621
    %2718 = vst [vmem:[#allocation5 + $0x160] sm:$0xff] %v2622
    %2719 = vst [vmem:[#allocation5 + $0x168] sm:$0xff] %v2623
    %2720 = vst [vmem:[#allocation5 + $0x170] sm:$0xff] %v2624
    %2721 = vst [vmem:[#allocation5 + $0x178] sm:$0xff] %v2625
    %v2722 = vld [vmem:[#allocation2] sm:$0xf]
    %v2723 = vld [vmem:[#allocation2 + $0x4] sm:$0xf]
    %v2724 = vld [vmem:[#allocation2 + $0x8] sm:$0xf]
    %v2725 = vld [vmem:[#allocation2 + $0xc] sm:$0xf]
    %v2726 = vld [vmem:[#allocation2 + $0x10] sm:$0xf]
    %v2727 = vld [vmem:[#allocation2 + $0x14] sm:$0xf]
    %v2728 = vld [vmem:[#allocation2 + $0x18] sm:$0xf]
    %v2729 = vld [vmem:[#allocation2 + $0x1c] sm:$0xf]
    %v2730 = vld [vmem:[#allocation2 + $0x20] sm:$0xf]
    %v2731 = vld [vmem:[#allocation2 + $0x24] sm:$0xf]
    %v2732 = vld [vmem:[#allocation2 + $0x28] sm:$0xf]
    %v2733 = vld [vmem:[#allocation2 + $0x2c] sm:$0xf]
    %v2734 = vld [vmem:[#allocation2 + $0x30] sm:$0xf]
    %v2735 = vld [vmem:[#allocation2 + $0x34] sm:$0xf]
    %v2736 = vld [vmem:[#allocation2 + $0x38] sm:$0xf]
    %v2737 = vld [vmem:[#allocation2 + $0x3c] sm:$0xf]
    %v2738 = vld [vmem:[#allocation2 + $0x40] sm:$0xf]
    %v2739 = vld [vmem:[#allocation2 + $0x44] sm:$0xf]
    %v2740 = vld [vmem:[#allocation2 + $0x48] sm:$0xf]
    %v2741 = vld [vmem:[#allocation2 + $0x4c] sm:$0xf]
    %v2742 = vld [vmem:[#allocation2 + $0x50] sm:$0xf]
    %v2743 = vld [vmem:[#allocation2 + $0x54] sm:$0xf]
    %v2744 = vld [vmem:[#allocation2 + $0x58] sm:$0xf]
    %v2745 = vld [vmem:[#allocation2 + $0x5c] sm:$0xf]
    %v2746 = vld [vmem:[#allocation2 + $0x60] sm:$0xf]
    %v2747 = vld [vmem:[#allocation2 + $0x64] sm:$0xf]
    %v2748 = vld [vmem:[#allocation2 + $0x68] sm:$0xf]
    %v2749 = vld [vmem:[#allocation2 + $0x6c] sm:$0xf]
    %v2750 = vld [vmem:[#allocation2 + $0x70] sm:$0xf]
    %v2751 = vld [vmem:[#allocation2 + $0x74] sm:$0xf]
    %v2752 = vld [vmem:[#allocation2 + $0x78] sm:$0xf]
    %v2753 = vld [vmem:[#allocation2 + $0x7c] sm:$0xf]
    %v2754 = vld [vmem:[%s9] sm:$0x1]
    %v2756 = vlaneseq
    %v2757 = vshrl.u32 %v2756, 7
    %v2758 = vsub.s32 0, %v2757
    %v2759 = vrot.slane %v2754, %v2758
    %v2793 = vunpack.c.l.b16 %v2722
    %v2794 = vunpack.c.l.b16 %v2723
    %v2795 = vunpack.c.l.b16 %v2724
    %v2796 = vunpack.c.l.b16 %v2725
    %v2797 = vunpack.c.l.b16 %v2726
    %v2798 = vunpack.c.l.b16 %v2727
    %v2799 = vunpack.c.l.b16 %v2728
    %v2800 = vunpack.c.l.b16 %v2729
    %v2801 = vunpack.c.l.b16 %v2730
    %v2802 = vunpack.c.l.b16 %v2731
    %v2803 = vunpack.c.l.b16 %v2732
    %v2804 = vunpack.c.l.b16 %v2733
    %v2805 = vunpack.c.l.b16 %v2734
    %v2806 = vunpack.c.l.b16 %v2735
    %v2807 = vunpack.c.l.b16 %v2736
    %v2808 = vunpack.c.l.b16 %v2737
    %v2809 = vunpack.c.l.b16 %v2738
    %v2810 = vunpack.c.l.b16 %v2739
    %v2811 = vunpack.c.l.b16 %v2740
    %v2812 = vunpack.c.l.b16 %v2741
    %v2813 = vunpack.c.l.b16 %v2742
    %v2814 = vunpack.c.l.b16 %v2743
    %v2815 = vunpack.c.l.b16 %v2744
    %v2816 = vunpack.c.l.b16 %v2745
    %v2817 = vunpack.c.l.b16 %v2746
    %v2818 = vunpack.c.l.b16 %v2747
    %v2819 = vunpack.c.l.b16 %v2748
    %v2820 = vunpack.c.l.b16 %v2749
    %v2821 = vunpack.c.l.b16 %v2750
    %v2822 = vunpack.c.l.b16 %v2751
    %v2823 = vunpack.c.l.b16 %v2752
    %v2824 = vunpack.c.l.b16 %v2753
    %v2825 = vpack.c.b16 %v2794, %v2793
    %v2826 = vpack.c.b16 %v2796, %v2795
    %v2827 = vpack.c.b16 %v2798, %v2797
    %v2828 = vpack.c.b16 %v2800, %v2799
    %v2829 = vpack.c.b16 %v2802, %v2801
    %v2830 = vpack.c.b16 %v2804, %v2803
    %v2831 = vpack.c.b16 %v2806, %v2805
    %v2832 = vpack.c.b16 %v2808, %v2807
    %v2833 = vpack.c.b16 %v2810, %v2809
    %v2834 = vpack.c.b16 %v2812, %v2811
    %v2835 = vpack.c.b16 %v2814, %v2813
    %v2836 = vpack.c.b16 %v2816, %v2815
    %v2837 = vpack.c.b16 %v2818, %v2817
    %v2838 = vpack.c.b16 %v2820, %v2819
    %v2839 = vpack.c.b16 %v2822, %v2821
    %v2840 = vpack.c.b16 %v2824, %v2823
    %2857 = vmatprep.subr.bf16.mxu0 0
    %2858 = vmatpush1.bf16.msra.mxu0 %v2825
    %2859 = vmatprep.subr.bf16.mxu0 0
    %2860 = vmatpush1.bf16.msra.mxu0 %v2826
    %2861 = vmatprep.subr.bf16.mxu0 0
    %2862 = vmatpush1.bf16.msra.mxu0 %v2827
    %2863 = vmatprep.subr.bf16.mxu0 0
    %2864 = vmatpush1.bf16.msra.mxu0 %v2828
    %2865 = vmatprep.subr.bf16.mxu0 0
    %2866 = vmatpush1.bf16.msra.mxu0 %v2829
    %2867 = vmatprep.subr.bf16.mxu0 0
    %2868 = vmatpush1.bf16.msra.mxu0 %v2830
    %2869 = vmatprep.subr.bf16.mxu0 0
    %2870 = vmatpush1.bf16.msra.mxu0 %v2831
    %2871 = vmatprep.subr.bf16.mxu0 0
    %2872 = vmatpush1.bf16.msra.mxu0 %v2832
    %2873 = vmatprep.subr.bf16.mxu0 0
    %2874 = vmatpush1.bf16.msra.mxu0 %v2833
    %2875 = vmatprep.subr.bf16.mxu0 0
    %2876 = vmatpush1.bf16.msra.mxu0 %v2834
    %2877 = vmatprep.subr.bf16.mxu0 0
    %2878 = vmatpush1.bf16.msra.mxu0 %v2835
    %2879 = vmatprep.subr.bf16.mxu0 0
    %2880 = vmatpush1.bf16.msra.mxu0 %v2836
    %2881 = vmatprep.subr.bf16.mxu0 0
    %2882 = vmatpush1.bf16.msra.mxu0 %v2837
    %2883 = vmatprep.subr.bf16.mxu0 0
    %2884 = vmatpush1.bf16.msra.mxu0 %v2838
    %2885 = vmatprep.subr.bf16.mxu0 0
    %2886 = vmatpush1.bf16.msra.mxu0 %v2839
    %2887 = vmatprep.subr.bf16.mxu0 0
    %2888 = vmatpush1.bf16.msra.mxu0 %v2840
    %2889 = vmatprep.mubr.bf16.mxu0 %v2387
    %2890 = vmatmul.mubr.bf16.gmra.mrb[0].mxu0 %v2386
    %v2891 = vpop.f32.mrb[0].mxu0
    %v2892 = vadd.f32 %v2759, %v2891
    %v2893 = vpop.f32.mrb[0].mxu0
    %v2894 = vpop.f32.mrb[0].mxu0
    %v2895 = vadd.f32 %v2759, %v2894
    %v2896 = vpop.f32.mrb[0].mxu0
    %2897 = vmatprep.mubr.bf16.mxu0 %v2389
    %2898 = vmatmul.mubr.bf16.gmra.mrb[0].mxu0 %v2388
    %v2899 = vpop.f32.mrb[0].mxu0
    %v2900 = vadd.f32 %v2759, %v2899
    %v2901 = vpop.f32.mrb[0].mxu0
    %v2902 = vpop.f32.mrb[0].mxu0
    %v2903 = vadd.f32 %v2759, %v2902
    %v2904 = vpop.f32.mrb[0].mxu0
    %2905 = vmatprep.mubr.bf16.mxu0 %v2391
    %2906 = vmatmul.mubr.bf16.gmra.mrb[0].mxu0 %v2390
    %v2907 = vpop.f32.mrb[0].mxu0
    %v2908 = vadd.f32 %v2759, %v2907
    %v2909 = vpop.f32.mrb[0].mxu0
    %v2910 = vpop.f32.mrb[0].mxu0
    %v2911 = vadd.f32 %v2759, %v2910
    %v2912 = vpop.f32.mrb[0].mxu0
    %2913 = vmatprep.mubr.bf16.mxu0 %v2393
    %2914 = vmatmul.mubr.bf16.gmra.mrb[0].mxu0 %v2392
    %v2915 = vpop.f32.mrb[0].mxu0
    %v2916 = vadd.f32 %v2759, %v2915
    %v2917 = vpop.f32.mrb[0].mxu0
    %v2918 = vpop.f32.mrb[0].mxu0
    %v2919 = vadd.f32 %v2759, %v2918
    %v2920 = vpop.f32.mrb[0].mxu0
    %2921 = vmatprep.mubr.bf16.mxu0 %v2395
    %2922 = vmatmul.mubr.bf16.gmra.mrb[0].mxu0 %v2394
    %v2923 = vpop.f32.mrb[0].mxu0
    %v2924 = vadd.f32 %v2759, %v2923
    %v2925 = vpop.f32.mrb[0].mxu0
    %v2926 = vpop.f32.mrb[0].mxu0
    %v2927 = vadd.f32 %v2759, %v2926
    %v2928 = vpop.f32.mrb[0].mxu0
    %2929 = vmatprep.mubr.bf16.mxu0 %v2397
    %2930 = vmatmul.mubr.bf16.gmra.mrb[0].mxu0 %v2396
    %v2931 = vpop.f32.mrb[0].mxu0
    %v2932 = vadd.f32 %v2759, %v2931
    %v2933 = vpop.f32.mrb[0].mxu0
    %v2934 = vpop.f32.mrb[0].mxu0
    %v2935 = vadd.f32 %v2759, %v2934
    %v2936 = vpop.f32.mrb[0].mxu0
    %2937 = vmatprep.mubr.bf16.mxu0 %v2399
    %2938 = vmatmul.mubr.bf16.gmra.mrb[0].mxu0 %v2398
    %v2939 = vpop.f32.mrb[0].mxu0
    %v2940 = vadd.f32 %v2759, %v2939
    %v2941 = vpop.f32.mrb[0].mxu0
    %v2942 = vpop.f32.mrb[0].mxu0
    %v2943 = vadd.f32 %v2759, %v2942
    %v2944 = vpop.f32.mrb[0].mxu0
    %2945 = vmatprep.mubr.bf16.mxu0 %v2401
    %2946 = vmatmul.mubr.bf16.gmra.mrb[0].mxu0 %v2400
    %v2947 = vpop.f32.mrb[0].mxu0
    %v2948 = vadd.f32 %v2759, %v2947
    %v2949 = vpop.f32.mrb[0].mxu0
    %v2950 = vpop.f32.mrb[0].mxu0
    %v2951 = vadd.f32 %v2759, %v2950
    %v2952 = vpop.f32.mrb[0].mxu0
    %2953 = vmatprep.mubr.bf16.mxu0 %v2403
    %2954 = vmatmul.mubr.bf16.gmra.mrb[0].mxu0 %v2402
    %v2955 = vpop.f32.mrb[0].mxu0
    %v2956 = vadd.f32 %v2759, %v2955
    %v2957 = vpop.f32.mrb[0].mxu0
    %v2958 = vpop.f32.mrb[0].mxu0
    %v2959 = vadd.f32 %v2759, %v2958
    %v2960 = vpop.f32.mrb[0].mxu0
    %2961 = vmatprep.mubr.bf16.mxu0 %v2405
    %2962 = vmatmul.mubr.bf16.gmra.mrb[0].mxu0 %v2404
    %v2963 = vpop.f32.mrb[0].mxu0
    %v2964 = vadd.f32 %v2759, %v2963
    %v2965 = vpop.f32.mrb[0].mxu0
    %v2966 = vpop.f32.mrb[0].mxu0
    %v2967 = vadd.f32 %v2759, %v2966
    %v2968 = vpop.f32.mrb[0].mxu0
    %2969 = vmatprep.mubr.bf16.mxu0 %v2407
    %2970 = vmatmul.mubr.bf16.gmra.mrb[0].mxu0 %v2406
    %v2971 = vpop.f32.mrb[0].mxu0
    %v2972 = vadd.f32 %v2759, %v2971
    %v2973 = vpop.f32.mrb[0].mxu0
    %v2974 = vpop.f32.mrb[0].mxu0
    %v2975 = vadd.f32 %v2759, %v2974
    %v2976 = vpop.f32.mrb[0].mxu0
    %2977 = vmatprep.mubr.bf16.mxu0 %v2409
    %2978 = vmatmul.mubr.bf16.gmra.mrb[0].mxu0 %v2408
    %v2979 = vpop.f32.mrb[0].mxu0
    %v2980 = vadd.f32 %v2759, %v2979
    %v2981 = vpop.f32.mrb[0].mxu0
    %v2982 = vpop.f32.mrb[0].mxu0
    %v2983 = vadd.f32 %v2759, %v2982
    %v2984 = vpop.f32.mrb[0].mxu0
    %2985 = vmatprep.mubr.bf16.mxu0 %v2411
    %2986 = vmatmul.mubr.bf16.gmra.mrb[0].mxu0 %v2410
    %v2987 = vpop.f32.mrb[0].mxu0
    %v2988 = vadd.f32 %v2759, %v2987
    %v2989 = vpop.f32.mrb[0].mxu0
    %v2990 = vpop.f32.mrb[0].mxu0
    %v2991 = vadd.f32 %v2759, %v2990
    %v2992 = vpop.f32.mrb[0].mxu0
    %2993 = vmatprep.mubr.bf16.mxu0 %v2413
    %2994 = vmatmul.mubr.bf16.gmra.mrb[0].mxu0 %v2412
    %v2995 = vpop.f32.mrb[0].mxu0
    %v2996 = vadd.f32 %v2759, %v2995
    %v2997 = vpop.f32.mrb[0].mxu0
    %v2998 = vpop.f32.mrb[0].mxu0
    %v2999 = vadd.f32 %v2759, %v2998
    %v3000 = vpop.f32.mrb[0].mxu0
    %3001 = vmatprep.mubr.bf16.mxu0 %v2415
    %3002 = vmatmul.mubr.bf16.gmra.mrb[0].mxu0 %v2414
    %v3003 = vpop.f32.mrb[0].mxu0
    %v3004 = vadd.f32 %v2759, %v3003
    %v3005 = vpop.f32.mrb[0].mxu0
    %v3006 = vpop.f32.mrb[0].mxu0
    %v3007 = vadd.f32 %v2759, %v3006
    %v3008 = vpop.f32.mrb[0].mxu0
    %3009 = vmatprep.mubr.bf16.mxu0 %v2417
    %3010 = vmatmul.mubr.bf16.gmra.mrb[0].mxu0 %v2416
    %v3011 = vpop.f32.mrb[0].mxu0
    %v3012 = vadd.f32 %v2759, %v3011
    %v3013 = vpop.f32.mrb[0].mxu0
    %v3014 = vpop.f32.mrb[0].mxu0
    %v3015 = vadd.f32 %v2759, %v3014
    %v3016 = vpop.f32.mrb[0].mxu0
    %3017 = vmatprep.mubr.bf16.mxu0 %v2419
    %3018 = vmatmul.mubr.bf16.gmra.mrb[0].mxu0 %v2418
    %v3019 = vpop.f32.mrb[0].mxu0
    %v3020 = vadd.f32 %v2759, %v3019
    %v3021 = vpop.f32.mrb[0].mxu0
    %v3022 = vpop.f32.mrb[0].mxu0
    %v3023 = vadd.f32 %v2759, %v3022
    %v3024 = vpop.f32.mrb[0].mxu0
    %3025 = vmatprep.mubr.bf16.mxu0 %v2421
    %3026 = vmatmul.mubr.bf16.gmra.mrb[0].mxu0 %v2420
    %v3027 = vpop.f32.mrb[0].mxu0
    %v3028 = vadd.f32 %v2759, %v3027
    %v3029 = vpop.f32.mrb[0].mxu0
    %v3030 = vpop.f32.mrb[0].mxu0
    %v3031 = vadd.f32 %v2759, %v3030
    %v3032 = vpop.f32.mrb[0].mxu0
    %3033 = vmatprep.mubr.bf16.mxu0 %v2423
    %3034 = vmatmul.mubr.bf16.gmra.mrb[0].mxu0 %v2422
    %v3035 = vpop.f32.mrb[0].mxu0
    %v3036 = vadd.f32 %v2759, %v3035
    %v3037 = vpop.f32.mrb[0].mxu0
    %v3038 = vpop.f32.mrb[0].mxu0
    %v3039 = vadd.f32 %v2759, %v3038
    %v3040 = vpop.f32.mrb[0].mxu0
    %3041 = vmatprep.mubr.bf16.mxu0 %v2425
    %3042 = vmatmul.mubr.bf16.gmra.mrb[0].mxu0 %v2424
    %v3043 = vpop.f32.mrb[0].mxu0
    %v3044 = vadd.f32 %v2759, %v3043
    %v3045 = vpop.f32.mrb[0].mxu0
    %v3046 = vpop.f32.mrb[0].mxu0
    %v3047 = vadd.f32 %v2759, %v3046
    %v3048 = vpop.f32.mrb[0].mxu0
    %3049 = vmatprep.mubr.bf16.mxu0 %v2427
    %3050 = vmatmul.mubr.bf16.gmra.mrb[0].mxu0 %v2426
    %v3051 = vpop.f32.mrb[0].mxu0
    %v3052 = vadd.f32 %v2759, %v3051
    %v3053 = vpop.f32.mrb[0].mxu0
    %v3054 = vpop.f32.mrb[0].mxu0
    %v3055 = vadd.f32 %v2759, %v3054
    %v3056 = vpop.f32.mrb[0].mxu0
    %3057 = vmatprep.mubr.bf16.mxu0 %v2429
    %3058 = vmatmul.mubr.bf16.gmra.mrb[0].mxu0 %v2428
    %v3059 = vpop.f32.mrb[0].mxu0
    %v3060 = vadd.f32 %v2759, %v3059
    %v3061 = vpop.f32.mrb[0].mxu0
    %v3062 = vpop.f32.mrb[0].mxu0
    %v3063 = vadd.f32 %v2759, %v3062
    %v3064 = vpop.f32.mrb[0].mxu0
    %3065 = vmatprep.mubr.bf16.mxu0 %v2431
    %3066 = vmatmul.mubr.bf16.gmra.mrb[0].mxu0 %v2430
    %v3067 = vpop.f32.mrb[0].mxu0
    %v3068 = vadd.f32 %v2759, %v3067
    %v3069 = vpop.f32.mrb[0].mxu0
    %v3070 = vpop.f32.mrb[0].mxu0
    %v3071 = vadd.f32 %v2759, %v3070
    %v3072 = vpop.f32.mrb[0].mxu0
    %3073 = vmatprep.mubr.bf16.mxu0 %v2433
    %3074 = vmatmul.mubr.bf16.gmra.mrb[0].mxu0 %v2432
    %v3075 = vpop.f32.mrb[0].mxu0
    %v3076 = vadd.f32 %v2759, %v3075
    %v3077 = vpop.f32.mrb[0].mxu0
    %v3078 = vpop.f32.mrb[0].mxu0
    %v3079 = vadd.f32 %v2759, %v3078
    %v3080 = vpop.f32.mrb[0].mxu0
    %3081 = vdwg.mxu0
    %v3082 = vmax.f32 %v2892, 0.0
    %v3083 = vmax.f32 %v2895, 0.0
    %v3084 = vmax.f32 %v2900, 0.0
    %v3085 = vmax.f32 %v2903, 0.0
    %v3086 = vmax.f32 %v2908, 0.0
    %v3087 = vmax.f32 %v2911, 0.0
    %v3088 = vmax.f32 %v2916, 0.0
    %v3089 = vmax.f32 %v2919, 0.0
    %v3090 = vmax.f32 %v2924, 0.0
    %v3091 = vmax.f32 %v2927, 0.0
    %v3092 = vmax.f32 %v2932, 0.0
    %v3093 = vmax.f32 %v2935, 0.0
    %v3094 = vmax.f32 %v2940, 0.0
    %v3095 = vmax.f32 %v2943, 0.0
    %v3096 = vmax.f32 %v2948, 0.0
    %v3097 = vmax.f32 %v2951, 0.0
    %v3098 = vmax.f32 %v2956, 0.0
    %v3099 = vmax.f32 %v2959, 0.0
    %v3100 = vmax.f32 %v2964, 0.0
    %v3101 = vmax.f32 %v2967, 0.0
    %v3102 = vmax.f32 %v2972, 0.0
    %v3103 = vmax.f32 %v2975, 0.0
    %v3104 = vmax.f32 %v2980, 0.0
    %v3105 = vmax.f32 %v2983, 0.0
    %v3106 = vmax.f32 %v2988, 0.0
    %v3107 = vmax.f32 %v2991, 0.0
    %v3108 = vmax.f32 %v2996, 0.0
    %v3109 = vmax.f32 %v2999, 0.0
    %v3110 = vmax.f32 %v3004, 0.0
    %v3111 = vmax.f32 %v3007, 0.0
    %v3112 = vmax.f32 %v3012, 0.0
    %v3113 = vmax.f32 %v3015, 0.0
    %v3114 = vmax.f32 %v3020, 0.0
    %v3115 = vmax.f32 %v3023, 0.0
    %v3116 = vmax.f32 %v3028, 0.0
    %v3117 = vmax.f32 %v3031, 0.0
    %v3118 = vmax.f32 %v3036, 0.0
    %v3119 = vmax.f32 %v3039, 0.0
    %v3120 = vmax.f32 %v3044, 0.0
    %v3121 = vmax.f32 %v3047, 0.0
    %v3122 = vmax.f32 %v3052, 0.0
    %v3123 = vmax.f32 %v3055, 0.0
    %v3124 = vmax.f32 %v3060, 0.0
    %v3125 = vmax.f32 %v3063, 0.0
    %v3126 = vmax.f32 %v3068, 0.0
    %v3127 = vmax.f32 %v3071, 0.0
    %v3128 = vmax.f32 %v3076, 0.0
    %v3129 = vmax.f32 %v3079, 0.0
    %v3130 = vpack.c.bf16 %v3083, %v3082
    %v3131 = vpack.c.bf16 %v3085, %v3084
    %v3132 = vpack.c.bf16 %v3087, %v3086
    %v3133 = vpack.c.bf16 %v3089, %v3088
    %v3134 = vpack.c.bf16 %v3091, %v3090
    %v3135 = vpack.c.bf16 %v3093, %v3092
    %v3136 = vpack.c.bf16 %v3095, %v3094
    %v3137 = vpack.c.bf16 %v3097, %v3096
    %v3138 = vpack.c.bf16 %v3099, %v3098
    %v3139 = vpack.c.bf16 %v3101, %v3100
    %v3140 = vpack.c.bf16 %v3103, %v3102
    %v3141 = vpack.c.bf16 %v3105, %v3104
    %v3142 = vpack.c.bf16 %v3107, %v3106
    %v3143 = vpack.c.bf16 %v3109, %v3108
    %v3144 = vpack.c.bf16 %v3111, %v3110
    %v3145 = vpack.c.bf16 %v3113, %v3112
    %v3146 = vpack.c.bf16 %v3115, %v3114
    %v3147 = vpack.c.bf16 %v3117, %v3116
    %v3148 = vpack.c.bf16 %v3119, %v3118
    %v3149 = vpack.c.bf16 %v3121, %v3120
    %v3150 = vpack.c.bf16 %v3123, %v3122
    %v3151 = vpack.c.bf16 %v3125, %v3124
    %v3152 = vpack.c.bf16 %v3127, %v3126
    %v3153 = vpack.c.bf16 %v3129, %v3128
    %v3178 = vunpack.c.l.b16 %v3130
    %v3179 = vunpack.c.h.b16 %v3130
    %v3180 = vunpack.c.l.b16 %v3131
    %v3181 = vunpack.c.h.b16 %v3131
    %v3182 = vunpack.c.l.b16 %v3132
    %v3183 = vunpack.c.h.b16 %v3132
    %v3184 = vunpack.c.l.b16 %v3133
    %v3185 = vunpack.c.h.b16 %v3133
    %v3186 = vunpack.c.l.b16 %v3134
    %v3187 = vunpack.c.h.b16 %v3134
    %v3188 = vunpack.c.l.b16 %v3135
    %v3189 = vunpack.c.h.b16 %v3135
    %v3190 = vunpack.c.l.b16 %v3136
    %v3191 = vunpack.c.h.b16 %v3136
    %v3192 = vunpack.c.l.b16 %v3137
    %v3193 = vunpack.c.h.b16 %v3137
    %v3194 = vunpack.c.l.b16 %v3138
    %v3195 = vunpack.c.h.b16 %v3138
    %v3196 = vunpack.c.l.b16 %v3139
    %v3197 = vunpack.c.h.b16 %v3139
    %v3198 = vunpack.c.l.b16 %v3140
    %v3199 = vunpack.c.h.b16 %v3140
    %v3200 = vunpack.c.l.b16 %v3141
    %v3201 = vunpack.c.h.b16 %v3141
    %v3202 = vunpack.c.l.b16 %v3142
    %v3203 = vunpack.c.h.b16 %v3142
    %v3204 = vunpack.c.l.b16 %v3143
    %v3205 = vunpack.c.h.b16 %v3143
    %v3206 = vunpack.c.l.b16 %v3144
    %v3207 = vunpack.c.h.b16 %v3144
    %v3208 = vunpack.c.l.b16 %v3145
    %v3209 = vunpack.c.h.b16 %v3145
    %v3210 = vunpack.c.l.b16 %v3146
    %v3211 = vunpack.c.h.b16 %v3146
    %v3212 = vunpack.c.l.b16 %v3147
    %v3213 = vunpack.c.h.b16 %v3147
    %v3214 = vunpack.c.l.b16 %v3148
    %v3215 = vunpack.c.h.b16 %v3148
    %v3216 = vunpack.c.l.b16 %v3149
    %v3217 = vunpack.c.h.b16 %v3149
    %v3218 = vunpack.c.l.b16 %v3150
    %v3219 = vunpack.c.h.b16 %v3150
    %v3220 = vunpack.c.l.b16 %v3151
    %v3221 = vunpack.c.h.b16 %v3151
    %v3222 = vunpack.c.l.b16 %v3152
    %v3223 = vunpack.c.h.b16 %v3152
    %v3224 = vunpack.c.l.b16 %v3153
    %v3225 = vunpack.c.h.b16 %v3153
    %v3226 = vpack.c.b16 %v3178, %v3178
    %v3227 = vpack.c.b16 %v3179, %v3179
    %v3228 = vpack.c.b16 %v3180, %v3180
    %v3229 = vpack.c.b16 %v3181, %v3181
    %v3230 = vpack.c.b16 %v3182, %v3182
    %v3231 = vpack.c.b16 %v3183, %v3183
    %v3232 = vpack.c.b16 %v3184, %v3184
    %v3233 = vpack.c.b16 %v3185, %v3185
    %v3234 = vpack.c.b16 %v3186, %v3186
    %v3235 = vpack.c.b16 %v3187, %v3187
    %v3236 = vpack.c.b16 %v3188, %v3188
    %v3237 = vpack.c.b16 %v3189, %v3189
    %v3238 = vpack.c.b16 %v3190, %v3190
    %v3239 = vpack.c.b16 %v3191, %v3191
    %v3240 = vpack.c.b16 %v3192, %v3192
    %v3241 = vpack.c.b16 %v3193, %v3193
    %v3242 = vpack.c.b16 %v3194, %v3194
    %v3243 = vpack.c.b16 %v3195, %v3195
    %v3244 = vpack.c.b16 %v3196, %v3196
    %v3245 = vpack.c.b16 %v3197, %v3197
    %v3246 = vpack.c.b16 %v3198, %v3198
    %v3247 = vpack.c.b16 %v3199, %v3199
    %v3248 = vpack.c.b16 %v3200, %v3200
    %v3249 = vpack.c.b16 %v3201, %v3201
    %v3250 = vpack.c.b16 %v3202, %v3202
    %v3251 = vpack.c.b16 %v3203, %v3203
    %v3252 = vpack.c.b16 %v3204, %v3204
    %v3253 = vpack.c.b16 %v3205, %v3205
    %v3254 = vpack.c.b16 %v3206, %v3206
    %v3255 = vpack.c.b16 %v3207, %v3207
    %v3256 = vpack.c.b16 %v3208, %v3208
    %v3257 = vpack.c.b16 %v3209, %v3209
    %v3258 = vpack.c.b16 %v3210, %v3210
    %v3259 = vpack.c.b16 %v3211, %v3211
    %v3260 = vpack.c.b16 %v3212, %v3212
    %v3261 = vpack.c.b16 %v3213, %v3213
    %v3262 = vpack.c.b16 %v3214, %v3214
    %v3263 = vpack.c.b16 %v3215, %v3215
    %v3264 = vpack.c.b16 %v3216, %v3216
    %v3265 = vpack.c.b16 %v3217, %v3217
    %v3266 = vpack.c.b16 %v3218, %v3218
    %v3267 = vpack.c.b16 %v3219, %v3219
    %v3268 = vpack.c.b16 %v3220, %v3220
    %v3269 = vpack.c.b16 %v3221, %v3221
    %v3270 = vpack.c.b16 %v3222, %v3222
    %v3271 = vpack.c.b16 %v3223, %v3223
    %v3272 = vpack.c.b16 %v3224, %v3224
    %v3273 = vpack.c.b16 %v3225, %v3225
    %3322 = vst [vmem:[#allocation6] sm:$0xf] %v3226
    %3323 = vst [vmem:[#allocation6 + $0x4] sm:$0xf] %v3227
    %3324 = vst [vmem:[#allocation6 + $0x8] sm:$0xf] %v3228
    %3325 = vst [vmem:[#allocation6 + $0xc] sm:$0xf] %v3229
    %3326 = vst [vmem:[#allocation6 + $0x10] sm:$0xf] %v3230
    %3327 = vst [vmem:[#allocation6 + $0x14] sm:$0xf] %v3231
    %3328 = vst [vmem:[#allocation6 + $0x18] sm:$0xf] %v3232
    %3329 = vst [vmem:[#allocation6 + $0x1c] sm:$0xf] %v3233
    %3330 = vst [vmem:[#allocation6 + $0x20] sm:$0xf] %v3234
    %3331 = vst [vmem:[#allocation6 + $0x24] sm:$0xf] %v3235
    %3332 = vst [vmem:[#allocation6 + $0x28] sm:$0xf] %v3236
    %3333 = vst [vmem:[#allocation6 + $0x2c] sm:$0xf] %v3237
    %3334 = vst [vmem:[#allocation6 + $0x30] sm:$0xf] %v3238
    %3335 = vst [vmem:[#allocation6 + $0x34] sm:$0xf] %v3239
    %3336 = vst [vmem:[#allocation6 + $0x38] sm:$0xf] %v3240
    %3337 = vst [vmem:[#allocation6 + $0x3c] sm:$0xf] %v3241
    %3338 = vst [vmem:[#allocation6 + $0x40] sm:$0xf] %v3242
    %3339 = vst [vmem:[#allocation6 + $0x44] sm:$0xf] %v3243
    %3340 = vst [vmem:[#allocation6 + $0x48] sm:$0xf] %v3244
    %3341 = vst [vmem:[#allocation6 + $0x4c] sm:$0xf] %v3245
    %3342 = vst [vmem:[#allocation6 + $0x50] sm:$0xf] %v3246
    %3343 = vst [vmem:[#allocation6 + $0x54] sm:$0xf] %v3247
    %3344 = vst [vmem:[#allocation6 + $0x58] sm:$0xf] %v3248
    %3345 = vst [vmem:[#allocation6 + $0x5c] sm:$0xf] %v3249
    %3346 = vst [vmem:[#allocation6 + $0x60] sm:$0xf] %v3250
    %3347 = vst [vmem:[#allocation6 + $0x64] sm:$0xf] %v3251
    %3348 = vst [vmem:[#allocation6 + $0x68] sm:$0xf] %v3252
    %3349 = vst [vmem:[#allocation6 + $0x6c] sm:$0xf] %v3253
    %3350 = vst [vmem:[#allocation6 + $0x70] sm:$0xf] %v3254
    %3351 = vst [vmem:[#allocation6 + $0x74] sm:$0xf] %v3255
    %3352 = vst [vmem:[#allocation6 + $0x78] sm:$0xf] %v3256
    %3353 = vst [vmem:[#allocation6 + $0x7c] sm:$0xf] %v3257
    %3354 = vst [vmem:[#allocation6 + $0x80] sm:$0xf] %v3258
    %3355 = vst [vmem:[#allocation6 + $0x84] sm:$0xf] %v3259
    %3356 = vst [vmem:[#allocation6 + $0x88] sm:$0xf] %v3260
    %3357 = vst [vmem:[#allocation6 + $0x8c] sm:$0xf] %v3261
    %3358 = vst [vmem:[#allocation6 + $0x90] sm:$0xf] %v3262
    %3359 = vst [vmem:[#allocation6 + $0x94] sm:$0xf] %v3263
    %3360 = vst [vmem:[#allocation6 + $0x98] sm:$0xf] %v3264
    %3361 = vst [vmem:[#allocation6 + $0x9c] sm:$0xf] %v3265
    %3362 = vst [vmem:[#allocation6 + $0xa0] sm:$0xf] %v3266
    %3363 = vst [vmem:[#allocation6 + $0xa4] sm:$0xf] %v3267
    %3364 = vst [vmem:[#allocation6 + $0xa8] sm:$0xf] %v3268
    %3365 = vst [vmem:[#allocation6 + $0xac] sm:$0xf] %v3269
    %3366 = vst [vmem:[#allocation6 + $0xb0] sm:$0xf] %v3270
    %3367 = vst [vmem:[#allocation6 + $0xb4] sm:$0xf] %v3271
    %3368 = vst [vmem:[#allocation6 + $0xb8] sm:$0xf] %v3272
    %3369 = vst [vmem:[#allocation6 + $0xbc] sm:$0xf] %v3273
    // Predicated region
    $region46: #{_forward_impl.1} parent=1 // pred_check
      _
    $region47: #{_forward_impl.1} parent=1 // pred_check_branch
      %3371 = sbr.rel (0) target = $region49
    $region48: #{_forward_impl.1} parent=1 // pred_region
      %s3373 = ssub.s32 6144, 6144
      %3374 = vsyncadd [#allocation4], %s3373
      %s3375 = sshll.u32 [#allocation5], 4
      %s3376 = int_to_ptr.vmem [resolvable:$true] %s3375
      %3381 = dma.vmem_to_hbm [thread:$0]  %s3376, 6144, %s10, [#allocation4], 128, 128, 8
    $region49: #{_forward_impl.1} parent=1 // pred_fallthru
      _
    // Predicated region
    $region50: #{_forward_impl.1} parent=1 // pred_check
      _
    $region51: #{_forward_impl.1} parent=1 // pred_check_branch
      %3383 = sbr.rel (0) target = $region53
    $region52: #{_forward_impl.1} parent=1 // pred_region
      %s3385 = ssub.s32 3072, 3072
      %3386 = vsyncadd [#allocation7], %s3385
      %s3387 = sshll.u32 [#allocation6], 4
      %s3388 = int_to_ptr.vmem [resolvable:$true] %s3387
      %3393 = dma.vmem_to_hbm [thread:$0]  %s3388, 3072, %s11, [#allocation7], 64, 64, 4
    $region53: #{_forward_impl.1} parent=1 // pred_fallthru
      _
    // Predicated region
    $region54: #{_forward_impl.1} parent=1 // pred_check
      _
    $region55: #{_forward_impl.1} parent=1 // pred_check_branch
      %3395 = sbr.rel (0) target = $region57
    $region56: #{_forward_impl.1} parent=1 // pred_region
      %3396 = dma.done [#allocation4], 6144
    $region57: #{_forward_impl.1} parent=1 // pred_fallthru
      _
    // Predicated region
    $region58: #{_forward_impl.1} parent=1 // pred_check
      _
    $region59: #{_forward_impl.1} parent=1 // pred_check_branch
      %3398 = sbr.rel (0) target = $region61
    $region60: #{_forward_impl.1} parent=1 // pred_region
      %3399 = dma.done [#allocation7], 3072
    $region61: #{_forward_impl.1} parent=1 // pred_fallthru
      _
    %3400 = vsyncpa [#allocation3], 1
    %3401 = vsyncpa [#allocation4], 1
    %3402 = vsyncpa [#allocation7], 1

</llo_original>
